<compile_context>
chip_gen: v5e
topology: v5e:2x2
jax: 0.10.0
libtpu: 0.0.40
codegen_flags: <defaults>
</compile_context>

<pallas_src>
import functools

import jax
import jax.numpy as jnp
from jax import lax
from jax.experimental import pallas as pl
from jax.experimental.pallas import tpu as pltpu

LANE = 128


def _round_up(x, m):
    return (x + m - 1) // m * m


def _make_fused_kernel(wp, m_out):
    """Build the fused LayerNScale kernel for static geometry.

    Refs (per grid step = one batch element):
      x_ref:    (1, Mp, Cin)        spatially zero-padded, row-flattened NHWC image
      mask_ref: (Mp, 1)             1.0 on interior pixels, 0.0 on the padding ring
      w1_ref:   (Cin, Cmid_p)       1x1-conv weights with BN1 scale folded in
      b1_ref:   (1, Cmid_p)         folded BN1 shift
      w2_ref:   (9, Cmid_p, Cout_p) 3x3-conv tap weights (t = 3*kh + kw), BN2 folded
      b2_ref:   (1, Cout_p)         folded BN2 shift
      o_ref:    (1, Mout, Cout_p)   stride-1 conv2 output rows (lane-dense slab)
      y1_ref:   (Mp, Cmid_p) VMEM   scratch holding the padded conv1 activation
    """

    def kernel(x_ref, mask_ref, w1_ref, b1_ref, w2_ref, b2_ref, o_ref, y1_ref):
        # ---- stage 1: 1x1 conv (+ folded BN1) + ReLU; mask zeroes the padding ring.
        x = x_ref[0]                                               # (Mp, Cin)
        y1 = jnp.dot(x, w1_ref[...], preferred_element_type=jnp.float32)
        y1 = jnp.maximum(y1 + b1_ref[...], 0.0) * mask_ref[...]
        y1_ref[...] = y1                                           # stays in VMEM

        # ---- stage 2: 3x3 conv as 9 accumulated MXU matmuls over shifted contiguous
        #      views of the flattened padded activation (never written to HBM).
        acc = jnp.dot(y1_ref[pl.ds(0, m_out), :], w2_ref[0],
                      preferred_element_type=jnp.float32)
        for kh in range(3):
            for kw in range(3):
                if kh == 0 and kw == 0:
                    continue
                off = kh * wp + kw                                 # static offset
                patch = y1_ref[pl.ds(off, m_out), :]
                acc = acc + jnp.dot(patch, w2_ref[3 * kh + kw],
                                    preferred_element_type=jnp.float32)
        o_ref[0] = jnp.maximum(acc + b2_ref[...], 0.0).astype(o_ref.dtype)

    return kernel


@functools.partial(jax.jit, static_argnames=("stride", "pad", "out_ch"))
def layer_n_scale_forward(x_nchw, params, stride, pad, out_ch):
    """Forward pass matching LayerNScale. Input/output are NCHW like PyTorch."""
    n, cin, h, w = x_nchw.shape
    w1 = params["w1"]            # (cin, cmid_p)   BN1 scale folded in
    b1 = params["b1"]            # (1, cmid_p)
    w2 = params["w2"]            # (9, cmid_p, cout_p) BN2 scale folded in
    b2 = params["b2"]            # (1, cout_p)
    cmid_p = w1.shape[1]
    cout_p = w2.shape[2]

    # Static geometry.
    hp = h + 2 * pad + 2         # +2 extra zero rows keep every tap slice in bounds
    wp = w + 2 * pad
    mp = hp * wp
    hf = h + 2 * pad - 2         # stride-1 conv2 output rows
    m_out = hf * wp
    ho = (h + 2 * pad - 3) // stride + 1
    wo = (w + 2 * pad - 3) // stride + 1

    # ---- wrapper-side layout plumbing (pure data rearrangement, done in XLA) --------
    x = jnp.transpose(x_nchw, (0, 2, 3, 1))                        # NCHW -> NHWC
    xpad = jnp.pad(x, ((0, 0), (pad, pad + 2), (pad, pad), (0, 0)))
    xflat = xpad.reshape(n, mp, cin)                               # (N, Mp, Cin)

    rows = jnp.arange(hp)
    cols = jnp.arange(wp)
    interior = (((rows >= pad) & (rows < pad + h))[:, None]
                & ((cols >= pad) & (cols < pad + w))[None, :])
    mask = interior.astype(xflat.dtype).reshape(mp, 1)

    kernel = _make_fused_kernel(wp, m_out)
    out_full = pl.pallas_call(
        kernel,
        out_shape=jax.ShapeDtypeStruct((n, m_out, cout_p), xflat.dtype),
        grid=(n,),
        in_specs=[
            pl.BlockSpec((1, mp, cin), lambda b: (b, 0, 0)),
            pl.BlockSpec((mp, 1), lambda b: (0, 0)),
            pl.BlockSpec((cin, cmid_p), lambda b: (0, 0)),
            pl.BlockSpec((1, cmid_p), lambda b: (0, 0)),
            pl.BlockSpec((9, cmid_p, cout_p), lambda b: (0, 0, 0)),
            pl.BlockSpec((1, cout_p), lambda b: (0, 0)),
        ],
        out_specs=pl.BlockSpec((1, m_out, cout_p), lambda b: (b, 0, 0)),
        scratch_shapes=[pltpu.VMEM((mp, cmid_p), jnp.float32)],
        compiler_params=pltpu.CompilerParams(dimension_semantics=("parallel",)),
    )(xflat, mask, w1, b1, w2, b2)

    # ---- stride subsampling + channel un-padding (cheap strided slice in XLA) -------
    out_full = out_full.reshape(n, hf, wp, cout_p)
    y = out_full[:, 0:(ho - 1) * stride + 1:stride,
                 0:(wo - 1) * stride + 1:stride, :out_ch]
    return jnp.transpose(y, (0, 3, 1, 2))                          # NHWC -> NCHW


def make_params(key, in_ch, mid_ch, out_ch, eps=1e-5, dtype=jnp.float32):
    """Deterministic synthetic parameters; BN folded into weights, lanes padded to 128."""
    ks = jax.random.split(key, 10)
    w1_t = jax.random.normal(ks[0], (mid_ch, in_ch, 1, 1), dtype) * 0.1   # (O,I,1,1)
    w2_t = jax.random.normal(ks[1], (out_ch, mid_ch, 3, 3), dtype) * 0.1  # (O,I,3,3)

    g1 = jax.random.uniform(ks[2], (mid_ch,), dtype, 0.5, 1.5)
    b1 = jax.random.normal(ks[3], (mid_ch,), dtype) * 0.1
    m1 = jax.random.normal(ks[4], (mid_ch,), dtype) * 0.1
    v1 = jax.random.uniform(ks[5], (mid_ch,), dtype, 0.5, 1.5)

    g2 = jax.random.uniform(ks[6], (out_ch,), dtype, 0.5, 1.5)
    b2 = jax.random.normal(ks[7], (out_ch,), dtype) * 0.1
    m2 = jax.random.normal(ks[8], (out_ch,), dtype) * 0.1
    v2 = jax.random.uniform(ks[9], (out_ch,), dtype, 0.5, 1.5)

    # Fold BN (inference mode) into per-channel scale/shift.
    s1 = g1 / jnp.sqrt(v1 + eps)
    sh1 = b1 - m1 * s1
    s2 = g2 / jnp.sqrt(v2 + eps)
    sh2 = b2 - m2 * s2

    cmid_p = _round_up(mid_ch, LANE)
    cout_p = _round_up(out_ch, LANE)

    # 1x1 conv: (O,I,1,1) -> (I,O); fold BN1 scale into weight columns; zero-pad lanes.
    w1_eff = jnp.transpose(w1_t[:, :, 0, 0], (1, 0)) * s1[None, :]
    w1_eff = jnp.pad(w1_eff, ((0, 0), (0, cmid_p - mid_ch)))
    b1_eff = jnp.pad(sh1, (0, cmid_p - mid_ch)).reshape(1, cmid_p)

    # 3x3 conv: (O,I,3,3) -> (kh,kw,I,O) -> (9,I,O); fold BN2 scale in; zero-pad lanes.
    w2_eff = (jnp.transpose(w2_t, (2, 3, 1, 0)).reshape(9, mid_ch, out_ch)
              * s2[None, None, :])
    w2_eff = jnp.pad(w2_eff, ((0, 0), (0, cmid_p - mid_ch), (0, cout_p - out_ch)))
    b2_eff = jnp.pad(sh2, (0, cout_p - out_ch)).reshape(1, cout_p)

    params = {"w1": w1_eff, "b1": b1_eff, "w2": w2_eff, "b2": b2_eff}
    raw = {"w1_t": w1_t, "w2_t": w2_t,
           "g1": g1, "b1": b1, "m1": m1, "v1": v1,
           "g2": g2, "b2": b2, "m2": m2, "v2": v2, "eps": eps}
    return params, raw


def reference_forward(x_nchw, raw, stride, pad):
    """Pure-JAX reference (lax.conv) of the same (inference-BN) forward pass."""
    eps = raw["eps"]
    x = jnp.transpose(x_nchw, (0, 2, 3, 1))
    w1_hwio = jnp.transpose(raw["w1_t"], (2, 3, 1, 0))  # (1,1,Cin,Cmid)
    w2_hwio = jnp.transpose(raw["w2_t"], (2, 3, 1, 0))  # (3,3,Cmid,Cout)
    y = lax.conv_general_dilated(x, w1_hwio, (1, 1), "VALID",
                                 dimension_numbers=("NHWC", "HWIO", "NHWC"))
    y = (y - raw["m1"]) / jnp.sqrt(raw["v1"] + eps) * raw["g1"] + raw["b1"]
    y = jnp.maximum(y, 0.0)
    y = lax.conv_general_dilated(y, w2_hwio, (stride, stride),
                                 ((pad, pad), (pad, pad)),
                                 dimension_numbers=("NHWC", "HWIO", "NHWC"))
    y = (y - raw["m2"]) / jnp.sqrt(raw["v2"] + eps) * raw["g2"] + raw["b2"]
    y = jnp.maximum(y, 0.0)
    return jnp.transpose(y, (0, 3, 1, 2))


if __name__ == "__main__":
    # Small shapes consistent with the module: N=2, in_ch=4, mid_ch=8, out_ch=16,
    # H=W=16, stride=2, pad=1.
    N, IN_CH, MID_CH, OUT_CH = 2, 4, 8, 16
    H = W = 16
    STRIDE, PAD = 2, 1

    key = jax.random.PRNGKey(0)
    kx, kp = jax.random.split(key)
    x = jax.random.normal(kx, (N, IN_CH, H, W), jnp.float32)  # NCHW like PyTorch

    params, raw = make_params(kp, IN_CH, MID_CH, OUT_CH)

    out = layer_n_scale_forward(x, params, STRIDE, PAD, OUT_CH)
    out = jax.block_until_ready(out)
    ref = jax.block_until_ready(reference_forward(x, raw, STRIDE, PAD))

    HO = (H + 2 * PAD - 3) // STRIDE + 1
    WO = (W + 2 * PAD - 3) // STRIDE + 1
    assert out.shape == (N, OUT_CH, HO, WO), out.shape
    max_err = float(jnp.max(jnp.abs(out - ref)))
    assert jnp.allclose(out, ref, rtol=1e-4, atol=1e-4), max_err

    print("KERNEL_OK")
</pallas_src>

<mosaic_0001>
module attributes {stable_mosaic.version = 11 : i64} {
  func.func @kernel(%arg0: i32, %arg1: memref<1x360x4xf32, #tpu.memory_space<vmem>>, %arg2: memref<360x1xf32, #tpu.memory_space<vmem>>, %arg3: memref<4x128xf32, #tpu.memory_space<vmem>>, %arg4: memref<1x128xf32, #tpu.memory_space<vmem>>, %arg5: memref<9x128x128xf32, #tpu.memory_space<vmem>>, %arg6: memref<1x128xf32, #tpu.memory_space<vmem>>, %arg7: memref<1x288x128xf32, #tpu.memory_space<vmem>>, %arg8: memref<360x128xf32, #tpu.memory_space<vmem>>) attributes {dimension_semantics = [#tpu.dimension_semantics<parallel>], iteration_bounds = array<i64: 2>, scalar_prefetch = 0 : i64, scratch_operands = 1 : i64, tpu.core_type = #tpu.core_type<tc>, window_params = [{transform_indices = @transform_0, window_bounds = array<i64: 1, 360, 4>}, {pipeline_mode = #tpu.pipeline_mode<synchronous>, transform_indices = @transform_1, window_bounds = array<i64: 360, 1>}, {pipeline_mode = #tpu.pipeline_mode<synchronous>, transform_indices = @transform_2, window_bounds = array<i64: 4, 128>}, {pipeline_mode = #tpu.pipeline_mode<synchronous>, transform_indices = @transform_3, window_bounds = array<i64: 1, 128>}, {pipeline_mode = #tpu.pipeline_mode<synchronous>, transform_indices = @transform_4, window_bounds = array<i64: 9, 128, 128>}, {pipeline_mode = #tpu.pipeline_mode<synchronous>, transform_indices = @transform_5, window_bounds = array<i64: 1, 128>}, {transform_indices = @transform_6, window_bounds = array<i64: 1, 288, 128>}]} {
    %c0 = arith.constant 0 : index
    %c0_0 = arith.constant 0 : index
    %c0_1 = arith.constant 0 : index
    %0 = vector.load %arg1[%c0, %c0_0, %c0_1] : memref<1x360x4xf32, #tpu.memory_space<vmem>>, vector<1x360x4xf32>
    %1 = vector.shape_cast %0 : vector<1x360x4xf32> to vector<360x4xf32>
    %c0_2 = arith.constant 0 : index
    %c0_3 = arith.constant 0 : index
    %2 = vector.load %arg3[%c0_2, %c0_3] : memref<4x128xf32, #tpu.memory_space<vmem>>, vector<4x128xf32>
    %cst = arith.constant dense<0.000000e+00> : vector<360x128xf32>
    %3 = tpu.matmul %1, %2, %cst {dimension_numbers = #tpu.dot_dimension_numbers<[1], [0], [0], [1], [0, 0, 1, 1], [], []>} : vector<360x4xf32>, vector<4x128xf32>, vector<360x128xf32> -> vector<360x128xf32>
    %c0_4 = arith.constant 0 : index
    %c0_5 = arith.constant 0 : index
    %4 = vector.load %arg4[%c0_4, %c0_5] : memref<1x128xf32, #tpu.memory_space<vmem>>, vector<1x128xf32>
    %5 = vector.broadcast %4 : vector<1x128xf32> to vector<360x128xf32>
    %6 = arith.addf %3, %5 : vector<360x128xf32>
    %cst_6 = arith.constant 0.000000e+00 : f32
    %7 = vector.broadcast %cst_6 : f32 to vector<360x128xf32>
    %8 = arith.maximumf %6, %7 : vector<360x128xf32>
    %c0_7 = arith.constant 0 : index
    %c0_8 = arith.constant 0 : index
    %9 = vector.load %arg2[%c0_7, %c0_8] : memref<360x1xf32, #tpu.memory_space<vmem>>, vector<360x1xf32>
    %10 = vector.broadcast %9 : vector<360x1xf32> to vector<360x128xf32>
    %11 = arith.mulf %8, %10 : vector<360x128xf32>
    %c0_9 = arith.constant 0 : index
    %c0_10 = arith.constant 0 : index
    %12 = vector.load %arg8[%c0_9, %c0_10] : memref<360x128xf32, #tpu.memory_space<vmem>>, vector<360x128xf32>
    tpu.vector_store %arg8[%c0_9, %c0_10], %11 {strides = array<i32>} : memref<360x128xf32, #tpu.memory_space<vmem>>, vector<360x128xf32>,
    %c0_11 = arith.constant 0 : index
    %c0_12 = arith.constant 0 : index
    %13 = vector.load %arg8[%c0_11, %c0_12] : memref<360x128xf32, #tpu.memory_space<vmem>>, vector<288x128xf32>
    %c0_13 = arith.constant 0 : index
    %c0_14 = arith.constant 0 : index
    %c0_15 = arith.constant 0 : index
    %14 = vector.load %arg5[%c0_13, %c0_14, %c0_15] : memref<9x128x128xf32, #tpu.memory_space<vmem>>, vector<1x128x128xf32>
    %15 = vector.shape_cast %14 : vector<1x128x128xf32> to vector<128x128xf32>
    %cst_16 = arith.constant dense<0.000000e+00> : vector<288x128xf32>
    %16 = tpu.matmul %13, %15, %cst_16 {dimension_numbers = #tpu.dot_dimension_numbers<[1], [0], [0], [1], [0, 0, 1, 1], [], []>} : vector<288x128xf32>, vector<128x128xf32>, vector<288x128xf32> -> vector<288x128xf32>
    %c1 = arith.constant 1 : index
    %c0_17 = arith.constant 0 : index
    %17 = vector.load %arg8[%c1, %c0_17] : memref<360x128xf32, #tpu.memory_space<vmem>>, vector<288x128xf32>
    %c1_18 = arith.constant 1 : index
    %c0_19 = arith.constant 0 : index
    %c0_20 = arith.constant 0 : index
    %18 = vector.load %arg5[%c1_18, %c0_19, %c0_20] : memref<9x128x128xf32, #tpu.memory_space<vmem>>, vector<1x128x128xf32>
    %19 = vector.shape_cast %18 : vector<1x128x128xf32> to vector<128x128xf32>
    %cst_21 = arith.constant dense<0.000000e+00> : vector<288x128xf32>
    %20 = tpu.matmul %17, %19, %cst_21 {dimension_numbers = #tpu.dot_dimension_numbers<[1], [0], [0], [1], [0, 0, 1, 1], [], []>} : vector<288x128xf32>, vector<128x128xf32>, vector<288x128xf32> -> vector<288x128xf32>
    %21 = arith.addf %16, %20 : vector<288x128xf32>
    %c2 = arith.constant 2 : index
    %c0_22 = arith.constant 0 : index
    %22 = vector.load %arg8[%c2, %c0_22] : memref<360x128xf32, #tpu.memory_space<vmem>>, vector<288x128xf32>
    %c2_23 = arith.constant 2 : index
    %c0_24 = arith.constant 0 : index
    %c0_25 = arith.constant 0 : index
    %23 = vector.load %arg5[%c2_23, %c0_24, %c0_25] : memref<9x128x128xf32, #tpu.memory_space<vmem>>, vector<1x128x128xf32>
    %24 = vector.shape_cast %23 : vector<1x128x128xf32> to vector<128x128xf32>
    %cst_26 = arith.constant dense<0.000000e+00> : vector<288x128xf32>
    %25 = tpu.matmul %22, %24, %cst_26 {dimension_numbers = #tpu.dot_dimension_numbers<[1], [0], [0], [1], [0, 0, 1, 1], [], []>} : vector<288x128xf32>, vector<128x128xf32>, vector<288x128xf32> -> vector<288x128xf32>
    %26 = arith.addf %21, %25 : vector<288x128xf32>
    %c18 = arith.constant 18 : index
    %c0_27 = arith.constant 0 : index
    %27 = vector.load %arg8[%c18, %c0_27] : memref<360x128xf32, #tpu.memory_space<vmem>>, vector<288x128xf32>
    %c3 = arith.constant 3 : index
    %c0_28 = arith.constant 0 : index
    %c0_29 = arith.constant 0 : index
    %28 = vector.load %arg5[%c3, %c0_28, %c0_29] : memref<9x128x128xf32, #tpu.memory_space<vmem>>, vector<1x128x128xf32>
    %29 = vector.shape_cast %28 : vector<1x128x128xf32> to vector<128x128xf32>
    %cst_30 = arith.constant dense<0.000000e+00> : vector<288x128xf32>
    %30 = tpu.matmul %27, %29, %cst_30 {dimension_numbers = #tpu.dot_dimension_numbers<[1], [0], [0], [1], [0, 0, 1, 1], [], []>} : vector<288x128xf32>, vector<128x128xf32>, vector<288x128xf32> -> vector<288x128xf32>
    %31 = arith.addf %26, %30 : vector<288x128xf32>
    %c19 = arith.constant 19 : index
    %c0_31 = arith.constant 0 : index
    %32 = vector.load %arg8[%c19, %c0_31] : memref<360x128xf32, #tpu.memory_space<vmem>>, vector<288x128xf32>
    %c4 = arith.constant 4 : index
    %c0_32 = arith.constant 0 : index
    %c0_33 = arith.constant 0 : index
    %33 = vector.load %arg5[%c4, %c0_32, %c0_33] : memref<9x128x128xf32, #tpu.memory_space<vmem>>, vector<1x128x128xf32>
    %34 = vector.shape_cast %33 : vector<1x128x128xf32> to vector<128x128xf32>
    %cst_34 = arith.constant dense<0.000000e+00> : vector<288x128xf32>
    %35 = tpu.matmul %32, %34, %cst_34 {dimension_numbers = #tpu.dot_dimension_numbers<[1], [0], [0], [1], [0, 0, 1, 1], [], []>} : vector<288x128xf32>, vector<128x128xf32>, vector<288x128xf32> -> vector<288x128xf32>
    %36 = arith.addf %31, %35 : vector<288x128xf32>
    %c20 = arith.constant 20 : index
    %c0_35 = arith.constant 0 : index
    %37 = vector.load %arg8[%c20, %c0_35] : memref<360x128xf32, #tpu.memory_space<vmem>>, vector<288x128xf32>
    %c5 = arith.constant 5 : index
    %c0_36 = arith.constant 0 : index
    %c0_37 = arith.constant 0 : index
    %38 = vector.load %arg5[%c5, %c0_36, %c0_37] : memref<9x128x128xf32, #tpu.memory_space<vmem>>, vector<1x128x128xf32>
    %39 = vector.shape_cast %38 : vector<1x128x128xf32> to vector<128x128xf32>
    %cst_38 = arith.constant dense<0.000000e+00> : vector<288x128xf32>
    %40 = tpu.matmul %37, %39, %cst_38 {dimension_numbers = #tpu.dot_dimension_numbers<[1], [0], [0], [1], [0, 0, 1, 1], [], []>} : vector<288x128xf32>, vector<128x128xf32>, vector<288x128xf32> -> vector<288x128xf32>
    %41 = arith.addf %36, %40 : vector<288x128xf32>
    %c36 = arith.constant 36 : index
    %c0_39 = arith.constant 0 : index
    %42 = vector.load %arg8[%c36, %c0_39] : memref<360x128xf32, #tpu.memory_space<vmem>>, vector<288x128xf32>
    %c6 = arith.constant 6 : index
    %c0_40 = arith.constant 0 : index
    %c0_41 = arith.constant 0 : index
    %43 = vector.load %arg5[%c6, %c0_40, %c0_41] : memref<9x128x128xf32, #tpu.memory_space<vmem>>, vector<1x128x128xf32>
    %44 = vector.shape_cast %43 : vector<1x128x128xf32> to vector<128x128xf32>
    %cst_42 = arith.constant dense<0.000000e+00> : vector<288x128xf32>
    %45 = tpu.matmul %42, %44, %cst_42 {dimension_numbers = #tpu.dot_dimension_numbers<[1], [0], [0], [1], [0, 0, 1, 1], [], []>} : vector<288x128xf32>, vector<128x128xf32>, vector<288x128xf32> -> vector<288x128xf32>
    %46 = arith.addf %41, %45 : vector<288x128xf32>
    %c37 = arith.constant 37 : index
    %c0_43 = arith.constant 0 : index
    %47 = vector.load %arg8[%c37, %c0_43] : memref<360x128xf32, #tpu.memory_space<vmem>>, vector<288x128xf32>
    %c7 = arith.constant 7 : index
    %c0_44 = arith.constant 0 : index
    %c0_45 = arith.constant 0 : index
    %48 = vector.load %arg5[%c7, %c0_44, %c0_45] : memref<9x128x128xf32, #tpu.memory_space<vmem>>, vector<1x128x128xf32>
    %49 = vector.shape_cast %48 : vector<1x128x128xf32> to vector<128x128xf32>
    %cst_46 = arith.constant dense<0.000000e+00> : vector<288x128xf32>
    %50 = tpu.matmul %47, %49, %cst_46 {dimension_numbers = #tpu.dot_dimension_numbers<[1], [0], [0], [1], [0, 0, 1, 1], [], []>} : vector<288x128xf32>, vector<128x128xf32>, vector<288x128xf32> -> vector<288x128xf32>
    %51 = arith.addf %46, %50 : vector<288x128xf32>
    %c38 = arith.constant 38 : index
    %c0_47 = arith.constant 0 : index
    %52 = vector.load %arg8[%c38, %c0_47] : memref<360x128xf32, #tpu.memory_space<vmem>>, vector<288x128xf32>
    %c8 = arith.constant 8 : index
    %c0_48 = arith.constant 0 : index
    %c0_49 = arith.constant 0 : index
    %53 = vector.load %arg5[%c8, %c0_48, %c0_49] : memref<9x128x128xf32, #tpu.memory_space<vmem>>, vector<1x128x128xf32>
    %54 = vector.shape_cast %53 : vector<1x128x128xf32> to vector<128x128xf32>
    %cst_50 = arith.constant dense<0.000000e+00> : vector<288x128xf32>
    %55 = tpu.matmul %52, %54, %cst_50 {dimension_numbers = #tpu.dot_dimension_numbers<[1], [0], [0], [1], [0, 0, 1, 1], [], []>} : vector<288x128xf32>, vector<128x128xf32>, vector<288x128xf32> -> vector<288x128xf32>
    %56 = arith.addf %51, %55 : vector<288x128xf32>
    %c0_51 = arith.constant 0 : index
    %c0_52 = arith.constant 0 : index
    %57 = vector.load %arg6[%c0_51, %c0_52] : memref<1x128xf32, #tpu.memory_space<vmem>>, vector<1x128xf32>
    %58 = vector.broadcast %57 : vector<1x128xf32> to vector<288x128xf32>
    %59 = arith.addf %56, %58 : vector<288x128xf32>
    %cst_53 = arith.constant 0.000000e+00 : f32
    %60 = vector.broadcast %cst_53 : f32 to vector<288x128xf32>
    %61 = arith.maximumf %59, %60 : vector<288x128xf32>
    %c0_54 = arith.constant 0 : index
    %c0_55 = arith.constant 0 : index
    %c0_56 = arith.constant 0 : index
    %62 = vector.load %arg7[%c0_54, %c0_55, %c0_56] : memref<1x288x128xf32, #tpu.memory_space<vmem>>, vector<1x288x128xf32>
    %63 = vector.shape_cast %62 : vector<1x288x128xf32> to vector<288x128xf32>
    %64 = vector.shape_cast %61 : vector<288x128xf32> to vector<1x288x128xf32>
    tpu.vector_store %arg7[%c0_54, %c0_55, %c0_56], %64 {strides = array<i32>} : memref<1x288x128xf32, #tpu.memory_space<vmem>>, vector<1x288x128xf32>,
    return
  }
  func.func @transform_0(%arg0: i32) -> (i32, i32, i32) {
    %c0_i32 = arith.constant 0 : i32
    %c0_i32_0 = arith.constant 0 : i32
    %c0_i32_1 = arith.constant 0 : i32
    return %arg0, %c0_i32, %c0_i32_0 : i32, i32, i32
  }
  func.func @transform_1(%arg0: i32) -> (i32, i32) {
    %c0_i32 = arith.constant 0 : i32
    %c0_i32_0 = arith.constant 0 : i32
    %c0_i32_1 = arith.constant 0 : i32
    return %c0_i32, %c0_i32_0 : i32, i32
  }
  func.func @transform_2(%arg0: i32) -> (i32, i32) {
    %c0_i32 = arith.constant 0 : i32
    %c0_i32_0 = arith.constant 0 : i32
    %c0_i32_1 = arith.constant 0 : i32
    return %c0_i32, %c0_i32_0 : i32, i32
  }
  func.func @transform_3(%arg0: i32) -> (i32, i32) {
    %c0_i32 = arith.constant 0 : i32
    %c0_i32_0 = arith.constant 0 : i32
    %c0_i32_1 = arith.constant 0 : i32
    return %c0_i32, %c0_i32_0 : i32, i32
  }
  func.func @transform_4(%arg0: i32) -> (i32, i32, i32) {
    %c0_i32 = arith.constant 0 : i32
    %c0_i32_0 = arith.constant 0 : i32
    %c0_i32_1 = arith.constant 0 : i32
    %c0_i32_2 = arith.constant 0 : i32
    return %c0_i32, %c0_i32_0, %c0_i32_1 : i32, i32, i32
  }
  func.func @transform_5(%arg0: i32) -> (i32, i32) {
    %c0_i32 = arith.constant 0 : i32
    %c0_i32_0 = arith.constant 0 : i32
    %c0_i32_1 = arith.constant 0 : i32
    return %c0_i32, %c0_i32_0 : i32, i32
  }
  func.func @transform_6(%arg0: i32) -> (i32, i32, i32) {
    %c0_i32 = arith.constant 0 : i32
    %c0_i32_0 = arith.constant 0 : i32
    %c0_i32_1 = arith.constant 0 : i32
    return %arg0, %c0_i32, %c0_i32_0 : i32, i32, i32
  }
}

</mosaic_0001>

<llo_original>
// kernel: layer_n_scale_forward.1
$region0: #{layer_n_scale_forward.1}
  #allocation0 [shape = 'u32[]', space=smem, size = 0x4, offset = 0x4, fixed_abs, tag = 'smem constant byte address 0x4 - core index']
  #allocation1 [shape = 'u32[72,128]{1,0:T(1,128)}', space=vmem, size = 0x9000, scoped, tag = 'internal scratch']
  #allocation2 [shape = 'f32[360,128]{1,0:T(8,128)}', space=vmem, size = 0x2d000, scoped, tag = 'scratch operand']
  %s0 = inlined_call_operand.vmem [shape: f32[2,360,4], index: 0, kind: input, shape index: {}]
  %s1 = inlined_call_operand.vmem [shape: f32[360,1], index: 1, kind: input, shape index: {}]
  %s2 = inlined_call_operand.vmem [shape: f32[4,128], index: 2, kind: input, shape index: {}]
  %s3 = inlined_call_operand.vmem [shape: f32[1,128], index: 3, kind: input, shape index: {}]
  %s4 = inlined_call_operand.vmem [shape: f32[9,128,128], index: 4, kind: input, shape index: {}]
  %s5 = inlined_call_operand.vmem [shape: f32[1,128], index: 5, kind: input, shape index: {}]
  %s6 = inlined_call_operand.vmem [shape: f32[2,288,128], index: 6, kind: output, shape index: {}]
  %s7 = sld [smem:[#allocation0]]
  $region57: #{layer_n_scale_forward.1} parent=0
    _
  %s9 = ssub.s32 1, %s7
  %s10 = scalar_select 0, %s9, %s7
  loop: start=0, step=1, limit=4
  $region2: #{layer_n_scale_forward.1} parent=0 // loop_pre_header
    _
  $region3: #{layer_n_scale_forward.1} parent=0 // loop_header
    %s12 = sphi 0, %s16
    %p13 = scmp.ge.s32.totalorder %s12, 4
    %s22 = sphi 0, %s24
    %s25 = sphi 0, %s22
    %s26 = sphi 0, %s25
    %s42 = sphi 0, %s26
    %s46 = sphi 0, %s46
    %s48 = sphi 0, %s46
    %s49 = sphi 0, %s48
    %s63 = sphi 0, %s49
    %s67 = sphi 0, %s67
    %s69 = sphi 0, %s67
    %s70 = sphi 0, %s69
    %s84 = sphi 0, %s70
    %s88 = sphi 0, %s88
    %s90 = sphi 0, %s88
    %s91 = sphi 0, %s90
    %s105 = sphi 0, %s91
    %s109 = sphi 0, %s109
    %s111 = sphi 0, %s109
    %s112 = sphi 0, %s111
    %s126 = sphi 0, %s112
    %s130 = sphi 0, %s130
    %s132 = sphi 0, %s130
    %s133 = sphi 0, %s132
    %s147 = sphi 0, %s133
    %s153 = sphi 0, %s155
    %s156 = sphi 0, %s153
    %s157 = sphi 0, %s156
    %s173 = sphi 0, %s157
  $region4: #{layer_n_scale_forward.1} parent=0 // loop_header_branch
    %15 = sbr.rel (%p13) target = $region8
  $region5: #{layer_n_scale_forward.1} parent=0 // loop_body
    %s17 = ssub.s32 %s12, 1
    %s18 = ssub.s32 %s12, 2
    %s19 = sadd.s32 %s12, 1
    %s20 = ssub.s32 %s12, %s19
    %p21 = scmp.eq.s32.totalorder %s20, 0
    %s23 = sadd.s32 %s22, 1
    %s24 = scalar_select %p21, %s22, %s23
    %p27 = pneg %p21
    %p28 = scmp.eq.s32.totalorder %s12, 1
    %p29 = por %p27, %p28
    %p30 = scmp.ne.s32.totalorder %s22, %s25
    %p31 = scmp.eq.s32.totalorder %s12, 0
    %p32 = por %p30, %p31
    %p33 = scmp.ne.s32.totalorder %s22, %s25
    %p34 = scmp.eq.s32.totalorder %s17, 1
    %p35 = por %p33, %p34
    %p36 = scmp.ne.s32.totalorder %s25, %s26
    %p37 = scmp.eq.s32.totalorder %s17, 0
    %p38 = por %p36, %p37
    %p39 = scmp.ne.s32.totalorder %s25, %s26
    %p40 = scmp.eq.s32.totalorder %s18, 1
    %p41 = por %p39, %p40
    %p43 = scmp.ne.s32.totalorder %s26, %s42
    %p44 = scmp.eq.s32.totalorder %s18, 0
    %p45 = por %p43, %p44
    %s47 = sadd.s32 %s46, 1
    %p50 = scmp.eq.s32.totalorder %s12, 1
    %p51 = scmp.ne.s32.totalorder %s46, %s48
    %p52 = scmp.eq.s32.totalorder %s12, 0
    %p53 = por %p51, %p52
    %p54 = scmp.ne.s32.totalorder %s46, %s48
    %p55 = scmp.eq.s32.totalorder %s17, 1
    %p56 = por %p54, %p55
    %p57 = scmp.ne.s32.totalorder %s48, %s49
    %p58 = scmp.eq.s32.totalorder %s17, 0
    %p59 = por %p57, %p58
    %p60 = scmp.ne.s32.totalorder %s48, %s49
    %p61 = scmp.eq.s32.totalorder %s18, 1
    %p62 = por %p60, %p61
    %p64 = scmp.ne.s32.totalorder %s49, %s63
    %p65 = scmp.eq.s32.totalorder %s18, 0
    %p66 = por %p64, %p65
    %s68 = sadd.s32 %s67, 1
    %p71 = scmp.eq.s32.totalorder %s12, 1
    %p72 = scmp.ne.s32.totalorder %s67, %s69
    %p73 = scmp.eq.s32.totalorder %s12, 0
    %p74 = por %p72, %p73
    %p75 = scmp.ne.s32.totalorder %s67, %s69
    %p76 = scmp.eq.s32.totalorder %s17, 1
    %p77 = por %p75, %p76
    %p78 = scmp.ne.s32.totalorder %s69, %s70
    %p79 = scmp.eq.s32.totalorder %s17, 0
    %p80 = por %p78, %p79
    %p81 = scmp.ne.s32.totalorder %s69, %s70
    %p82 = scmp.eq.s32.totalorder %s18, 1
    %p83 = por %p81, %p82
    %p85 = scmp.ne.s32.totalorder %s70, %s84
    %p86 = scmp.eq.s32.totalorder %s18, 0
    %p87 = por %p85, %p86
    %s89 = sadd.s32 %s88, 1
    %p92 = scmp.eq.s32.totalorder %s12, 1
    %p93 = scmp.ne.s32.totalorder %s88, %s90
    %p94 = scmp.eq.s32.totalorder %s12, 0
    %p95 = por %p93, %p94
    %p96 = scmp.ne.s32.totalorder %s88, %s90
    %p97 = scmp.eq.s32.totalorder %s17, 1
    %p98 = por %p96, %p97
    %p99 = scmp.ne.s32.totalorder %s90, %s91
    %p100 = scmp.eq.s32.totalorder %s17, 0
    %p101 = por %p99, %p100
    %p102 = scmp.ne.s32.totalorder %s90, %s91
    %p103 = scmp.eq.s32.totalorder %s18, 1
    %p104 = por %p102, %p103
    %p106 = scmp.ne.s32.totalorder %s91, %s105
    %p107 = scmp.eq.s32.totalorder %s18, 0
    %p108 = por %p106, %p107
    %s110 = sadd.s32 %s109, 1
    %p113 = scmp.eq.s32.totalorder %s12, 1
    %p114 = scmp.ne.s32.totalorder %s109, %s111
    %p115 = scmp.eq.s32.totalorder %s12, 0
    %p116 = por %p114, %p115
    %p117 = scmp.ne.s32.totalorder %s109, %s111
    %p118 = scmp.eq.s32.totalorder %s17, 1
    %p119 = por %p117, %p118
    %p120 = scmp.ne.s32.totalorder %s111, %s112
    %p121 = scmp.eq.s32.totalorder %s17, 0
    %p122 = por %p120, %p121
    %p123 = scmp.ne.s32.totalorder %s111, %s112
    %p124 = scmp.eq.s32.totalorder %s18, 1
    %p125 = por %p123, %p124
    %p127 = scmp.ne.s32.totalorder %s112, %s126
    %p128 = scmp.eq.s32.totalorder %s18, 0
    %p129 = por %p127, %p128
    %s131 = sadd.s32 %s130, 1
    %p134 = scmp.eq.s32.totalorder %s12, 1
    %p135 = scmp.ne.s32.totalorder %s130, %s132
    %p136 = scmp.eq.s32.totalorder %s12, 0
    %p137 = por %p135, %p136
    %p138 = scmp.ne.s32.totalorder %s130, %s132
    %p139 = scmp.eq.s32.totalorder %s17, 1
    %p140 = por %p138, %p139
    %p141 = scmp.ne.s32.totalorder %s132, %s133
    %p142 = scmp.eq.s32.totalorder %s17, 0
    %p143 = por %p141, %p142
    %p144 = scmp.ne.s32.totalorder %s132, %s133
    %p145 = scmp.eq.s32.totalorder %s18, 1
    %p146 = por %p144, %p145
    %p148 = scmp.ne.s32.totalorder %s133, %s147
    %p149 = scmp.eq.s32.totalorder %s18, 0
    %p150 = por %p148, %p149
    %s151 = ssub.s32 %s12, %s19
    %p152 = scmp.eq.s32.totalorder %s151, 0
    %s154 = sadd.s32 %s153, 1
    %s155 = scalar_select %p152, %s153, %s154
    %p158 = pneg %p152
    %p159 = scmp.eq.s32.totalorder %s12, 1
    %p160 = por %p158, %p159
    %p161 = scmp.ne.s32.totalorder %s153, %s156
    %p162 = scmp.eq.s32.totalorder %s12, 0
    %p163 = por %p161, %p162
    %p164 = scmp.ne.s32.totalorder %s153, %s156
    %p165 = scmp.eq.s32.totalorder %s17, 1
    %p166 = por %p164, %p165
    %p167 = scmp.ne.s32.totalorder %s156, %s157
    %p168 = scmp.eq.s32.totalorder %s17, 0
    %p169 = por %p167, %p168
    %p170 = scmp.ne.s32.totalorder %s156, %s157
    %p171 = scmp.eq.s32.totalorder %s18, 1
    %p172 = por %p170, %p171
    %p174 = scmp.ne.s32.totalorder %s157, %s173
    %p175 = scmp.eq.s32.totalorder %s18, 0
    %p176 = por %p174, %p175
    %p177 = scmp.le.s32.totalorder 1, %s12
    %p178 = scmp.lt.s32.totalorder %s12, 3
    %p179 = pnand %p177, %p178
    %p180 = pneg %p179
    // Predicated region
    $region9: #{layer_n_scale_forward.1} parent=5 // pred_check
      _
    $region10: #{layer_n_scale_forward.1} parent=5 // pred_check_branch
      %182 = sbr.rel (%p179) target = $region12
    $region11: #{layer_n_scale_forward.1} parent=5 // pred_region
      %s183 = ssub.s32 %s12, 1
      // Predicated region
      $region13: #{layer_n_scale_forward.1} parent=11 // pred_check
        %p184 = pneg %p59
      $region14: #{layer_n_scale_forward.1} parent=11 // pred_check_branch
        %186 = sbr.rel (%p184) target = $region16
      $region15: #{layer_n_scale_forward.1} parent=11 // pred_region
        _
      $region16: #{layer_n_scale_forward.1} parent=11 // pred_fallthru
        _
      // Predicated region
      $region17: #{layer_n_scale_forward.1} parent=11 // pred_check
        %p187 = pneg %p80
      $region18: #{layer_n_scale_forward.1} parent=11 // pred_check_branch
        %189 = sbr.rel (%p187) target = $region20
      $region19: #{layer_n_scale_forward.1} parent=11 // pred_region
        _
      $region20: #{layer_n_scale_forward.1} parent=11 // pred_fallthru
        _
      // Predicated region
      $region21: #{layer_n_scale_forward.1} parent=11 // pred_check
        %p190 = pneg %p101
      $region22: #{layer_n_scale_forward.1} parent=11 // pred_check_branch
        %192 = sbr.rel (%p190) target = $region24
      $region23: #{layer_n_scale_forward.1} parent=11 // pred_region
        _
      $region24: #{layer_n_scale_forward.1} parent=11 // pred_fallthru
        _
      // Predicated region
      $region25: #{layer_n_scale_forward.1} parent=11 // pred_check
        %p193 = pneg %p122
      $region26: #{layer_n_scale_forward.1} parent=11 // pred_check_branch
        %195 = sbr.rel (%p193) target = $region28
      $region27: #{layer_n_scale_forward.1} parent=11 // pred_region
        _
      $region28: #{layer_n_scale_forward.1} parent=11 // pred_fallthru
        _
      // Predicated region
      $region29: #{layer_n_scale_forward.1} parent=11 // pred_check
        %p196 = pneg %p143
      $region30: #{layer_n_scale_forward.1} parent=11 // pred_check_branch
        %198 = sbr.rel (%p196) target = $region32
      $region31: #{layer_n_scale_forward.1} parent=11 // pred_region
        _
      $region32: #{layer_n_scale_forward.1} parent=11 // pred_fallthru
        _
    $region12: #{layer_n_scale_forward.1} parent=5 // pred_fallthru
      _
    %p199 = scmp.lt.s32.totalorder %s12, 2
    // Predicated region
    $region33: #{layer_n_scale_forward.1} parent=5 // pred_check
      %p200 = pneg %p199
    $region34: #{layer_n_scale_forward.1} parent=5 // pred_check_branch
      %202 = sbr.rel (%p200) target = $region36
    $region35: #{layer_n_scale_forward.1} parent=5 // pred_region
      // Predicated region
      $region37: #{layer_n_scale_forward.1} parent=35 // pred_check
        %p203 = pneg %p32
      $region38: #{layer_n_scale_forward.1} parent=35 // pred_check_branch
        %205 = sbr.rel (%p203) target = $region40
      $region39: #{layer_n_scale_forward.1} parent=35 // pred_region
        %p206 = scmp.lt.s32.totalorder %s12, 1
        %s207 = scalar_select %p206, %s12, 1
        %s208 = smul.addr %s207, 45
        %s209 = smul.addr %s208, 8
        %s210 = scalar_lea.vmem %s0, %s209
      $region40: #{layer_n_scale_forward.1} parent=35 // pred_fallthru
        _
    $region36: #{layer_n_scale_forward.1} parent=5 // pred_fallthru
      _
    %p211 = scmp.le.s32.totalorder 1, %s12
    %p212 = scmp.lt.s32.totalorder %s12, 3
    %p213 = pnand %p211, %p212
    %p214 = pneg %p213
    // Predicated region
    $region41: #{layer_n_scale_forward.1} parent=5 // pred_check
      _
    $region42: #{layer_n_scale_forward.1} parent=5 // pred_check_branch
      %216 = sbr.rel (%p213) target = $region44
    $region43: #{layer_n_scale_forward.1} parent=5 // pred_region
      %s217 = ssub.s32 %s12, 1
      %p218 = scmp.lt.s32.totalorder %s17, 1
      %s219 = scalar_select %p218, %s17, 1
      %s220 = smul.addr %s219, 45
      %s221 = smul.addr %s220, 8
      %s222 = scalar_lea.vmem %s0, %s221
      %p223 = pneg %p38
      %p224 = pneg %p35
      %p225 = pneg %p59
      %p226 = pneg %p56
      %p227 = pneg %p80
      %p228 = pneg %p77
      %p229 = pneg %p101
      %p230 = pneg %p98
      %p231 = pneg %p122
      %p232 = pneg %p119
      %p233 = pneg %p143
      %p234 = pneg %p140
      %p235 = pneg %p169
      %p236 = pneg %p166
      %p237 = scmp.lt.s32.totalorder %s17, 1
      %s238 = scalar_select %p237, %s17, 1
      %s239 = smul.addr %s238, 36
      %s240 = smul.addr %s239, 8
      %s241 = scalar_lea.vmem %s6, %s240
      %p242 = scmp.lt.s32.totalorder %s17, 1
      %s243 = scalar_select %p242, %s17, 1
      %s244 = smul.addr %s243, 45
      %s245 = smul.addr %s244, 8
      %s246 = scalar_lea.vmem %s0, %s245
      %p247 = scmp.lt.s32.totalorder %s17, 1
      %s248 = scalar_select %p247, %s17, 1
      %s249 = smul.addr %s248, 36
      %s250 = smul.addr %s249, 8
      %s251 = scalar_lea.vmem %s6, %s250
      %v252 = vld [vmem:[%s246] sm:$0xff]
      %v253 = vld [vmem:[%s246 + $0x8] sm:$0xff]
      %v254 = vld [vmem:[%s246 + $0x10] sm:$0xff]
      %v255 = vld [vmem:[%s246 + $0x18] sm:$0xff]
      %v256 = vld [vmem:[%s246 + $0x20] sm:$0xff]
      %v257 = vld [vmem:[%s246 + $0x28] sm:$0xff]
      %v258 = vld [vmem:[%s246 + $0x30] sm:$0xff]
      %v259 = vld [vmem:[%s246 + $0x38] sm:$0xff]
      %v260 = vld [vmem:[%s246 + $0x40] sm:$0xff]
      %v261 = vld [vmem:[%s246 + $0x48] sm:$0xff]
      %v262 = vld [vmem:[%s246 + $0x50] sm:$0xff]
      %v263 = vld [vmem:[%s246 + $0x58] sm:$0xff]
      %v264 = vld [vmem:[%s246 + $0x60] sm:$0xff]
      %v265 = vld [vmem:[%s246 + $0x68] sm:$0xff]
      %v266 = vld [vmem:[%s246 + $0x70] sm:$0xff]
      %v267 = vld [vmem:[%s246 + $0x78] sm:$0xff]
      %v268 = vld [vmem:[%s246 + $0x80] sm:$0xff]
      %v269 = vld [vmem:[%s246 + $0x88] sm:$0xff]
      %v270 = vld [vmem:[%s246 + $0x90] sm:$0xff]
      %v271 = vld [vmem:[%s246 + $0x98] sm:$0xff]
      %v272 = vld [vmem:[%s246 + $0xa0] sm:$0xff]
      %v273 = vld [vmem:[%s246 + $0xa8] sm:$0xff]
      %v274 = vld [vmem:[%s246 + $0xb0] sm:$0xff]
      %v275 = vld [vmem:[%s246 + $0xb8] sm:$0xff]
      %v276 = vld [vmem:[%s246 + $0xc0] sm:$0xff]
      %v277 = vld [vmem:[%s246 + $0xc8] sm:$0xff]
      %v278 = vld [vmem:[%s246 + $0xd0] sm:$0xff]
      %v279 = vld [vmem:[%s246 + $0xd8] sm:$0xff]
      %v280 = vld [vmem:[%s246 + $0xe0] sm:$0xff]
      %v281 = vld [vmem:[%s246 + $0xe8] sm:$0xff]
      %v282 = vld [vmem:[%s246 + $0xf0] sm:$0xff]
      %v283 = vld [vmem:[%s246 + $0xf8] sm:$0xff]
      %v284 = vld [vmem:[%s246 + $0x100] sm:$0xff]
      %v285 = vld [vmem:[%s246 + $0x108] sm:$0xff]
      %v286 = vld [vmem:[%s246 + $0x110] sm:$0xff]
      %v287 = vld [vmem:[%s246 + $0x118] sm:$0xff]
      %v288 = vld [vmem:[%s246 + $0x120] sm:$0xff]
      %v289 = vld [vmem:[%s246 + $0x128] sm:$0xff]
      %v290 = vld [vmem:[%s246 + $0x130] sm:$0xff]
      %v291 = vld [vmem:[%s246 + $0x138] sm:$0xff]
      %v292 = vld [vmem:[%s246 + $0x140] sm:$0xff]
      %v293 = vld [vmem:[%s246 + $0x148] sm:$0xff]
      %v294 = vld [vmem:[%s246 + $0x150] sm:$0xff]
      %v295 = vld [vmem:[%s246 + $0x158] sm:$0xff]
      %v296 = vld [vmem:[%s246 + $0x160] sm:$0xff]
      %v297 = vld [vmem:[%s2] sm:$0xf]
      %v298 = vld [vmem:[%s3] sm:$0x1]
      %v300 = vperm.slane %v298, 0
      %vm302 = vcmask 31744
      %v304 = vsel %vm302, %v252, 0
      %v307 = vsel %vm302, %v253, 0
      %v310 = vsel %vm302, %v254, 0
      %v313 = vsel %vm302, %v255, 0
      %v316 = vsel %vm302, %v256, 0
      %v319 = vsel %vm302, %v257, 0
      %v322 = vsel %vm302, %v258, 0
      %v325 = vsel %vm302, %v259, 0
      %v328 = vsel %vm302, %v260, 0
      %v331 = vsel %vm302, %v261, 0
      %v334 = vsel %vm302, %v262, 0
      %v337 = vsel %vm302, %v263, 0
      %v340 = vsel %vm302, %v264, 0
      %v343 = vsel %vm302, %v265, 0
      %v346 = vsel %vm302, %v266, 0
      %v349 = vsel %vm302, %v267, 0
      %v352 = vsel %vm302, %v268, 0
      %v355 = vsel %vm302, %v269, 0
      %v358 = vsel %vm302, %v270, 0
      %v361 = vsel %vm302, %v271, 0
      %v364 = vsel %vm302, %v272, 0
      %v367 = vsel %vm302, %v273, 0
      %v370 = vsel %vm302, %v274, 0
      %v373 = vsel %vm302, %v275, 0
      %v376 = vsel %vm302, %v276, 0
      %v379 = vsel %vm302, %v277, 0
      %v382 = vsel %vm302, %v278, 0
      %v385 = vsel %vm302, %v279, 0
      %v388 = vsel %vm302, %v280, 0
      %v391 = vsel %vm302, %v281, 0
      %v394 = vsel %vm302, %v282, 0
      %v397 = vsel %vm302, %v283, 0
      %v400 = vsel %vm302, %v284, 0
      %v403 = vsel %vm302, %v285, 0
      %v406 = vsel %vm302, %v286, 0
      %v409 = vsel %vm302, %v287, 0
      %v412 = vsel %vm302, %v288, 0
      %v415 = vsel %vm302, %v289, 0
      %v418 = vsel %vm302, %v290, 0
      %v421 = vsel %vm302, %v291, 0
      %v424 = vsel %vm302, %v292, 0
      %v427 = vsel %vm302, %v293, 0
      %v430 = vsel %vm302, %v294, 0
      %v433 = vsel %vm302, %v295, 0
      %v436 = vsel %vm302, %v296, 0
      %vm438 = vcmask 1043456
      %v440 = vsel %vm438, %v297, 0
      %442 = vmatpush.msra.mxu0 0.0
      %443 = vmatpush.msra.mxu0 0.0
      %444 = vmatpush.msra.mxu0 0.0
      %445 = vmatpush.msra.mxu0 0.0
      %446 = vmatpush.msra.mxu0 0.0
      %447 = vmatpush.msra.mxu0 0.0
      %448 = vmatpush.msra.mxu0 0.0
      %449 = vmatpush.msra.mxu0 0.0
      %450 = vmatpush.msra.mxu0 0.0
      %451 = vmatpush.msra.mxu0 0.0
      %452 = vmatpush.msra.mxu0 0.0
      %453 = vmatpush.msra.mxu0 0.0
      %454 = vmatpush.msra.mxu0 0.0
      %455 = vmatpush.msra.mxu0 0.0
      %456 = vmatpush.msra.mxu0 0.0
      %457 = vmatpush.msra.mxu0 %v440
      %458 = vmatmul.f32.gmra.mxu0 %v304
      %v459 = vpop.f32.mrf.mxu0
      %v460 = vadd.f32 %v300, %v459
      %461 = vmatmul.f32.gmra.mxu0 %v307
      %v462 = vpop.f32.mrf.mxu0
      %v463 = vadd.f32 %v300, %v462
      %464 = vmatmul.f32.gmra.mxu0 %v310
      %v465 = vpop.f32.mrf.mxu0
      %v466 = vadd.f32 %v300, %v465
      %467 = vmatmul.f32.gmra.mxu0 %v313
      %v468 = vpop.f32.mrf.mxu0
      %v469 = vadd.f32 %v300, %v468
      %470 = vmatmul.f32.gmra.mxu0 %v316
      %v471 = vpop.f32.mrf.mxu0
      %v472 = vadd.f32 %v300, %v471
      %473 = vmatmul.f32.gmra.mxu0 %v319
      %v474 = vpop.f32.mrf.mxu0
      %v475 = vadd.f32 %v300, %v474
      %476 = vmatmul.f32.gmra.mxu0 %v322
      %v477 = vpop.f32.mrf.mxu0
      %v478 = vadd.f32 %v300, %v477
      %479 = vmatmul.f32.gmra.mxu0 %v325
      %v480 = vpop.f32.mrf.mxu0
      %v481 = vadd.f32 %v300, %v480
      %482 = vmatmul.f32.gmra.mxu0 %v328
      %v483 = vpop.f32.mrf.mxu0
      %v484 = vadd.f32 %v300, %v483
      %485 = vmatmul.f32.gmra.mxu0 %v331
      %v486 = vpop.f32.mrf.mxu0
      %v487 = vadd.f32 %v300, %v486
      %488 = vmatmul.f32.gmra.mxu0 %v334
      %v489 = vpop.f32.mrf.mxu0
      %v490 = vadd.f32 %v300, %v489
      %491 = vmatmul.f32.gmra.mxu0 %v337
      %v492 = vpop.f32.mrf.mxu0
      %v493 = vadd.f32 %v300, %v492
      %494 = vmatmul.f32.gmra.mxu0 %v340
      %v495 = vpop.f32.mrf.mxu0
      %v496 = vadd.f32 %v300, %v495
      %497 = vmatmul.f32.gmra.mxu0 %v343
      %v498 = vpop.f32.mrf.mxu0
      %v499 = vadd.f32 %v300, %v498
      %500 = vmatmul.f32.gmra.mxu0 %v346
      %v501 = vpop.f32.mrf.mxu0
      %v502 = vadd.f32 %v300, %v501
      %503 = vmatmul.f32.gmra.mxu0 %v349
      %v504 = vpop.f32.mrf.mxu0
      %v505 = vadd.f32 %v300, %v504
      %506 = vmatmul.f32.gmra.mxu0 %v352
      %v507 = vpop.f32.mrf.mxu0
      %v508 = vadd.f32 %v300, %v507
      %509 = vmatmul.f32.gmra.mxu0 %v355
      %v510 = vpop.f32.mrf.mxu0
      %v511 = vadd.f32 %v300, %v510
      %512 = vmatmul.f32.gmra.mxu0 %v358
      %v513 = vpop.f32.mrf.mxu0
      %v514 = vadd.f32 %v300, %v513
      %515 = vmatmul.f32.gmra.mxu0 %v361
      %v516 = vpop.f32.mrf.mxu0
      %v517 = vadd.f32 %v300, %v516
      %518 = vmatmul.f32.gmra.mxu0 %v364
      %v519 = vpop.f32.mrf.mxu0
      %v520 = vadd.f32 %v300, %v519
      %521 = vmatmul.f32.gmra.mxu0 %v367
      %v522 = vpop.f32.mrf.mxu0
      %v523 = vadd.f32 %v300, %v522
      %524 = vmatmul.f32.gmra.mxu0 %v370
      %v525 = vpop.f32.mrf.mxu0
      %v526 = vadd.f32 %v300, %v525
      %527 = vmatmul.f32.gmra.mxu0 %v373
      %v528 = vpop.f32.mrf.mxu0
      %v529 = vadd.f32 %v300, %v528
      %530 = vmatmul.f32.gmra.mxu0 %v376
      %v531 = vpop.f32.mrf.mxu0
      %v532 = vadd.f32 %v300, %v531
      %533 = vmatmul.f32.gmra.mxu0 %v379
      %v534 = vpop.f32.mrf.mxu0
      %v535 = vadd.f32 %v300, %v534
      %536 = vmatmul.f32.gmra.mxu0 %v382
      %v537 = vpop.f32.mrf.mxu0
      %v538 = vadd.f32 %v300, %v537
      %539 = vmatmul.f32.gmra.mxu0 %v385
      %v540 = vpop.f32.mrf.mxu0
      %v541 = vadd.f32 %v300, %v540
      %542 = vmatmul.f32.gmra.mxu0 %v388
      %v543 = vpop.f32.mrf.mxu0
      %v544 = vadd.f32 %v300, %v543
      %545 = vmatmul.f32.gmra.mxu0 %v391
      %v546 = vpop.f32.mrf.mxu0
      %v547 = vadd.f32 %v300, %v546
      %548 = vmatmul.f32.gmra.mxu0 %v394
      %v549 = vpop.f32.mrf.mxu0
      %v550 = vadd.f32 %v300, %v549
      %551 = vmatmul.f32.gmra.mxu0 %v397
      %v552 = vpop.f32.mrf.mxu0
      %v553 = vadd.f32 %v300, %v552
      %554 = vmatmul.f32.gmra.mxu0 %v400
      %v555 = vpop.f32.mrf.mxu0
      %v556 = vadd.f32 %v300, %v555
      %557 = vmatmul.f32.gmra.mxu0 %v403
      %v558 = vpop.f32.mrf.mxu0
      %v559 = vadd.f32 %v300, %v558
      %560 = vmatmul.f32.gmra.mxu0 %v406
      %v561 = vpop.f32.mrf.mxu0
      %v562 = vadd.f32 %v300, %v561
      %563 = vmatmul.f32.gmra.mxu0 %v409
      %v564 = vpop.f32.mrf.mxu0
      %v565 = vadd.f32 %v300, %v564
      %566 = vmatmul.f32.gmra.mxu0 %v412
      %v567 = vpop.f32.mrf.mxu0
      %v568 = vadd.f32 %v300, %v567
      %569 = vmatmul.f32.gmra.mxu0 %v415
      %v570 = vpop.f32.mrf.mxu0
      %v571 = vadd.f32 %v300, %v570
      %572 = vmatmul.f32.gmra.mxu0 %v418
      %v573 = vpop.f32.mrf.mxu0
      %v574 = vadd.f32 %v300, %v573
      %575 = vmatmul.f32.gmra.mxu0 %v421
      %v576 = vpop.f32.mrf.mxu0
      %v577 = vadd.f32 %v300, %v576
      %578 = vmatmul.f32.gmra.mxu0 %v424
      %v579 = vpop.f32.mrf.mxu0
      %v580 = vadd.f32 %v300, %v579
      %581 = vmatmul.f32.gmra.mxu0 %v427
      %v582 = vpop.f32.mrf.mxu0
      %v583 = vadd.f32 %v300, %v582
      %584 = vmatmul.f32.gmra.mxu0 %v430
      %v585 = vpop.f32.mrf.mxu0
      %v586 = vadd.f32 %v300, %v585
      %587 = vmatmul.f32.gmra.mxu0 %v433
      %v588 = vpop.f32.mrf.mxu0
      %v589 = vadd.f32 %v300, %v588
      %590 = vmatmul.f32.gmra.mxu0 %v436
      %v591 = vpop.f32.mrf.mxu0
      %v592 = vadd.f32 %v300, %v591
      %593 = vdwg.mxu0
      %v594 = vmax.f32 %v460, 0.0
      %v595 = vmax.f32 %v463, 0.0
      %v596 = vmax.f32 %v466, 0.0
      %v597 = vmax.f32 %v469, 0.0
      %v598 = vmax.f32 %v472, 0.0
      %v599 = vmax.f32 %v475, 0.0
      %v600 = vmax.f32 %v478, 0.0
      %v601 = vmax.f32 %v481, 0.0
      %v602 = vmax.f32 %v484, 0.0
      %v603 = vmax.f32 %v487, 0.0
      %v604 = vmax.f32 %v490, 0.0
      %v605 = vmax.f32 %v493, 0.0
      %v606 = vmax.f32 %v496, 0.0
      %v607 = vmax.f32 %v499, 0.0
      %v608 = vmax.f32 %v502, 0.0
      %v609 = vmax.f32 %v505, 0.0
      %v610 = vmax.f32 %v508, 0.0
      %v611 = vmax.f32 %v511, 0.0
      %v612 = vmax.f32 %v514, 0.0
      %v613 = vmax.f32 %v517, 0.0
      %v614 = vmax.f32 %v520, 0.0
      %v615 = vmax.f32 %v523, 0.0
      %v616 = vmax.f32 %v526, 0.0
      %v617 = vmax.f32 %v529, 0.0
      %v618 = vmax.f32 %v532, 0.0
      %v619 = vmax.f32 %v535, 0.0
      %v620 = vmax.f32 %v538, 0.0
      %v621 = vmax.f32 %v541, 0.0
      %v622 = vmax.f32 %v544, 0.0
      %v623 = vmax.f32 %v547, 0.0
      %v624 = vmax.f32 %v550, 0.0
      %v625 = vmax.f32 %v553, 0.0
      %v626 = vmax.f32 %v556, 0.0
      %v627 = vmax.f32 %v559, 0.0
      %v628 = vmax.f32 %v562, 0.0
      %v629 = vmax.f32 %v565, 0.0
      %v630 = vmax.f32 %v568, 0.0
      %v631 = vmax.f32 %v571, 0.0
      %v632 = vmax.f32 %v574, 0.0
      %v633 = vmax.f32 %v577, 0.0
      %v634 = vmax.f32 %v580, 0.0
      %v635 = vmax.f32 %v583, 0.0
      %v636 = vmax.f32 %v586, 0.0
      %v637 = vmax.f32 %v589, 0.0
      %v638 = vmax.f32 %v592, 0.0
      %v639 = vld [vmem:[%s1] sm:$0xff]
      %v640 = vld [vmem:[%s1 + $0x8] sm:$0xff]
      %v641 = vld [vmem:[%s1 + $0x10] sm:$0xff]
      %v642 = vld [vmem:[%s1 + $0x18] sm:$0xff]
      %v643 = vld [vmem:[%s1 + $0x20] sm:$0xff]
      %v644 = vld [vmem:[%s1 + $0x28] sm:$0xff]
      %v645 = vld [vmem:[%s1 + $0x30] sm:$0xff]
      %v646 = vld [vmem:[%s1 + $0x38] sm:$0xff]
      %v647 = vld [vmem:[%s1 + $0x40] sm:$0xff]
      %v648 = vld [vmem:[%s1 + $0x48] sm:$0xff]
      %v649 = vld [vmem:[%s1 + $0x50] sm:$0xff]
      %v650 = vld [vmem:[%s1 + $0x58] sm:$0xff]
      %v651 = vld [vmem:[%s1 + $0x60] sm:$0xff]
      %v652 = vld [vmem:[%s1 + $0x68] sm:$0xff]
      %v653 = vld [vmem:[%s1 + $0x70] sm:$0xff]
      %v654 = vld [vmem:[%s1 + $0x78] sm:$0xff]
      %v655 = vld [vmem:[%s1 + $0x80] sm:$0xff]
      %v656 = vld [vmem:[%s1 + $0x88] sm:$0xff]
      %v657 = vld [vmem:[%s1 + $0x90] sm:$0xff]
      %v658 = vld [vmem:[%s1 + $0x98] sm:$0xff]
      %v659 = vld [vmem:[%s1 + $0xa0] sm:$0xff]
      %v660 = vld [vmem:[%s1 + $0xa8] sm:$0xff]
      %v661 = vld [vmem:[%s1 + $0xb0] sm:$0xff]
      %v662 = vld [vmem:[%s1 + $0xb8] sm:$0xff]
      %v663 = vld [vmem:[%s1 + $0xc0] sm:$0xff]
      %v664 = vld [vmem:[%s1 + $0xc8] sm:$0xff]
      %v665 = vld [vmem:[%s1 + $0xd0] sm:$0xff]
      %v666 = vld [vmem:[%s1 + $0xd8] sm:$0xff]
      %v667 = vld [vmem:[%s1 + $0xe0] sm:$0xff]
      %v668 = vld [vmem:[%s1 + $0xe8] sm:$0xff]
      %v669 = vld [vmem:[%s1 + $0xf0] sm:$0xff]
      %v670 = vld [vmem:[%s1 + $0xf8] sm:$0xff]
      %v671 = vld [vmem:[%s1 + $0x100] sm:$0xff]
      %v672 = vld [vmem:[%s1 + $0x108] sm:$0xff]
      %v673 = vld [vmem:[%s1 + $0x110] sm:$0xff]
      %v674 = vld [vmem:[%s1 + $0x118] sm:$0xff]
      %v675 = vld [vmem:[%s1 + $0x120] sm:$0xff]
      %v676 = vld [vmem:[%s1 + $0x128] sm:$0xff]
      %v677 = vld [vmem:[%s1 + $0x130] sm:$0xff]
      %v678 = vld [vmem:[%s1 + $0x138] sm:$0xff]
      %v679 = vld [vmem:[%s1 + $0x140] sm:$0xff]
      %v680 = vld [vmem:[%s1 + $0x148] sm:$0xff]
      %v681 = vld [vmem:[%s1 + $0x150] sm:$0xff]
      %v682 = vld [vmem:[%s1 + $0x158] sm:$0xff]
      %v683 = vld [vmem:[%s1 + $0x160] sm:$0xff]
      %685 = vset.pattern.permute.xlu0 0
      %686 = vperm.xlu0 %685, %v639
      %v687 = vpop.permute.xlu0 %686
      %690 = vset.pattern.permute.xlu0 0
      %691 = vperm.xlu0 %690, %v640
      %v692 = vpop.permute.xlu0 %691
      %695 = vset.pattern.permute.xlu0 0
      %696 = vperm.xlu0 %695, %v641
      %v697 = vpop.permute.xlu0 %696
      %700 = vset.pattern.permute.xlu0 0
      %701 = vperm.xlu0 %700, %v642
      %v702 = vpop.permute.xlu0 %701
      %705 = vset.pattern.permute.xlu0 0
      %706 = vperm.xlu0 %705, %v643
      %v707 = vpop.permute.xlu0 %706
      %710 = vset.pattern.permute.xlu0 0
      %711 = vperm.xlu0 %710, %v644
      %v712 = vpop.permute.xlu0 %711
      %715 = vset.pattern.permute.xlu0 0
      %716 = vperm.xlu0 %715, %v645
      %v717 = vpop.permute.xlu0 %716
      %720 = vset.pattern.permute.xlu0 0
      %721 = vperm.xlu0 %720, %v646
      %v722 = vpop.permute.xlu0 %721
      %725 = vset.pattern.permute.xlu0 0
      %726 = vperm.xlu0 %725, %v647
      %v727 = vpop.permute.xlu0 %726
      %730 = vset.pattern.permute.xlu0 0
      %731 = vperm.xlu0 %730, %v648
      %v732 = vpop.permute.xlu0 %731
      %735 = vset.pattern.permute.xlu0 0
      %736 = vperm.xlu0 %735, %v649
      %v737 = vpop.permute.xlu0 %736
      %740 = vset.pattern.permute.xlu0 0
      %741 = vperm.xlu0 %740, %v650
      %v742 = vpop.permute.xlu0 %741
      %745 = vset.pattern.permute.xlu0 0
      %746 = vperm.xlu0 %745, %v651
      %v747 = vpop.permute.xlu0 %746
      %750 = vset.pattern.permute.xlu0 0
      %751 = vperm.xlu0 %750, %v652
      %v752 = vpop.permute.xlu0 %751
      %755 = vset.pattern.permute.xlu0 0
      %756 = vperm.xlu0 %755, %v653
      %v757 = vpop.permute.xlu0 %756
      %760 = vset.pattern.permute.xlu0 0
      %761 = vperm.xlu0 %760, %v654
      %v762 = vpop.permute.xlu0 %761
      %765 = vset.pattern.permute.xlu0 0
      %766 = vperm.xlu0 %765, %v655
      %v767 = vpop.permute.xlu0 %766
      %770 = vset.pattern.permute.xlu0 0
      %771 = vperm.xlu0 %770, %v656
      %v772 = vpop.permute.xlu0 %771
      %775 = vset.pattern.permute.xlu0 0
      %776 = vperm.xlu0 %775, %v657
      %v777 = vpop.permute.xlu0 %776
      %780 = vset.pattern.permute.xlu0 0
      %781 = vperm.xlu0 %780, %v658
      %v782 = vpop.permute.xlu0 %781
      %785 = vset.pattern.permute.xlu0 0
      %786 = vperm.xlu0 %785, %v659
      %v787 = vpop.permute.xlu0 %786
      %790 = vset.pattern.permute.xlu0 0
      %791 = vperm.xlu0 %790, %v660
      %v792 = vpop.permute.xlu0 %791
      %795 = vset.pattern.permute.xlu0 0
      %796 = vperm.xlu0 %795, %v661
      %v797 = vpop.permute.xlu0 %796
      %800 = vset.pattern.permute.xlu0 0
      %801 = vperm.xlu0 %800, %v662
      %v802 = vpop.permute.xlu0 %801
      %805 = vset.pattern.permute.xlu0 0
      %806 = vperm.xlu0 %805, %v663
      %v807 = vpop.permute.xlu0 %806
      %810 = vset.pattern.permute.xlu0 0
      %811 = vperm.xlu0 %810, %v664
      %v812 = vpop.permute.xlu0 %811
      %815 = vset.pattern.permute.xlu0 0
      %816 = vperm.xlu0 %815, %v665
      %v817 = vpop.permute.xlu0 %816
      %820 = vset.pattern.permute.xlu0 0
      %821 = vperm.xlu0 %820, %v666
      %v822 = vpop.permute.xlu0 %821
      %825 = vset.pattern.permute.xlu0 0
      %826 = vperm.xlu0 %825, %v667
      %v827 = vpop.permute.xlu0 %826
      %830 = vset.pattern.permute.xlu0 0
      %831 = vperm.xlu0 %830, %v668
      %v832 = vpop.permute.xlu0 %831
      %835 = vset.pattern.permute.xlu0 0
      %836 = vperm.xlu0 %835, %v669
      %v837 = vpop.permute.xlu0 %836
      %840 = vset.pattern.permute.xlu0 0
      %841 = vperm.xlu0 %840, %v670
      %v842 = vpop.permute.xlu0 %841
      %845 = vset.pattern.permute.xlu0 0
      %846 = vperm.xlu0 %845, %v671
      %v847 = vpop.permute.xlu0 %846
      %850 = vset.pattern.permute.xlu0 0
      %851 = vperm.xlu0 %850, %v672
      %v852 = vpop.permute.xlu0 %851
      %855 = vset.pattern.permute.xlu0 0
      %856 = vperm.xlu0 %855, %v673
      %v857 = vpop.permute.xlu0 %856
      %860 = vset.pattern.permute.xlu0 0
      %861 = vperm.xlu0 %860, %v674
      %v862 = vpop.permute.xlu0 %861
      %865 = vset.pattern.permute.xlu0 0
      %866 = vperm.xlu0 %865, %v675
      %v867 = vpop.permute.xlu0 %866
      %870 = vset.pattern.permute.xlu0 0
      %871 = vperm.xlu0 %870, %v676
      %v872 = vpop.permute.xlu0 %871
      %875 = vset.pattern.permute.xlu0 0
      %876 = vperm.xlu0 %875, %v677
      %v877 = vpop.permute.xlu0 %876
      %880 = vset.pattern.permute.xlu0 0
      %881 = vperm.xlu0 %880, %v678
      %v882 = vpop.permute.xlu0 %881
      %885 = vset.pattern.permute.xlu0 0
      %886 = vperm.xlu0 %885, %v679
      %v887 = vpop.permute.xlu0 %886
      %890 = vset.pattern.permute.xlu0 0
      %891 = vperm.xlu0 %890, %v680
      %v892 = vpop.permute.xlu0 %891
      %895 = vset.pattern.permute.xlu0 0
      %896 = vperm.xlu0 %895, %v681
      %v897 = vpop.permute.xlu0 %896
      %900 = vset.pattern.permute.xlu0 0
      %901 = vperm.xlu0 %900, %v682
      %v902 = vpop.permute.xlu0 %901
      %905 = vset.pattern.permute.xlu0 0
      %906 = vperm.xlu0 %905, %v683
      %v907 = vpop.permute.xlu0 %906
      %v909 = vmul.f32 %v594, %v687
      %v910 = vmul.f32 %v595, %v692
      %v911 = vmul.f32 %v596, %v697
      %v912 = vmul.f32 %v597, %v702
      %v913 = vmul.f32 %v598, %v707
      %v914 = vmul.f32 %v599, %v712
      %v915 = vmul.f32 %v600, %v717
      %v916 = vmul.f32 %v601, %v722
      %v917 = vmul.f32 %v602, %v727
      %v918 = vmul.f32 %v603, %v732
      %v919 = vmul.f32 %v604, %v737
      %v920 = vmul.f32 %v605, %v742
      %v921 = vmul.f32 %v606, %v747
      %v922 = vmul.f32 %v607, %v752
      %v923 = vmul.f32 %v608, %v757
      %v924 = vmul.f32 %v609, %v762
      %v925 = vmul.f32 %v610, %v767
      %v926 = vmul.f32 %v611, %v772
      %v927 = vmul.f32 %v612, %v777
      %v928 = vmul.f32 %v613, %v782
      %v929 = vmul.f32 %v614, %v787
      %v930 = vmul.f32 %v615, %v792
      %v931 = vmul.f32 %v616, %v797
      %v932 = vmul.f32 %v617, %v802
      %v933 = vmul.f32 %v618, %v807
      %v934 = vmul.f32 %v619, %v812
      %v935 = vmul.f32 %v620, %v817
      %v936 = vmul.f32 %v621, %v822
      %v937 = vmul.f32 %v622, %v827
      %v938 = vmul.f32 %v623, %v832
      %v939 = vmul.f32 %v624, %v837
      %v940 = vmul.f32 %v625, %v842
      %v941 = vmul.f32 %v626, %v847
      %v942 = vmul.f32 %v627, %v852
      %v943 = vmul.f32 %v628, %v857
      %v944 = vmul.f32 %v629, %v862
      %v945 = vmul.f32 %v630, %v867
      %v946 = vmul.f32 %v631, %v872
      %v947 = vmul.f32 %v632, %v877
      %v948 = vmul.f32 %v633, %v882
      %v949 = vmul.f32 %v634, %v887
      %v950 = vmul.f32 %v635, %v892
      %v951 = vmul.f32 %v636, %v897
      %v952 = vmul.f32 %v637, %v902
      %v953 = vmul.f32 %v638, %v907
      %954 = vst [vmem:[#allocation2] sm:$0xff] %v909
      %955 = vst [vmem:[#allocation2 + $0x8] sm:$0xff] %v910
      %956 = vst [vmem:[#allocation2 + $0x10] sm:$0xff] %v911
      %957 = vst [vmem:[#allocation2 + $0x18] sm:$0xff] %v912
      %958 = vst [vmem:[#allocation2 + $0x20] sm:$0xff] %v913
      %959 = vst [vmem:[#allocation2 + $0x28] sm:$0xff] %v914
      %960 = vst [vmem:[#allocation2 + $0x30] sm:$0xff] %v915
      %961 = vst [vmem:[#allocation2 + $0x38] sm:$0xff] %v916
      %962 = vst [vmem:[#allocation2 + $0x40] sm:$0xff] %v917
      %963 = vst [vmem:[#allocation2 + $0x48] sm:$0xff] %v918
      %964 = vst [vmem:[#allocation2 + $0x50] sm:$0xff] %v919
      %965 = vst [vmem:[#allocation2 + $0x58] sm:$0xff] %v920
      %966 = vst [vmem:[#allocation2 + $0x60] sm:$0xff] %v921
      %967 = vst [vmem:[#allocation2 + $0x68] sm:$0xff] %v922
      %968 = vst [vmem:[#allocation2 + $0x70] sm:$0xff] %v923
      %969 = vst [vmem:[#allocation2 + $0x78] sm:$0xff] %v924
      %970 = vst [vmem:[#allocation2 + $0x80] sm:$0xff] %v925
      %971 = vst [vmem:[#allocation2 + $0x88] sm:$0xff] %v926
      %972 = vst [vmem:[#allocation2 + $0x90] sm:$0xff] %v927
      %973 = vst [vmem:[#allocation2 + $0x98] sm:$0xff] %v928
      %974 = vst [vmem:[#allocation2 + $0xa0] sm:$0xff] %v929
      %975 = vst [vmem:[#allocation2 + $0xa8] sm:$0xff] %v930
      %976 = vst [vmem:[#allocation2 + $0xb0] sm:$0xff] %v931
      %977 = vst [vmem:[#allocation2 + $0xb8] sm:$0xff] %v932
      %978 = vst [vmem:[#allocation2 + $0xc0] sm:$0xff] %v933
      %979 = vst [vmem:[#allocation2 + $0xc8] sm:$0xff] %v934
      %980 = vst [vmem:[#allocation2 + $0xd0] sm:$0xff] %v935
      %981 = vst [vmem:[#allocation2 + $0xd8] sm:$0xff] %v936
      %982 = vst [vmem:[#allocation2 + $0xe0] sm:$0xff] %v937
      %983 = vst [vmem:[#allocation2 + $0xe8] sm:$0xff] %v938
      %984 = vst [vmem:[#allocation2 + $0xf0] sm:$0xff] %v939
      %985 = vst [vmem:[#allocation2 + $0xf8] sm:$0xff] %v940
      %986 = vst [vmem:[#allocation2 + $0x100] sm:$0xff] %v941
      %987 = vst [vmem:[#allocation2 + $0x108] sm:$0xff] %v942
      %988 = vst [vmem:[#allocation2 + $0x110] sm:$0xff] %v943
      %989 = vst [vmem:[#allocation2 + $0x118] sm:$0xff] %v944
      %990 = vst [vmem:[#allocation2 + $0x120] sm:$0xff] %v945
      %991 = vst [vmem:[#allocation2 + $0x128] sm:$0xff] %v946
      %992 = vst [vmem:[#allocation2 + $0x130] sm:$0xff] %v947
      %993 = vst [vmem:[#allocation2 + $0x138] sm:$0xff] %v948
      %994 = vst [vmem:[#allocation2 + $0x140] sm:$0xff] %v949
      %995 = vst [vmem:[#allocation2 + $0x148] sm:$0xff] %v950
      %996 = vst [vmem:[#allocation2 + $0x150] sm:$0xff] %v951
      %997 = vst [vmem:[#allocation2 + $0x158] sm:$0xff] %v952
      %998 = vst [vmem:[#allocation2 + $0x160] sm:$0xff] %v953
      %v999 = vld [vmem:[#allocation2] sm:$0xff]
      %v1000 = vld [vmem:[#allocation2 + $0x8] sm:$0xff]
      %v1001 = vld [vmem:[#allocation2 + $0x10] sm:$0xff]
      %v1002 = vld [vmem:[#allocation2 + $0x18] sm:$0xff]
      %v1003 = vld [vmem:[#allocation2 + $0x20] sm:$0xff]
      %v1004 = vld [vmem:[#allocation2 + $0x28] sm:$0xff]
      %v1005 = vld [vmem:[#allocation2 + $0x30] sm:$0xff]
      %v1006 = vld [vmem:[#allocation2 + $0x38] sm:$0xff]
      %v1007 = vld [vmem:[#allocation2 + $0x40] sm:$0xff]
      %v1008 = vld [vmem:[#allocation2 + $0x48] sm:$0xff]
      %v1009 = vld [vmem:[#allocation2 + $0x50] sm:$0xff]
      %v1010 = vld [vmem:[#allocation2 + $0x58] sm:$0xff]
      %v1011 = vld [vmem:[#allocation2 + $0x60] sm:$0xff]
      %v1012 = vld [vmem:[#allocation2 + $0x68] sm:$0xff]
      %v1013 = vld [vmem:[#allocation2 + $0x70] sm:$0xff]
      %v1014 = vld [vmem:[#allocation2 + $0x78] sm:$0xff]
      %v1015 = vld [vmem:[#allocation2 + $0x80] sm:$0xff]
      %v1016 = vld [vmem:[#allocation2 + $0x88] sm:$0xff]
      %v1017 = vld [vmem:[#allocation2 + $0x90] sm:$0xff]
      %v1018 = vld [vmem:[#allocation2 + $0x98] sm:$0xff]
      %v1019 = vld [vmem:[#allocation2 + $0xa0] sm:$0xff]
      %v1020 = vld [vmem:[#allocation2 + $0xa8] sm:$0xff]
      %v1021 = vld [vmem:[#allocation2 + $0xb0] sm:$0xff]
      %v1022 = vld [vmem:[#allocation2 + $0xb8] sm:$0xff]
      %v1023 = vld [vmem:[#allocation2 + $0xc0] sm:$0xff]
      %v1024 = vld [vmem:[#allocation2 + $0xc8] sm:$0xff]
      %v1025 = vld [vmem:[#allocation2 + $0xd0] sm:$0xff]
      %v1026 = vld [vmem:[#allocation2 + $0xd8] sm:$0xff]
      %v1027 = vld [vmem:[#allocation2 + $0xe0] sm:$0xff]
      %v1028 = vld [vmem:[#allocation2 + $0xe8] sm:$0xff]
      %v1029 = vld [vmem:[#allocation2 + $0xf0] sm:$0xff]
      %v1030 = vld [vmem:[#allocation2 + $0xf8] sm:$0xff]
      %v1031 = vld [vmem:[#allocation2 + $0x100] sm:$0xff]
      %v1032 = vld [vmem:[#allocation2 + $0x108] sm:$0xff]
      %v1033 = vld [vmem:[#allocation2 + $0x110] sm:$0xff]
      %v1034 = vld [vmem:[#allocation2 + $0x118] sm:$0xff]
      %v1035 = vld [vmem:[%s4] sm:$0xff]
      %v1036 = vld [vmem:[%s4 + $0x8] sm:$0xff]
      %v1037 = vld [vmem:[%s4 + $0x10] sm:$0xff]
      %v1038 = vld [vmem:[%s4 + $0x18] sm:$0xff]
      %v1039 = vld [vmem:[%s4 + $0x20] sm:$0xff]
      %v1040 = vld [vmem:[%s4 + $0x28] sm:$0xff]
      %v1041 = vld [vmem:[%s4 + $0x30] sm:$0xff]
      %v1042 = vld [vmem:[%s4 + $0x38] sm:$0xff]
      %v1043 = vld [vmem:[%s4 + $0x40] sm:$0xff]
      %v1044 = vld [vmem:[%s4 + $0x48] sm:$0xff]
      %v1045 = vld [vmem:[%s4 + $0x50] sm:$0xff]
      %v1046 = vld [vmem:[%s4 + $0x58] sm:$0xff]
      %v1047 = vld [vmem:[%s4 + $0x60] sm:$0xff]
      %v1048 = vld [vmem:[%s4 + $0x68] sm:$0xff]
      %v1049 = vld [vmem:[%s4 + $0x70] sm:$0xff]
      %v1050 = vld [vmem:[%s4 + $0x78] sm:$0xff]
      %v1051 = vld [vmem:[#allocation2 + $0x1] sm:$0xff]
      %v1052 = vld [vmem:[#allocation2 + $0x9] sm:$0xff]
      %v1053 = vld [vmem:[#allocation2 + $0x11] sm:$0xff]
      %v1054 = vld [vmem:[#allocation2 + $0x19] sm:$0xff]
      %v1055 = vld [vmem:[#allocation2 + $0x21] sm:$0xff]
      %v1056 = vld [vmem:[#allocation2 + $0x29] sm:$0xff]
      %v1057 = vld [vmem:[#allocation2 + $0x31] sm:$0xff]
      %v1058 = vld [vmem:[#allocation2 + $0x39] sm:$0xff]
      %v1059 = vld [vmem:[#allocation2 + $0x41] sm:$0xff]
      %v1060 = vld [vmem:[#allocation2 + $0x49] sm:$0xff]
      %v1061 = vld [vmem:[#allocation2 + $0x51] sm:$0xff]
      %v1062 = vld [vmem:[#allocation2 + $0x59] sm:$0xff]
      %v1063 = vld [vmem:[#allocation2 + $0x61] sm:$0xff]
      %v1064 = vld [vmem:[#allocation2 + $0x69] sm:$0xff]
      %v1065 = vld [vmem:[#allocation2 + $0x71] sm:$0xff]
      %v1066 = vld [vmem:[#allocation2 + $0x79] sm:$0xff]
      %v1067 = vld [vmem:[#allocation2 + $0x81] sm:$0xff]
      %v1068 = vld [vmem:[#allocation2 + $0x89] sm:$0xff]
      %v1069 = vld [vmem:[#allocation2 + $0x91] sm:$0xff]
      %v1070 = vld [vmem:[#allocation2 + $0x99] sm:$0xff]
      %v1071 = vld [vmem:[#allocation2 + $0xa1] sm:$0xff]
      %v1072 = vld [vmem:[#allocation2 + $0xa9] sm:$0xff]
      %v1073 = vld [vmem:[#allocation2 + $0xb1] sm:$0xff]
      %v1074 = vld [vmem:[#allocation2 + $0xb9] sm:$0xff]
      %v1075 = vld [vmem:[#allocation2 + $0xc1] sm:$0xff]
      %v1076 = vld [vmem:[#allocation2 + $0xc9] sm:$0xff]
      %v1077 = vld [vmem:[#allocation2 + $0xd1] sm:$0xff]
      %v1078 = vld [vmem:[#allocation2 + $0xd9] sm:$0xff]
      %v1079 = vld [vmem:[#allocation2 + $0xe1] sm:$0xff]
      %v1080 = vld [vmem:[#allocation2 + $0xe9] sm:$0xff]
      %v1081 = vld [vmem:[#allocation2 + $0xf1] sm:$0xff]
      %v1082 = vld [vmem:[#allocation2 + $0xf9] sm:$0xff]
      %v1083 = vld [vmem:[#allocation2 + $0x101] sm:$0xff]
      %v1084 = vld [vmem:[#allocation2 + $0x109] sm:$0xff]
      %v1085 = vld [vmem:[#allocation2 + $0x111] sm:$0xff]
      %v1086 = vld [vmem:[#allocation2 + $0x119] sm:$0xff]
      %s1087 = scalar_lea.vmem %s4, 128
      %v1088 = vld [vmem:[%s1087] sm:$0xff]
      %v1089 = vld [vmem:[%s1087 + $0x8] sm:$0xff]
      %v1090 = vld [vmem:[%s1087 + $0x10] sm:$0xff]
      %v1091 = vld [vmem:[%s1087 + $0x18] sm:$0xff]
      %v1092 = vld [vmem:[%s1087 + $0x20] sm:$0xff]
      %v1093 = vld [vmem:[%s1087 + $0x28] sm:$0xff]
      %v1094 = vld [vmem:[%s1087 + $0x30] sm:$0xff]
      %v1095 = vld [vmem:[%s1087 + $0x38] sm:$0xff]
      %v1096 = vld [vmem:[%s1087 + $0x40] sm:$0xff]
      %v1097 = vld [vmem:[%s1087 + $0x48] sm:$0xff]
      %v1098 = vld [vmem:[%s1087 + $0x50] sm:$0xff]
      %v1099 = vld [vmem:[%s1087 + $0x58] sm:$0xff]
      %v1100 = vld [vmem:[%s1087 + $0x60] sm:$0xff]
      %v1101 = vld [vmem:[%s1087 + $0x68] sm:$0xff]
      %v1102 = vld [vmem:[%s1087 + $0x70] sm:$0xff]
      %v1103 = vld [vmem:[%s1087 + $0x78] sm:$0xff]
      %1104 = vmatpush.msra.mxu0 %v1103
      %1105 = vmatpush.msra.mxu0 %v1102
      %1106 = vmatpush.msra.mxu0 %v1101
      %1107 = vmatpush.msra.mxu0 %v1100
      %1108 = vmatpush.msra.mxu0 %v1099
      %1109 = vmatpush.msra.mxu0 %v1098
      %1110 = vmatpush.msra.mxu0 %v1097
      %1111 = vmatpush.msra.mxu0 %v1096
      %1112 = vmatpush.msra.mxu0 %v1095
      %1113 = vmatpush.msra.mxu0 %v1094
      %1114 = vmatpush.msra.mxu0 %v1093
      %1115 = vmatpush.msra.mxu0 %v1092
      %1116 = vmatpush.msra.mxu0 %v1091
      %1117 = vmatpush.msra.mxu0 %v1090
      %1118 = vmatpush.msra.mxu0 %v1089
      %1119 = vmatpush.msra.mxu0 %v1088
      %1120 = vmatmul.f32.gmra.mxu0 %v1051
      %v1121 = vpop.f32.mrf.mxu0
      %v1122 = vadd.f32 0.0, %v1121
      %1123 = vmatmul.f32.gmra.mxu0 %v1052
      %v1124 = vpop.f32.mrf.mxu0
      %v1125 = vadd.f32 0.0, %v1124
      %1126 = vmatmul.f32.gmra.mxu0 %v1053
      %v1127 = vpop.f32.mrf.mxu0
      %v1128 = vadd.f32 0.0, %v1127
      %1129 = vmatmul.f32.gmra.mxu0 %v1054
      %v1130 = vpop.f32.mrf.mxu0
      %v1131 = vadd.f32 0.0, %v1130
      %1132 = vmatmul.f32.gmra.mxu0 %v1055
      %v1133 = vpop.f32.mrf.mxu0
      %v1134 = vadd.f32 0.0, %v1133
      %1135 = vmatmul.f32.gmra.mxu0 %v1056
      %v1136 = vpop.f32.mrf.mxu0
      %v1137 = vadd.f32 0.0, %v1136
      %1138 = vmatmul.f32.gmra.mxu0 %v1057
      %v1139 = vpop.f32.mrf.mxu0
      %v1140 = vadd.f32 0.0, %v1139
      %1141 = vmatmul.f32.gmra.mxu0 %v1058
      %v1142 = vpop.f32.mrf.mxu0
      %v1143 = vadd.f32 0.0, %v1142
      %1144 = vmatmul.f32.gmra.mxu0 %v1059
      %v1145 = vpop.f32.mrf.mxu0
      %v1146 = vadd.f32 0.0, %v1145
      %1147 = vmatmul.f32.gmra.mxu0 %v1060
      %v1148 = vpop.f32.mrf.mxu0
      %v1149 = vadd.f32 0.0, %v1148
      %1150 = vmatmul.f32.gmra.mxu0 %v1061
      %v1151 = vpop.f32.mrf.mxu0
      %v1152 = vadd.f32 0.0, %v1151
      %1153 = vmatmul.f32.gmra.mxu0 %v1062
      %v1154 = vpop.f32.mrf.mxu0
      %v1155 = vadd.f32 0.0, %v1154
      %1156 = vmatmul.f32.gmra.mxu0 %v1063
      %v1157 = vpop.f32.mrf.mxu0
      %v1158 = vadd.f32 0.0, %v1157
      %1159 = vmatmul.f32.gmra.mxu0 %v1064
      %v1160 = vpop.f32.mrf.mxu0
      %v1161 = vadd.f32 0.0, %v1160
      %1162 = vmatmul.f32.gmra.mxu0 %v1065
      %v1163 = vpop.f32.mrf.mxu0
      %v1164 = vadd.f32 0.0, %v1163
      %1165 = vmatmul.f32.gmra.mxu0 %v1066
      %v1166 = vpop.f32.mrf.mxu0
      %v1167 = vadd.f32 0.0, %v1166
      %1168 = vmatmul.f32.gmra.mxu0 %v1067
      %v1169 = vpop.f32.mrf.mxu0
      %v1170 = vadd.f32 0.0, %v1169
      %1171 = vmatmul.f32.gmra.mxu0 %v1068
      %v1172 = vpop.f32.mrf.mxu0
      %v1173 = vadd.f32 0.0, %v1172
      %1174 = vmatmul.f32.gmra.mxu0 %v1069
      %v1175 = vpop.f32.mrf.mxu0
      %v1176 = vadd.f32 0.0, %v1175
      %1177 = vmatmul.f32.gmra.mxu0 %v1070
      %v1178 = vpop.f32.mrf.mxu0
      %v1179 = vadd.f32 0.0, %v1178
      %1180 = vmatmul.f32.gmra.mxu0 %v1071
      %v1181 = vpop.f32.mrf.mxu0
      %v1182 = vadd.f32 0.0, %v1181
      %1183 = vmatmul.f32.gmra.mxu0 %v1072
      %v1184 = vpop.f32.mrf.mxu0
      %v1185 = vadd.f32 0.0, %v1184
      %1186 = vmatmul.f32.gmra.mxu0 %v1073
      %v1187 = vpop.f32.mrf.mxu0
      %v1188 = vadd.f32 0.0, %v1187
      %1189 = vmatmul.f32.gmra.mxu0 %v1074
      %v1190 = vpop.f32.mrf.mxu0
      %v1191 = vadd.f32 0.0, %v1190
      %1192 = vmatmul.f32.gmra.mxu0 %v1075
      %v1193 = vpop.f32.mrf.mxu0
      %v1194 = vadd.f32 0.0, %v1193
      %1195 = vmatmul.f32.gmra.mxu0 %v1076
      %v1196 = vpop.f32.mrf.mxu0
      %v1197 = vadd.f32 0.0, %v1196
      %1198 = vmatmul.f32.gmra.mxu0 %v1077
      %v1199 = vpop.f32.mrf.mxu0
      %v1200 = vadd.f32 0.0, %v1199
      %1201 = vmatmul.f32.gmra.mxu0 %v1078
      %v1202 = vpop.f32.mrf.mxu0
      %v1203 = vadd.f32 0.0, %v1202
      %1204 = vmatmul.f32.gmra.mxu0 %v1079
      %v1205 = vpop.f32.mrf.mxu0
      %v1206 = vadd.f32 0.0, %v1205
      %1207 = vmatmul.f32.gmra.mxu0 %v1080
      %v1208 = vpop.f32.mrf.mxu0
      %v1209 = vadd.f32 0.0, %v1208
      %1210 = vmatmul.f32.gmra.mxu0 %v1081
      %v1211 = vpop.f32.mrf.mxu0
      %v1212 = vadd.f32 0.0, %v1211
      %1213 = vmatmul.f32.gmra.mxu0 %v1082
      %v1214 = vpop.f32.mrf.mxu0
      %v1215 = vadd.f32 0.0, %v1214
      %1216 = vmatmul.f32.gmra.mxu0 %v1083
      %v1217 = vpop.f32.mrf.mxu0
      %v1218 = vadd.f32 0.0, %v1217
      %1219 = vmatmul.f32.gmra.mxu0 %v1084
      %v1220 = vpop.f32.mrf.mxu0
      %v1221 = vadd.f32 0.0, %v1220
      %1222 = vmatmul.f32.gmra.mxu0 %v1085
      %v1223 = vpop.f32.mrf.mxu0
      %v1224 = vadd.f32 0.0, %v1223
      %1225 = vmatmul.f32.gmra.mxu0 %v1086
      %v1226 = vpop.f32.mrf.mxu0
      %v1227 = vadd.f32 0.0, %v1226
      %1228 = vdwg.mxu0
      %1229 = vmatpush.msra.mxu0 %v1050
      %1230 = vmatpush.msra.mxu0 %v1049
      %1231 = vmatpush.msra.mxu0 %v1048
      %1232 = vmatpush.msra.mxu0 %v1047
      %1233 = vmatpush.msra.mxu0 %v1046
      %1234 = vmatpush.msra.mxu0 %v1045
      %1235 = vmatpush.msra.mxu0 %v1044
      %1236 = vmatpush.msra.mxu0 %v1043
      %1237 = vmatpush.msra.mxu0 %v1042
      %1238 = vmatpush.msra.mxu0 %v1041
      %1239 = vmatpush.msra.mxu0 %v1040
      %1240 = vmatpush.msra.mxu0 %v1039
      %1241 = vmatpush.msra.mxu0 %v1038
      %1242 = vmatpush.msra.mxu0 %v1037
      %1243 = vmatpush.msra.mxu0 %v1036
      %1244 = vmatpush.msra.mxu0 %v1035
      %1245 = vmatmul.f32.gmra.mxu0 %v999
      %v1246 = vpop.f32.mrf.mxu0
      %v1247 = vadd.f32 %v1122, %v1246
      %1248 = vmatmul.f32.gmra.mxu0 %v1000
      %v1249 = vpop.f32.mrf.mxu0
      %v1250 = vadd.f32 %v1125, %v1249
      %1251 = vmatmul.f32.gmra.mxu0 %v1001
      %v1252 = vpop.f32.mrf.mxu0
      %v1253 = vadd.f32 %v1128, %v1252
      %1254 = vmatmul.f32.gmra.mxu0 %v1002
      %v1255 = vpop.f32.mrf.mxu0
      %v1256 = vadd.f32 %v1131, %v1255
      %1257 = vmatmul.f32.gmra.mxu0 %v1003
      %v1258 = vpop.f32.mrf.mxu0
      %v1259 = vadd.f32 %v1134, %v1258
      %1260 = vmatmul.f32.gmra.mxu0 %v1004
      %v1261 = vpop.f32.mrf.mxu0
      %v1262 = vadd.f32 %v1137, %v1261
      %1263 = vmatmul.f32.gmra.mxu0 %v1005
      %v1264 = vpop.f32.mrf.mxu0
      %v1265 = vadd.f32 %v1140, %v1264
      %1266 = vmatmul.f32.gmra.mxu0 %v1006
      %v1267 = vpop.f32.mrf.mxu0
      %v1268 = vadd.f32 %v1143, %v1267
      %1269 = vmatmul.f32.gmra.mxu0 %v1007
      %v1270 = vpop.f32.mrf.mxu0
      %v1271 = vadd.f32 %v1146, %v1270
      %1272 = vmatmul.f32.gmra.mxu0 %v1008
      %v1273 = vpop.f32.mrf.mxu0
      %v1274 = vadd.f32 %v1149, %v1273
      %1275 = vmatmul.f32.gmra.mxu0 %v1009
      %v1276 = vpop.f32.mrf.mxu0
      %v1277 = vadd.f32 %v1152, %v1276
      %1278 = vmatmul.f32.gmra.mxu0 %v1010
      %v1279 = vpop.f32.mrf.mxu0
      %v1280 = vadd.f32 %v1155, %v1279
      %1281 = vmatmul.f32.gmra.mxu0 %v1011
      %v1282 = vpop.f32.mrf.mxu0
      %v1283 = vadd.f32 %v1158, %v1282
      %1284 = vmatmul.f32.gmra.mxu0 %v1012
      %v1285 = vpop.f32.mrf.mxu0
      %v1286 = vadd.f32 %v1161, %v1285
      %1287 = vmatmul.f32.gmra.mxu0 %v1013
      %v1288 = vpop.f32.mrf.mxu0
      %v1289 = vadd.f32 %v1164, %v1288
      %1290 = vmatmul.f32.gmra.mxu0 %v1014
      %v1291 = vpop.f32.mrf.mxu0
      %v1292 = vadd.f32 %v1167, %v1291
      %1293 = vmatmul.f32.gmra.mxu0 %v1015
      %v1294 = vpop.f32.mrf.mxu0
      %v1295 = vadd.f32 %v1170, %v1294
      %1296 = vmatmul.f32.gmra.mxu0 %v1016
      %v1297 = vpop.f32.mrf.mxu0
      %v1298 = vadd.f32 %v1173, %v1297
      %1299 = vmatmul.f32.gmra.mxu0 %v1017
      %v1300 = vpop.f32.mrf.mxu0
      %v1301 = vadd.f32 %v1176, %v1300
      %1302 = vmatmul.f32.gmra.mxu0 %v1018
      %v1303 = vpop.f32.mrf.mxu0
      %v1304 = vadd.f32 %v1179, %v1303
      %1305 = vmatmul.f32.gmra.mxu0 %v1019
      %v1306 = vpop.f32.mrf.mxu0
      %v1307 = vadd.f32 %v1182, %v1306
      %1308 = vmatmul.f32.gmra.mxu0 %v1020
      %v1309 = vpop.f32.mrf.mxu0
      %v1310 = vadd.f32 %v1185, %v1309
      %1311 = vmatmul.f32.gmra.mxu0 %v1021
      %v1312 = vpop.f32.mrf.mxu0
      %v1313 = vadd.f32 %v1188, %v1312
      %1314 = vmatmul.f32.gmra.mxu0 %v1022
      %v1315 = vpop.f32.mrf.mxu0
      %v1316 = vadd.f32 %v1191, %v1315
      %1317 = vmatmul.f32.gmra.mxu0 %v1023
      %v1318 = vpop.f32.mrf.mxu0
      %v1319 = vadd.f32 %v1194, %v1318
      %1320 = vmatmul.f32.gmra.mxu0 %v1024
      %v1321 = vpop.f32.mrf.mxu0
      %v1322 = vadd.f32 %v1197, %v1321
      %1323 = vmatmul.f32.gmra.mxu0 %v1025
      %v1324 = vpop.f32.mrf.mxu0
      %v1325 = vadd.f32 %v1200, %v1324
      %1326 = vmatmul.f32.gmra.mxu0 %v1026
      %v1327 = vpop.f32.mrf.mxu0
      %v1328 = vadd.f32 %v1203, %v1327
      %1329 = vmatmul.f32.gmra.mxu0 %v1027
      %v1330 = vpop.f32.mrf.mxu0
      %v1331 = vadd.f32 %v1206, %v1330
      %1332 = vmatmul.f32.gmra.mxu0 %v1028
      %v1333 = vpop.f32.mrf.mxu0
      %v1334 = vadd.f32 %v1209, %v1333
      %1335 = vmatmul.f32.gmra.mxu0 %v1029
      %v1336 = vpop.f32.mrf.mxu0
      %v1337 = vadd.f32 %v1212, %v1336
      %1338 = vmatmul.f32.gmra.mxu0 %v1030
      %v1339 = vpop.f32.mrf.mxu0
      %v1340 = vadd.f32 %v1215, %v1339
      %1341 = vmatmul.f32.gmra.mxu0 %v1031
      %v1342 = vpop.f32.mrf.mxu0
      %v1343 = vadd.f32 %v1218, %v1342
      %1344 = vmatmul.f32.gmra.mxu0 %v1032
      %v1345 = vpop.f32.mrf.mxu0
      %v1346 = vadd.f32 %v1221, %v1345
      %1347 = vmatmul.f32.gmra.mxu0 %v1033
      %v1348 = vpop.f32.mrf.mxu0
      %v1349 = vadd.f32 %v1224, %v1348
      %1350 = vmatmul.f32.gmra.mxu0 %v1034
      %v1351 = vpop.f32.mrf.mxu0
      %v1352 = vadd.f32 %v1227, %v1351
      %1353 = vdwg.mxu0
      %v1354 = vld [vmem:[#allocation2 + $0x2] sm:$0xff]
      %v1355 = vld [vmem:[#allocation2 + $0xa] sm:$0xff]
      %v1356 = vld [vmem:[#allocation2 + $0x12] sm:$0xff]
      %v1357 = vld [vmem:[#allocation2 + $0x1a] sm:$0xff]
      %v1358 = vld [vmem:[#allocation2 + $0x22] sm:$0xff]
      %v1359 = vld [vmem:[#allocation2 + $0x2a] sm:$0xff]
      %v1360 = vld [vmem:[#allocation2 + $0x32] sm:$0xff]
      %v1361 = vld [vmem:[#allocation2 + $0x3a] sm:$0xff]
      %v1362 = vld [vmem:[#allocation2 + $0x42] sm:$0xff]
      %v1363 = vld [vmem:[#allocation2 + $0x4a] sm:$0xff]
      %v1364 = vld [vmem:[#allocation2 + $0x52] sm:$0xff]
      %v1365 = vld [vmem:[#allocation2 + $0x5a] sm:$0xff]
      %v1366 = vld [vmem:[#allocation2 + $0x62] sm:$0xff]
      %v1367 = vld [vmem:[#allocation2 + $0x6a] sm:$0xff]
      %v1368 = vld [vmem:[#allocation2 + $0x72] sm:$0xff]
      %v1369 = vld [vmem:[#allocation2 + $0x7a] sm:$0xff]
      %v1370 = vld [vmem:[#allocation2 + $0x82] sm:$0xff]
      %v1371 = vld [vmem:[#allocation2 + $0x8a] sm:$0xff]
      %v1372 = vld [vmem:[#allocation2 + $0x92] sm:$0xff]
      %v1373 = vld [vmem:[#allocation2 + $0x9a] sm:$0xff]
      %v1374 = vld [vmem:[#allocation2 + $0xa2] sm:$0xff]
      %v1375 = vld [vmem:[#allocation2 + $0xaa] sm:$0xff]
      %v1376 = vld [vmem:[#allocation2 + $0xb2] sm:$0xff]
      %v1377 = vld [vmem:[#allocation2 + $0xba] sm:$0xff]
      %v1378 = vld [vmem:[#allocation2 + $0xc2] sm:$0xff]
      %v1379 = vld [vmem:[#allocation2 + $0xca] sm:$0xff]
      %v1380 = vld [vmem:[#allocation2 + $0xd2] sm:$0xff]
      %v1381 = vld [vmem:[#allocation2 + $0xda] sm:$0xff]
      %v1382 = vld [vmem:[#allocation2 + $0xe2] sm:$0xff]
      %v1383 = vld [vmem:[#allocation2 + $0xea] sm:$0xff]
      %v1384 = vld [vmem:[#allocation2 + $0xf2] sm:$0xff]
      %v1385 = vld [vmem:[#allocation2 + $0xfa] sm:$0xff]
      %v1386 = vld [vmem:[#allocation2 + $0x102] sm:$0xff]
      %v1387 = vld [vmem:[#allocation2 + $0x10a] sm:$0xff]
      %v1388 = vld [vmem:[#allocation2 + $0x112] sm:$0xff]
      %v1389 = vld [vmem:[#allocation2 + $0x11a] sm:$0xff]
      %s1390 = scalar_lea.vmem %s4, 256
      %v1391 = vld [vmem:[%s1390] sm:$0xff]
      %v1392 = vld [vmem:[%s1390 + $0x8] sm:$0xff]
      %v1393 = vld [vmem:[%s1390 + $0x10] sm:$0xff]
      %v1394 = vld [vmem:[%s1390 + $0x18] sm:$0xff]
      %v1395 = vld [vmem:[%s1390 + $0x20] sm:$0xff]
      %v1396 = vld [vmem:[%s1390 + $0x28] sm:$0xff]
      %v1397 = vld [vmem:[%s1390 + $0x30] sm:$0xff]
      %v1398 = vld [vmem:[%s1390 + $0x38] sm:$0xff]
      %v1399 = vld [vmem:[%s1390 + $0x40] sm:$0xff]
      %v1400 = vld [vmem:[%s1390 + $0x48] sm:$0xff]
      %v1401 = vld [vmem:[%s1390 + $0x50] sm:$0xff]
      %v1402 = vld [vmem:[%s1390 + $0x58] sm:$0xff]
      %v1403 = vld [vmem:[%s1390 + $0x60] sm:$0xff]
      %v1404 = vld [vmem:[%s1390 + $0x68] sm:$0xff]
      %v1405 = vld [vmem:[%s1390 + $0x70] sm:$0xff]
      %v1406 = vld [vmem:[%s1390 + $0x78] sm:$0xff]
      %1407 = vmatpush.msra.mxu0 %v1406
      %1408 = vmatpush.msra.mxu0 %v1405
      %1409 = vmatpush.msra.mxu0 %v1404
      %1410 = vmatpush.msra.mxu0 %v1403
      %1411 = vmatpush.msra.mxu0 %v1402
      %1412 = vmatpush.msra.mxu0 %v1401
      %1413 = vmatpush.msra.mxu0 %v1400
      %1414 = vmatpush.msra.mxu0 %v1399
      %1415 = vmatpush.msra.mxu0 %v1398
      %1416 = vmatpush.msra.mxu0 %v1397
      %1417 = vmatpush.msra.mxu0 %v1396
      %1418 = vmatpush.msra.mxu0 %v1395
      %1419 = vmatpush.msra.mxu0 %v1394
      %1420 = vmatpush.msra.mxu0 %v1393
      %1421 = vmatpush.msra.mxu0 %v1392
      %1422 = vmatpush.msra.mxu0 %v1391
      %1423 = vmatmul.f32.gmra.mxu0 %v1354
      %v1424 = vpop.f32.mrf.mxu0
      %v1425 = vadd.f32 0.0, %v1424
      %1426 = vmatmul.f32.gmra.mxu0 %v1355
      %v1427 = vpop.f32.mrf.mxu0
      %v1428 = vadd.f32 0.0, %v1427
      %1429 = vmatmul.f32.gmra.mxu0 %v1356
      %v1430 = vpop.f32.mrf.mxu0
      %v1431 = vadd.f32 0.0, %v1430
      %1432 = vmatmul.f32.gmra.mxu0 %v1357
      %v1433 = vpop.f32.mrf.mxu0
      %v1434 = vadd.f32 0.0, %v1433
      %1435 = vmatmul.f32.gmra.mxu0 %v1358
      %v1436 = vpop.f32.mrf.mxu0
      %v1437 = vadd.f32 0.0, %v1436
      %1438 = vmatmul.f32.gmra.mxu0 %v1359
      %v1439 = vpop.f32.mrf.mxu0
      %v1440 = vadd.f32 0.0, %v1439
      %1441 = vmatmul.f32.gmra.mxu0 %v1360
      %v1442 = vpop.f32.mrf.mxu0
      %v1443 = vadd.f32 0.0, %v1442
      %1444 = vmatmul.f32.gmra.mxu0 %v1361
      %v1445 = vpop.f32.mrf.mxu0
      %v1446 = vadd.f32 0.0, %v1445
      %1447 = vmatmul.f32.gmra.mxu0 %v1362
      %v1448 = vpop.f32.mrf.mxu0
      %v1449 = vadd.f32 0.0, %v1448
      %1450 = vmatmul.f32.gmra.mxu0 %v1363
      %v1451 = vpop.f32.mrf.mxu0
      %v1452 = vadd.f32 0.0, %v1451
      %1453 = vmatmul.f32.gmra.mxu0 %v1364
      %v1454 = vpop.f32.mrf.mxu0
      %v1455 = vadd.f32 0.0, %v1454
      %1456 = vmatmul.f32.gmra.mxu0 %v1365
      %v1457 = vpop.f32.mrf.mxu0
      %v1458 = vadd.f32 0.0, %v1457
      %1459 = vmatmul.f32.gmra.mxu0 %v1366
      %v1460 = vpop.f32.mrf.mxu0
      %v1461 = vadd.f32 0.0, %v1460
      %1462 = vmatmul.f32.gmra.mxu0 %v1367
      %v1463 = vpop.f32.mrf.mxu0
      %v1464 = vadd.f32 0.0, %v1463
      %1465 = vmatmul.f32.gmra.mxu0 %v1368
      %v1466 = vpop.f32.mrf.mxu0
      %v1467 = vadd.f32 0.0, %v1466
      %1468 = vmatmul.f32.gmra.mxu0 %v1369
      %v1469 = vpop.f32.mrf.mxu0
      %v1470 = vadd.f32 0.0, %v1469
      %1471 = vmatmul.f32.gmra.mxu0 %v1370
      %v1472 = vpop.f32.mrf.mxu0
      %v1473 = vadd.f32 0.0, %v1472
      %1474 = vmatmul.f32.gmra.mxu0 %v1371
      %v1475 = vpop.f32.mrf.mxu0
      %v1476 = vadd.f32 0.0, %v1475
      %1477 = vmatmul.f32.gmra.mxu0 %v1372
      %v1478 = vpop.f32.mrf.mxu0
      %v1479 = vadd.f32 0.0, %v1478
      %1480 = vmatmul.f32.gmra.mxu0 %v1373
      %v1481 = vpop.f32.mrf.mxu0
      %v1482 = vadd.f32 0.0, %v1481
      %1483 = vmatmul.f32.gmra.mxu0 %v1374
      %v1484 = vpop.f32.mrf.mxu0
      %v1485 = vadd.f32 0.0, %v1484
      %1486 = vmatmul.f32.gmra.mxu0 %v1375
      %v1487 = vpop.f32.mrf.mxu0
      %v1488 = vadd.f32 0.0, %v1487
      %1489 = vmatmul.f32.gmra.mxu0 %v1376
      %v1490 = vpop.f32.mrf.mxu0
      %v1491 = vadd.f32 0.0, %v1490
      %1492 = vmatmul.f32.gmra.mxu0 %v1377
      %v1493 = vpop.f32.mrf.mxu0
      %v1494 = vadd.f32 0.0, %v1493
      %1495 = vmatmul.f32.gmra.mxu0 %v1378
      %v1496 = vpop.f32.mrf.mxu0
      %v1497 = vadd.f32 0.0, %v1496
      %1498 = vmatmul.f32.gmra.mxu0 %v1379
      %v1499 = vpop.f32.mrf.mxu0
      %v1500 = vadd.f32 0.0, %v1499
      %1501 = vmatmul.f32.gmra.mxu0 %v1380
      %v1502 = vpop.f32.mrf.mxu0
      %v1503 = vadd.f32 0.0, %v1502
      %1504 = vmatmul.f32.gmra.mxu0 %v1381
      %v1505 = vpop.f32.mrf.mxu0
      %v1506 = vadd.f32 0.0, %v1505
      %1507 = vmatmul.f32.gmra.mxu0 %v1382
      %v1508 = vpop.f32.mrf.mxu0
      %v1509 = vadd.f32 0.0, %v1508
      %1510 = vmatmul.f32.gmra.mxu0 %v1383
      %v1511 = vpop.f32.mrf.mxu0
      %v1512 = vadd.f32 0.0, %v1511
      %1513 = vmatmul.f32.gmra.mxu0 %v1384
      %v1514 = vpop.f32.mrf.mxu0
      %v1515 = vadd.f32 0.0, %v1514
      %1516 = vmatmul.f32.gmra.mxu0 %v1385
      %v1517 = vpop.f32.mrf.mxu0
      %v1518 = vadd.f32 0.0, %v1517
      %1519 = vmatmul.f32.gmra.mxu0 %v1386
      %v1520 = vpop.f32.mrf.mxu0
      %v1521 = vadd.f32 0.0, %v1520
      %1522 = vmatmul.f32.gmra.mxu0 %v1387
      %v1523 = vpop.f32.mrf.mxu0
      %v1524 = vadd.f32 0.0, %v1523
      %1525 = vmatmul.f32.gmra.mxu0 %v1388
      %v1526 = vpop.f32.mrf.mxu0
      %v1527 = vadd.f32 0.0, %v1526
      %1528 = vmatmul.f32.gmra.mxu0 %v1389
      %v1529 = vpop.f32.mrf.mxu0
      %v1530 = vadd.f32 0.0, %v1529
      %1531 = vdwg.mxu0
      %v1532 = vadd.f32 %v1247, %v1425
      %v1533 = vadd.f32 %v1250, %v1428
      %v1534 = vadd.f32 %v1253, %v1431
      %v1535 = vadd.f32 %v1256, %v1434
      %v1536 = vadd.f32 %v1259, %v1437
      %v1537 = vadd.f32 %v1262, %v1440
      %v1538 = vadd.f32 %v1265, %v1443
      %v1539 = vadd.f32 %v1268, %v1446
      %v1540 = vadd.f32 %v1271, %v1449
      %v1541 = vadd.f32 %v1274, %v1452
      %v1542 = vadd.f32 %v1277, %v1455
      %v1543 = vadd.f32 %v1280, %v1458
      %v1544 = vadd.f32 %v1283, %v1461
      %v1545 = vadd.f32 %v1286, %v1464
      %v1546 = vadd.f32 %v1289, %v1467
      %v1547 = vadd.f32 %v1292, %v1470
      %v1548 = vadd.f32 %v1295, %v1473
      %v1549 = vadd.f32 %v1298, %v1476
      %v1550 = vadd.f32 %v1301, %v1479
      %v1551 = vadd.f32 %v1304, %v1482
      %v1552 = vadd.f32 %v1307, %v1485
      %v1553 = vadd.f32 %v1310, %v1488
      %v1554 = vadd.f32 %v1313, %v1491
      %v1555 = vadd.f32 %v1316, %v1494
      %v1556 = vadd.f32 %v1319, %v1497
      %v1557 = vadd.f32 %v1322, %v1500
      %v1558 = vadd.f32 %v1325, %v1503
      %v1559 = vadd.f32 %v1328, %v1506
      %v1560 = vadd.f32 %v1331, %v1509
      %v1561 = vadd.f32 %v1334, %v1512
      %v1562 = vadd.f32 %v1337, %v1515
      %v1563 = vadd.f32 %v1340, %v1518
      %v1564 = vadd.f32 %v1343, %v1521
      %v1565 = vadd.f32 %v1346, %v1524
      %v1566 = vadd.f32 %v1349, %v1527
      %v1567 = vadd.f32 %v1352, %v1530
      %v1568 = vld [vmem:[#allocation2 + $0x12] sm:$0xff]
      %v1569 = vld [vmem:[#allocation2 + $0x1a] sm:$0xff]
      %v1570 = vld [vmem:[#allocation2 + $0x22] sm:$0xff]
      %v1571 = vld [vmem:[#allocation2 + $0x2a] sm:$0xff]
      %v1572 = vld [vmem:[#allocation2 + $0x32] sm:$0xff]
      %v1573 = vld [vmem:[#allocation2 + $0x3a] sm:$0xff]
      %v1574 = vld [vmem:[#allocation2 + $0x42] sm:$0xff]
      %v1575 = vld [vmem:[#allocation2 + $0x4a] sm:$0xff]
      %v1576 = vld [vmem:[#allocation2 + $0x52] sm:$0xff]
      %v1577 = vld [vmem:[#allocation2 + $0x5a] sm:$0xff]
      %v1578 = vld [vmem:[#allocation2 + $0x62] sm:$0xff]
      %v1579 = vld [vmem:[#allocation2 + $0x6a] sm:$0xff]
      %v1580 = vld [vmem:[#allocation2 + $0x72] sm:$0xff]
      %v1581 = vld [vmem:[#allocation2 + $0x7a] sm:$0xff]
      %v1582 = vld [vmem:[#allocation2 + $0x82] sm:$0xff]
      %v1583 = vld [vmem:[#allocation2 + $0x8a] sm:$0xff]
      %v1584 = vld [vmem:[#allocation2 + $0x92] sm:$0xff]
      %v1585 = vld [vmem:[#allocation2 + $0x9a] sm:$0xff]
      %v1586 = vld [vmem:[#allocation2 + $0xa2] sm:$0xff]
      %v1587 = vld [vmem:[#allocation2 + $0xaa] sm:$0xff]
      %v1588 = vld [vmem:[#allocation2 + $0xb2] sm:$0xff]
      %v1589 = vld [vmem:[#allocation2 + $0xba] sm:$0xff]
      %v1590 = vld [vmem:[#allocation2 + $0xc2] sm:$0xff]
      %v1591 = vld [vmem:[#allocation2 + $0xca] sm:$0xff]
      %v1592 = vld [vmem:[#allocation2 + $0xd2] sm:$0xff]
      %v1593 = vld [vmem:[#allocation2 + $0xda] sm:$0xff]
      %v1594 = vld [vmem:[#allocation2 + $0xe2] sm:$0xff]
      %v1595 = vld [vmem:[#allocation2 + $0xea] sm:$0xff]
      %v1596 = vld [vmem:[#allocation2 + $0xf2] sm:$0xff]
      %v1597 = vld [vmem:[#allocation2 + $0xfa] sm:$0xff]
      %v1598 = vld [vmem:[#allocation2 + $0x102] sm:$0xff]
      %v1599 = vld [vmem:[#allocation2 + $0x10a] sm:$0xff]
      %v1600 = vld [vmem:[#allocation2 + $0x112] sm:$0xff]
      %v1601 = vld [vmem:[#allocation2 + $0x11a] sm:$0xff]
      %v1602 = vld [vmem:[#allocation2 + $0x122] sm:$0xff]
      %v1603 = vld [vmem:[#allocation2 + $0x12a] sm:$0xff]
      %s1604 = scalar_lea.vmem %s4, 384
      %v1605 = vld [vmem:[%s1604] sm:$0xff]
      %v1606 = vld [vmem:[%s1604 + $0x8] sm:$0xff]
      %v1607 = vld [vmem:[%s1604 + $0x10] sm:$0xff]
      %v1608 = vld [vmem:[%s1604 + $0x18] sm:$0xff]
      %v1609 = vld [vmem:[%s1604 + $0x20] sm:$0xff]
      %v1610 = vld [vmem:[%s1604 + $0x28] sm:$0xff]
      %v1611 = vld [vmem:[%s1604 + $0x30] sm:$0xff]
      %v1612 = vld [vmem:[%s1604 + $0x38] sm:$0xff]
      %v1613 = vld [vmem:[%s1604 + $0x40] sm:$0xff]
      %v1614 = vld [vmem:[%s1604 + $0x48] sm:$0xff]
      %v1615 = vld [vmem:[%s1604 + $0x50] sm:$0xff]
      %v1616 = vld [vmem:[%s1604 + $0x58] sm:$0xff]
      %v1617 = vld [vmem:[%s1604 + $0x60] sm:$0xff]
      %v1618 = vld [vmem:[%s1604 + $0x68] sm:$0xff]
      %v1619 = vld [vmem:[%s1604 + $0x70] sm:$0xff]
      %v1620 = vld [vmem:[%s1604 + $0x78] sm:$0xff]
      %1621 = vmatpush.msra.mxu0 %v1620
      %1622 = vmatpush.msra.mxu0 %v1619
      %1623 = vmatpush.msra.mxu0 %v1618
      %1624 = vmatpush.msra.mxu0 %v1617
      %1625 = vmatpush.msra.mxu0 %v1616
      %1626 = vmatpush.msra.mxu0 %v1615
      %1627 = vmatpush.msra.mxu0 %v1614
      %1628 = vmatpush.msra.mxu0 %v1613
      %1629 = vmatpush.msra.mxu0 %v1612
      %1630 = vmatpush.msra.mxu0 %v1611
      %1631 = vmatpush.msra.mxu0 %v1610
      %1632 = vmatpush.msra.mxu0 %v1609
      %1633 = vmatpush.msra.mxu0 %v1608
      %1634 = vmatpush.msra.mxu0 %v1607
      %1635 = vmatpush.msra.mxu0 %v1606
      %1636 = vmatpush.msra.mxu0 %v1605
      %1637 = vmatmul.f32.gmra.mxu0 %v1568
      %v1638 = vpop.f32.mrf.mxu0
      %v1639 = vadd.f32 0.0, %v1638
      %1640 = vmatmul.f32.gmra.mxu0 %v1569
      %v1641 = vpop.f32.mrf.mxu0
      %v1642 = vadd.f32 0.0, %v1641
      %1643 = vmatmul.f32.gmra.mxu0 %v1570
      %v1644 = vpop.f32.mrf.mxu0
      %v1645 = vadd.f32 0.0, %v1644
      %1646 = vmatmul.f32.gmra.mxu0 %v1571
      %v1647 = vpop.f32.mrf.mxu0
      %v1648 = vadd.f32 0.0, %v1647
      %1649 = vmatmul.f32.gmra.mxu0 %v1572
      %v1650 = vpop.f32.mrf.mxu0
      %v1651 = vadd.f32 0.0, %v1650
      %1652 = vmatmul.f32.gmra.mxu0 %v1573
      %v1653 = vpop.f32.mrf.mxu0
      %v1654 = vadd.f32 0.0, %v1653
      %1655 = vmatmul.f32.gmra.mxu0 %v1574
      %v1656 = vpop.f32.mrf.mxu0
      %v1657 = vadd.f32 0.0, %v1656
      %1658 = vmatmul.f32.gmra.mxu0 %v1575
      %v1659 = vpop.f32.mrf.mxu0
      %v1660 = vadd.f32 0.0, %v1659
      %1661 = vmatmul.f32.gmra.mxu0 %v1576
      %v1662 = vpop.f32.mrf.mxu0
      %v1663 = vadd.f32 0.0, %v1662
      %1664 = vmatmul.f32.gmra.mxu0 %v1577
      %v1665 = vpop.f32.mrf.mxu0
      %v1666 = vadd.f32 0.0, %v1665
      %1667 = vmatmul.f32.gmra.mxu0 %v1578
      %v1668 = vpop.f32.mrf.mxu0
      %v1669 = vadd.f32 0.0, %v1668
      %1670 = vmatmul.f32.gmra.mxu0 %v1579
      %v1671 = vpop.f32.mrf.mxu0
      %v1672 = vadd.f32 0.0, %v1671
      %1673 = vmatmul.f32.gmra.mxu0 %v1580
      %v1674 = vpop.f32.mrf.mxu0
      %v1675 = vadd.f32 0.0, %v1674
      %1676 = vmatmul.f32.gmra.mxu0 %v1581
      %v1677 = vpop.f32.mrf.mxu0
      %v1678 = vadd.f32 0.0, %v1677
      %1679 = vmatmul.f32.gmra.mxu0 %v1582
      %v1680 = vpop.f32.mrf.mxu0
      %v1681 = vadd.f32 0.0, %v1680
      %1682 = vmatmul.f32.gmra.mxu0 %v1583
      %v1683 = vpop.f32.mrf.mxu0
      %v1684 = vadd.f32 0.0, %v1683
      %1685 = vmatmul.f32.gmra.mxu0 %v1584
      %v1686 = vpop.f32.mrf.mxu0
      %v1687 = vadd.f32 0.0, %v1686
      %1688 = vmatmul.f32.gmra.mxu0 %v1585
      %v1689 = vpop.f32.mrf.mxu0
      %v1690 = vadd.f32 0.0, %v1689
      %1691 = vmatmul.f32.gmra.mxu0 %v1586
      %v1692 = vpop.f32.mrf.mxu0
      %v1693 = vadd.f32 0.0, %v1692
      %1694 = vmatmul.f32.gmra.mxu0 %v1587
      %v1695 = vpop.f32.mrf.mxu0
      %v1696 = vadd.f32 0.0, %v1695
      %1697 = vmatmul.f32.gmra.mxu0 %v1588
      %v1698 = vpop.f32.mrf.mxu0
      %v1699 = vadd.f32 0.0, %v1698
      %1700 = vmatmul.f32.gmra.mxu0 %v1589
      %v1701 = vpop.f32.mrf.mxu0
      %v1702 = vadd.f32 0.0, %v1701
      %1703 = vmatmul.f32.gmra.mxu0 %v1590
      %v1704 = vpop.f32.mrf.mxu0
      %v1705 = vadd.f32 0.0, %v1704
      %1706 = vmatmul.f32.gmra.mxu0 %v1591
      %v1707 = vpop.f32.mrf.mxu0
      %v1708 = vadd.f32 0.0, %v1707
      %1709 = vmatmul.f32.gmra.mxu0 %v1592
      %v1710 = vpop.f32.mrf.mxu0
      %v1711 = vadd.f32 0.0, %v1710
      %1712 = vmatmul.f32.gmra.mxu0 %v1593
      %v1713 = vpop.f32.mrf.mxu0
      %v1714 = vadd.f32 0.0, %v1713
      %1715 = vmatmul.f32.gmra.mxu0 %v1594
      %v1716 = vpop.f32.mrf.mxu0
      %v1717 = vadd.f32 0.0, %v1716
      %1718 = vmatmul.f32.gmra.mxu0 %v1595
      %v1719 = vpop.f32.mrf.mxu0
      %v1720 = vadd.f32 0.0, %v1719
      %1721 = vmatmul.f32.gmra.mxu0 %v1596
      %v1722 = vpop.f32.mrf.mxu0
      %v1723 = vadd.f32 0.0, %v1722
      %1724 = vmatmul.f32.gmra.mxu0 %v1597
      %v1725 = vpop.f32.mrf.mxu0
      %v1726 = vadd.f32 0.0, %v1725
      %1727 = vmatmul.f32.gmra.mxu0 %v1598
      %v1728 = vpop.f32.mrf.mxu0
      %v1729 = vadd.f32 0.0, %v1728
      %1730 = vmatmul.f32.gmra.mxu0 %v1599
      %v1731 = vpop.f32.mrf.mxu0
      %v1732 = vadd.f32 0.0, %v1731
      %1733 = vmatmul.f32.gmra.mxu0 %v1600
      %v1734 = vpop.f32.mrf.mxu0
      %v1735 = vadd.f32 0.0, %v1734
      %1736 = vmatmul.f32.gmra.mxu0 %v1601
      %v1737 = vpop.f32.mrf.mxu0
      %v1738 = vadd.f32 0.0, %v1737
      %1739 = vmatmul.f32.gmra.mxu0 %v1602
      %v1740 = vpop.f32.mrf.mxu0
      %v1741 = vadd.f32 0.0, %v1740
      %1742 = vmatmul.f32.gmra.mxu0 %v1603
      %v1743 = vpop.f32.mrf.mxu0
      %v1744 = vadd.f32 0.0, %v1743
      %1745 = vdwg.mxu0
      %v1746 = vadd.f32 %v1532, %v1639
      %v1747 = vadd.f32 %v1533, %v1642
      %v1748 = vadd.f32 %v1534, %v1645
      %v1749 = vadd.f32 %v1535, %v1648
      %v1750 = vadd.f32 %v1536, %v1651
      %v1751 = vadd.f32 %v1537, %v1654
      %v1752 = vadd.f32 %v1538, %v1657
      %v1753 = vadd.f32 %v1539, %v1660
      %v1754 = vadd.f32 %v1540, %v1663
      %v1755 = vadd.f32 %v1541, %v1666
      %v1756 = vadd.f32 %v1542, %v1669
      %v1757 = vadd.f32 %v1543, %v1672
      %v1758 = vadd.f32 %v1544, %v1675
      %v1759 = vadd.f32 %v1545, %v1678
      %v1760 = vadd.f32 %v1546, %v1681
      %v1761 = vadd.f32 %v1547, %v1684
      %v1762 = vadd.f32 %v1548, %v1687
      %v1763 = vadd.f32 %v1549, %v1690
      %v1764 = vadd.f32 %v1550, %v1693
      %v1765 = vadd.f32 %v1551, %v1696
      %v1766 = vadd.f32 %v1552, %v1699
      %v1767 = vadd.f32 %v1553, %v1702
      %v1768 = vadd.f32 %v1554, %v1705
      %v1769 = vadd.f32 %v1555, %v1708
      %v1770 = vadd.f32 %v1556, %v1711
      %v1771 = vadd.f32 %v1557, %v1714
      %v1772 = vadd.f32 %v1558, %v1717
      %v1773 = vadd.f32 %v1559, %v1720
      %v1774 = vadd.f32 %v1560, %v1723
      %v1775 = vadd.f32 %v1561, %v1726
      %v1776 = vadd.f32 %v1562, %v1729
      %v1777 = vadd.f32 %v1563, %v1732
      %v1778 = vadd.f32 %v1564, %v1735
      %v1779 = vadd.f32 %v1565, %v1738
      %v1780 = vadd.f32 %v1566, %v1741
      %v1781 = vadd.f32 %v1567, %v1744
      %v1782 = vld [vmem:[#allocation2 + $0x13] sm:$0xff]
      %v1783 = vld [vmem:[#allocation2 + $0x1b] sm:$0xff]
      %v1784 = vld [vmem:[#allocation2 + $0x23] sm:$0xff]
      %v1785 = vld [vmem:[#allocation2 + $0x2b] sm:$0xff]
      %v1786 = vld [vmem:[#allocation2 + $0x33] sm:$0xff]
      %v1787 = vld [vmem:[#allocation2 + $0x3b] sm:$0xff]
      %v1788 = vld [vmem:[#allocation2 + $0x43] sm:$0xff]
      %v1789 = vld [vmem:[#allocation2 + $0x4b] sm:$0xff]
      %v1790 = vld [vmem:[#allocation2 + $0x53] sm:$0xff]
      %v1791 = vld [vmem:[#allocation2 + $0x5b] sm:$0xff]
      %v1792 = vld [vmem:[#allocation2 + $0x63] sm:$0xff]
      %v1793 = vld [vmem:[#allocation2 + $0x6b] sm:$0xff]
      %v1794 = vld [vmem:[#allocation2 + $0x73] sm:$0xff]
      %v1795 = vld [vmem:[#allocation2 + $0x7b] sm:$0xff]
      %v1796 = vld [vmem:[#allocation2 + $0x83] sm:$0xff]
      %v1797 = vld [vmem:[#allocation2 + $0x8b] sm:$0xff]
      %v1798 = vld [vmem:[#allocation2 + $0x93] sm:$0xff]
      %v1799 = vld [vmem:[#allocation2 + $0x9b] sm:$0xff]
      %v1800 = vld [vmem:[#allocation2 + $0xa3] sm:$0xff]
      %v1801 = vld [vmem:[#allocation2 + $0xab] sm:$0xff]
      %v1802 = vld [vmem:[#allocation2 + $0xb3] sm:$0xff]
      %v1803 = vld [vmem:[#allocation2 + $0xbb] sm:$0xff]
      %v1804 = vld [vmem:[#allocation2 + $0xc3] sm:$0xff]
      %v1805 = vld [vmem:[#allocation2 + $0xcb] sm:$0xff]
      %v1806 = vld [vmem:[#allocation2 + $0xd3] sm:$0xff]
      %v1807 = vld [vmem:[#allocation2 + $0xdb] sm:$0xff]
      %v1808 = vld [vmem:[#allocation2 + $0xe3] sm:$0xff]
      %v1809 = vld [vmem:[#allocation2 + $0xeb] sm:$0xff]
      %v1810 = vld [vmem:[#allocation2 + $0xf3] sm:$0xff]
      %v1811 = vld [vmem:[#allocation2 + $0xfb] sm:$0xff]
      %v1812 = vld [vmem:[#allocation2 + $0x103] sm:$0xff]
      %v1813 = vld [vmem:[#allocation2 + $0x10b] sm:$0xff]
      %v1814 = vld [vmem:[#allocation2 + $0x113] sm:$0xff]
      %v1815 = vld [vmem:[#allocation2 + $0x11b] sm:$0xff]
      %v1816 = vld [vmem:[#allocation2 + $0x123] sm:$0xff]
      %v1817 = vld [vmem:[#allocation2 + $0x12b] sm:$0xff]
      %s1818 = scalar_lea.vmem %s4, 512
      %v1819 = vld [vmem:[%s1818] sm:$0xff]
      %v1820 = vld [vmem:[%s1818 + $0x8] sm:$0xff]
      %v1821 = vld [vmem:[%s1818 + $0x10] sm:$0xff]
      %v1822 = vld [vmem:[%s1818 + $0x18] sm:$0xff]
      %v1823 = vld [vmem:[%s1818 + $0x20] sm:$0xff]
      %v1824 = vld [vmem:[%s1818 + $0x28] sm:$0xff]
      %v1825 = vld [vmem:[%s1818 + $0x30] sm:$0xff]
      %v1826 = vld [vmem:[%s1818 + $0x38] sm:$0xff]
      %v1827 = vld [vmem:[%s1818 + $0x40] sm:$0xff]
      %v1828 = vld [vmem:[%s1818 + $0x48] sm:$0xff]
      %v1829 = vld [vmem:[%s1818 + $0x50] sm:$0xff]
      %v1830 = vld [vmem:[%s1818 + $0x58] sm:$0xff]
      %v1831 = vld [vmem:[%s1818 + $0x60] sm:$0xff]
      %v1832 = vld [vmem:[%s1818 + $0x68] sm:$0xff]
      %v1833 = vld [vmem:[%s1818 + $0x70] sm:$0xff]
      %v1834 = vld [vmem:[%s1818 + $0x78] sm:$0xff]
      %1835 = vmatpush.msra.mxu0 %v1834
      %1836 = vmatpush.msra.mxu0 %v1833
      %1837 = vmatpush.msra.mxu0 %v1832
      %1838 = vmatpush.msra.mxu0 %v1831
      %1839 = vmatpush.msra.mxu0 %v1830
      %1840 = vmatpush.msra.mxu0 %v1829
      %1841 = vmatpush.msra.mxu0 %v1828
      %1842 = vmatpush.msra.mxu0 %v1827
      %1843 = vmatpush.msra.mxu0 %v1826
      %1844 = vmatpush.msra.mxu0 %v1825
      %1845 = vmatpush.msra.mxu0 %v1824
      %1846 = vmatpush.msra.mxu0 %v1823
      %1847 = vmatpush.msra.mxu0 %v1822
      %1848 = vmatpush.msra.mxu0 %v1821
      %1849 = vmatpush.msra.mxu0 %v1820
      %1850 = vmatpush.msra.mxu0 %v1819
      %1851 = vmatmul.f32.gmra.mxu0 %v1782
      %v1852 = vpop.f32.mrf.mxu0
      %v1853 = vadd.f32 0.0, %v1852
      %1854 = vmatmul.f32.gmra.mxu0 %v1783
      %v1855 = vpop.f32.mrf.mxu0
      %v1856 = vadd.f32 0.0, %v1855
      %1857 = vmatmul.f32.gmra.mxu0 %v1784
      %v1858 = vpop.f32.mrf.mxu0
      %v1859 = vadd.f32 0.0, %v1858
      %1860 = vmatmul.f32.gmra.mxu0 %v1785
      %v1861 = vpop.f32.mrf.mxu0
      %v1862 = vadd.f32 0.0, %v1861
      %1863 = vmatmul.f32.gmra.mxu0 %v1786
      %v1864 = vpop.f32.mrf.mxu0
      %v1865 = vadd.f32 0.0, %v1864
      %1866 = vmatmul.f32.gmra.mxu0 %v1787
      %v1867 = vpop.f32.mrf.mxu0
      %v1868 = vadd.f32 0.0, %v1867
      %1869 = vmatmul.f32.gmra.mxu0 %v1788
      %v1870 = vpop.f32.mrf.mxu0
      %v1871 = vadd.f32 0.0, %v1870
      %1872 = vmatmul.f32.gmra.mxu0 %v1789
      %v1873 = vpop.f32.mrf.mxu0
      %v1874 = vadd.f32 0.0, %v1873
      %1875 = vmatmul.f32.gmra.mxu0 %v1790
      %v1876 = vpop.f32.mrf.mxu0
      %v1877 = vadd.f32 0.0, %v1876
      %1878 = vmatmul.f32.gmra.mxu0 %v1791
      %v1879 = vpop.f32.mrf.mxu0
      %v1880 = vadd.f32 0.0, %v1879
      %1881 = vmatmul.f32.gmra.mxu0 %v1792
      %v1882 = vpop.f32.mrf.mxu0
      %v1883 = vadd.f32 0.0, %v1882
      %1884 = vmatmul.f32.gmra.mxu0 %v1793
      %v1885 = vpop.f32.mrf.mxu0
      %v1886 = vadd.f32 0.0, %v1885
      %1887 = vmatmul.f32.gmra.mxu0 %v1794
      %v1888 = vpop.f32.mrf.mxu0
      %v1889 = vadd.f32 0.0, %v1888
      %1890 = vmatmul.f32.gmra.mxu0 %v1795
      %v1891 = vpop.f32.mrf.mxu0
      %v1892 = vadd.f32 0.0, %v1891
      %1893 = vmatmul.f32.gmra.mxu0 %v1796
      %v1894 = vpop.f32.mrf.mxu0
      %v1895 = vadd.f32 0.0, %v1894
      %1896 = vmatmul.f32.gmra.mxu0 %v1797
      %v1897 = vpop.f32.mrf.mxu0
      %v1898 = vadd.f32 0.0, %v1897
      %1899 = vmatmul.f32.gmra.mxu0 %v1798
      %v1900 = vpop.f32.mrf.mxu0
      %v1901 = vadd.f32 0.0, %v1900
      %1902 = vmatmul.f32.gmra.mxu0 %v1799
      %v1903 = vpop.f32.mrf.mxu0
      %v1904 = vadd.f32 0.0, %v1903
      %1905 = vmatmul.f32.gmra.mxu0 %v1800
      %v1906 = vpop.f32.mrf.mxu0
      %v1907 = vadd.f32 0.0, %v1906
      %1908 = vmatmul.f32.gmra.mxu0 %v1801
      %v1909 = vpop.f32.mrf.mxu0
      %v1910 = vadd.f32 0.0, %v1909
      %1911 = vmatmul.f32.gmra.mxu0 %v1802
      %v1912 = vpop.f32.mrf.mxu0
      %v1913 = vadd.f32 0.0, %v1912
      %1914 = vmatmul.f32.gmra.mxu0 %v1803
      %v1915 = vpop.f32.mrf.mxu0
      %v1916 = vadd.f32 0.0, %v1915
      %1917 = vmatmul.f32.gmra.mxu0 %v1804
      %v1918 = vpop.f32.mrf.mxu0
      %v1919 = vadd.f32 0.0, %v1918
      %1920 = vmatmul.f32.gmra.mxu0 %v1805
      %v1921 = vpop.f32.mrf.mxu0
      %v1922 = vadd.f32 0.0, %v1921
      %1923 = vmatmul.f32.gmra.mxu0 %v1806
      %v1924 = vpop.f32.mrf.mxu0
      %v1925 = vadd.f32 0.0, %v1924
      %1926 = vmatmul.f32.gmra.mxu0 %v1807
      %v1927 = vpop.f32.mrf.mxu0
      %v1928 = vadd.f32 0.0, %v1927
      %1929 = vmatmul.f32.gmra.mxu0 %v1808
      %v1930 = vpop.f32.mrf.mxu0
      %v1931 = vadd.f32 0.0, %v1930
      %1932 = vmatmul.f32.gmra.mxu0 %v1809
      %v1933 = vpop.f32.mrf.mxu0
      %v1934 = vadd.f32 0.0, %v1933
      %1935 = vmatmul.f32.gmra.mxu0 %v1810
      %v1936 = vpop.f32.mrf.mxu0
      %v1937 = vadd.f32 0.0, %v1936
      %1938 = vmatmul.f32.gmra.mxu0 %v1811
      %v1939 = vpop.f32.mrf.mxu0
      %v1940 = vadd.f32 0.0, %v1939
      %1941 = vmatmul.f32.gmra.mxu0 %v1812
      %v1942 = vpop.f32.mrf.mxu0
      %v1943 = vadd.f32 0.0, %v1942
      %1944 = vmatmul.f32.gmra.mxu0 %v1813
      %v1945 = vpop.f32.mrf.mxu0
      %v1946 = vadd.f32 0.0, %v1945
      %1947 = vmatmul.f32.gmra.mxu0 %v1814
      %v1948 = vpop.f32.mrf.mxu0
      %v1949 = vadd.f32 0.0, %v1948
      %1950 = vmatmul.f32.gmra.mxu0 %v1815
      %v1951 = vpop.f32.mrf.mxu0
      %v1952 = vadd.f32 0.0, %v1951
      %1953 = vmatmul.f32.gmra.mxu0 %v1816
      %v1954 = vpop.f32.mrf.mxu0
      %v1955 = vadd.f32 0.0, %v1954
      %1956 = vmatmul.f32.gmra.mxu0 %v1817
      %v1957 = vpop.f32.mrf.mxu0
      %v1958 = vadd.f32 0.0, %v1957
      %1959 = vdwg.mxu0
      %v1960 = vadd.f32 %v1746, %v1853
      %v1961 = vadd.f32 %v1747, %v1856
      %v1962 = vadd.f32 %v1748, %v1859
      %v1963 = vadd.f32 %v1749, %v1862
      %v1964 = vadd.f32 %v1750, %v1865
      %v1965 = vadd.f32 %v1751, %v1868
      %v1966 = vadd.f32 %v1752, %v1871
      %v1967 = vadd.f32 %v1753, %v1874
      %v1968 = vadd.f32 %v1754, %v1877
      %v1969 = vadd.f32 %v1755, %v1880
      %v1970 = vadd.f32 %v1756, %v1883
      %v1971 = vadd.f32 %v1757, %v1886
      %v1972 = vadd.f32 %v1758, %v1889
      %v1973 = vadd.f32 %v1759, %v1892
      %v1974 = vadd.f32 %v1760, %v1895
      %v1975 = vadd.f32 %v1761, %v1898
      %v1976 = vadd.f32 %v1762, %v1901
      %v1977 = vadd.f32 %v1763, %v1904
      %v1978 = vadd.f32 %v1764, %v1907
      %v1979 = vadd.f32 %v1765, %v1910
      %v1980 = vadd.f32 %v1766, %v1913
      %v1981 = vadd.f32 %v1767, %v1916
      %v1982 = vadd.f32 %v1768, %v1919
      %v1983 = vadd.f32 %v1769, %v1922
      %v1984 = vadd.f32 %v1770, %v1925
      %v1985 = vadd.f32 %v1771, %v1928
      %v1986 = vadd.f32 %v1772, %v1931
      %v1987 = vadd.f32 %v1773, %v1934
      %v1988 = vadd.f32 %v1774, %v1937
      %v1989 = vadd.f32 %v1775, %v1940
      %v1990 = vadd.f32 %v1776, %v1943
      %v1991 = vadd.f32 %v1777, %v1946
      %v1992 = vadd.f32 %v1778, %v1949
      %v1993 = vadd.f32 %v1779, %v1952
      %v1994 = vadd.f32 %v1780, %v1955
      %v1995 = vadd.f32 %v1781, %v1958
      %v1996 = vld [vmem:[#allocation2 + $0x14] sm:$0xff]
      %v1997 = vld [vmem:[#allocation2 + $0x1c] sm:$0xff]
      %v1998 = vld [vmem:[#allocation2 + $0x24] sm:$0xff]
      %v1999 = vld [vmem:[#allocation2 + $0x2c] sm:$0xff]
      %v2000 = vld [vmem:[#allocation2 + $0x34] sm:$0xff]
      %v2001 = vld [vmem:[#allocation2 + $0x3c] sm:$0xff]
      %v2002 = vld [vmem:[#allocation2 + $0x44] sm:$0xff]
      %v2003 = vld [vmem:[#allocation2 + $0x4c] sm:$0xff]
      %v2004 = vld [vmem:[#allocation2 + $0x54] sm:$0xff]
      %v2005 = vld [vmem:[#allocation2 + $0x5c] sm:$0xff]
      %v2006 = vld [vmem:[#allocation2 + $0x64] sm:$0xff]
      %v2007 = vld [vmem:[#allocation2 + $0x6c] sm:$0xff]
      %v2008 = vld [vmem:[#allocation2 + $0x74] sm:$0xff]
      %v2009 = vld [vmem:[#allocation2 + $0x7c] sm:$0xff]
      %v2010 = vld [vmem:[#allocation2 + $0x84] sm:$0xff]
      %v2011 = vld [vmem:[#allocation2 + $0x8c] sm:$0xff]
      %v2012 = vld [vmem:[#allocation2 + $0x94] sm:$0xff]
      %v2013 = vld [vmem:[#allocation2 + $0x9c] sm:$0xff]
      %v2014 = vld [vmem:[#allocation2 + $0xa4] sm:$0xff]
      %v2015 = vld [vmem:[#allocation2 + $0xac] sm:$0xff]
      %v2016 = vld [vmem:[#allocation2 + $0xb4] sm:$0xff]
      %v2017 = vld [vmem:[#allocation2 + $0xbc] sm:$0xff]
      %v2018 = vld [vmem:[#allocation2 + $0xc4] sm:$0xff]
      %v2019 = vld [vmem:[#allocation2 + $0xcc] sm:$0xff]
      %v2020 = vld [vmem:[#allocation2 + $0xd4] sm:$0xff]
      %v2021 = vld [vmem:[#allocation2 + $0xdc] sm:$0xff]
      %v2022 = vld [vmem:[#allocation2 + $0xe4] sm:$0xff]
      %v2023 = vld [vmem:[#allocation2 + $0xec] sm:$0xff]
      %v2024 = vld [vmem:[#allocation2 + $0xf4] sm:$0xff]
      %v2025 = vld [vmem:[#allocation2 + $0xfc] sm:$0xff]
      %v2026 = vld [vmem:[#allocation2 + $0x104] sm:$0xff]
      %v2027 = vld [vmem:[#allocation2 + $0x10c] sm:$0xff]
      %v2028 = vld [vmem:[#allocation2 + $0x114] sm:$0xff]
      %v2029 = vld [vmem:[#allocation2 + $0x11c] sm:$0xff]
      %v2030 = vld [vmem:[#allocation2 + $0x124] sm:$0xff]
      %v2031 = vld [vmem:[#allocation2 + $0x12c] sm:$0xff]
      %s2032 = scalar_lea.vmem %s4, 640
      %v2033 = vld [vmem:[%s2032] sm:$0xff]
      %v2034 = vld [vmem:[%s2032 + $0x8] sm:$0xff]
      %v2035 = vld [vmem:[%s2032 + $0x10] sm:$0xff]
      %v2036 = vld [vmem:[%s2032 + $0x18] sm:$0xff]
      %v2037 = vld [vmem:[%s2032 + $0x20] sm:$0xff]
      %v2038 = vld [vmem:[%s2032 + $0x28] sm:$0xff]
      %v2039 = vld [vmem:[%s2032 + $0x30] sm:$0xff]
      %v2040 = vld [vmem:[%s2032 + $0x38] sm:$0xff]
      %v2041 = vld [vmem:[%s2032 + $0x40] sm:$0xff]
      %v2042 = vld [vmem:[%s2032 + $0x48] sm:$0xff]
      %v2043 = vld [vmem:[%s2032 + $0x50] sm:$0xff]
      %v2044 = vld [vmem:[%s2032 + $0x58] sm:$0xff]
      %v2045 = vld [vmem:[%s2032 + $0x60] sm:$0xff]
      %v2046 = vld [vmem:[%s2032 + $0x68] sm:$0xff]
      %v2047 = vld [vmem:[%s2032 + $0x70] sm:$0xff]
      %v2048 = vld [vmem:[%s2032 + $0x78] sm:$0xff]
      %2049 = vmatpush.msra.mxu0 %v2048
      %2050 = vmatpush.msra.mxu0 %v2047
      %2051 = vmatpush.msra.mxu0 %v2046
      %2052 = vmatpush.msra.mxu0 %v2045
      %2053 = vmatpush.msra.mxu0 %v2044
      %2054 = vmatpush.msra.mxu0 %v2043
      %2055 = vmatpush.msra.mxu0 %v2042
      %2056 = vmatpush.msra.mxu0 %v2041
      %2057 = vmatpush.msra.mxu0 %v2040
      %2058 = vmatpush.msra.mxu0 %v2039
      %2059 = vmatpush.msra.mxu0 %v2038
      %2060 = vmatpush.msra.mxu0 %v2037
      %2061 = vmatpush.msra.mxu0 %v2036
      %2062 = vmatpush.msra.mxu0 %v2035
      %2063 = vmatpush.msra.mxu0 %v2034
      %2064 = vmatpush.msra.mxu0 %v2033
      %2065 = vmatmul.f32.gmra.mxu0 %v1996
      %v2066 = vpop.f32.mrf.mxu0
      %v2067 = vadd.f32 0.0, %v2066
      %2068 = vmatmul.f32.gmra.mxu0 %v1997
      %v2069 = vpop.f32.mrf.mxu0
      %v2070 = vadd.f32 0.0, %v2069
      %2071 = vmatmul.f32.gmra.mxu0 %v1998
      %v2072 = vpop.f32.mrf.mxu0
      %v2073 = vadd.f32 0.0, %v2072
      %2074 = vmatmul.f32.gmra.mxu0 %v1999
      %v2075 = vpop.f32.mrf.mxu0
      %v2076 = vadd.f32 0.0, %v2075
      %2077 = vmatmul.f32.gmra.mxu0 %v2000
      %v2078 = vpop.f32.mrf.mxu0
      %v2079 = vadd.f32 0.0, %v2078
      %2080 = vmatmul.f32.gmra.mxu0 %v2001
      %v2081 = vpop.f32.mrf.mxu0
      %v2082 = vadd.f32 0.0, %v2081
      %2083 = vmatmul.f32.gmra.mxu0 %v2002
      %v2084 = vpop.f32.mrf.mxu0
      %v2085 = vadd.f32 0.0, %v2084
      %2086 = vmatmul.f32.gmra.mxu0 %v2003
      %v2087 = vpop.f32.mrf.mxu0
      %v2088 = vadd.f32 0.0, %v2087
      %2089 = vmatmul.f32.gmra.mxu0 %v2004
      %v2090 = vpop.f32.mrf.mxu0
      %v2091 = vadd.f32 0.0, %v2090
      %2092 = vmatmul.f32.gmra.mxu0 %v2005
      %v2093 = vpop.f32.mrf.mxu0
      %v2094 = vadd.f32 0.0, %v2093
      %2095 = vmatmul.f32.gmra.mxu0 %v2006
      %v2096 = vpop.f32.mrf.mxu0
      %v2097 = vadd.f32 0.0, %v2096
      %2098 = vmatmul.f32.gmra.mxu0 %v2007
      %v2099 = vpop.f32.mrf.mxu0
      %v2100 = vadd.f32 0.0, %v2099
      %2101 = vmatmul.f32.gmra.mxu0 %v2008
      %v2102 = vpop.f32.mrf.mxu0
      %v2103 = vadd.f32 0.0, %v2102
      %2104 = vmatmul.f32.gmra.mxu0 %v2009
      %v2105 = vpop.f32.mrf.mxu0
      %v2106 = vadd.f32 0.0, %v2105
      %2107 = vmatmul.f32.gmra.mxu0 %v2010
      %v2108 = vpop.f32.mrf.mxu0
      %v2109 = vadd.f32 0.0, %v2108
      %2110 = vmatmul.f32.gmra.mxu0 %v2011
      %v2111 = vpop.f32.mrf.mxu0
      %v2112 = vadd.f32 0.0, %v2111
      %2113 = vmatmul.f32.gmra.mxu0 %v2012
      %v2114 = vpop.f32.mrf.mxu0
      %v2115 = vadd.f32 0.0, %v2114
      %2116 = vmatmul.f32.gmra.mxu0 %v2013
      %v2117 = vpop.f32.mrf.mxu0
      %v2118 = vadd.f32 0.0, %v2117
      %2119 = vmatmul.f32.gmra.mxu0 %v2014
      %v2120 = vpop.f32.mrf.mxu0
      %v2121 = vadd.f32 0.0, %v2120
      %2122 = vmatmul.f32.gmra.mxu0 %v2015
      %v2123 = vpop.f32.mrf.mxu0
      %v2124 = vadd.f32 0.0, %v2123
      %2125 = vmatmul.f32.gmra.mxu0 %v2016
      %v2126 = vpop.f32.mrf.mxu0
      %v2127 = vadd.f32 0.0, %v2126
      %2128 = vmatmul.f32.gmra.mxu0 %v2017
      %v2129 = vpop.f32.mrf.mxu0
      %v2130 = vadd.f32 0.0, %v2129
      %2131 = vmatmul.f32.gmra.mxu0 %v2018
      %v2132 = vpop.f32.mrf.mxu0
      %v2133 = vadd.f32 0.0, %v2132
      %2134 = vmatmul.f32.gmra.mxu0 %v2019
      %v2135 = vpop.f32.mrf.mxu0
      %v2136 = vadd.f32 0.0, %v2135
      %2137 = vmatmul.f32.gmra.mxu0 %v2020
      %v2138 = vpop.f32.mrf.mxu0
      %v2139 = vadd.f32 0.0, %v2138
      %2140 = vmatmul.f32.gmra.mxu0 %v2021
      %v2141 = vpop.f32.mrf.mxu0
      %v2142 = vadd.f32 0.0, %v2141
      %2143 = vmatmul.f32.gmra.mxu0 %v2022
      %v2144 = vpop.f32.mrf.mxu0
      %v2145 = vadd.f32 0.0, %v2144
      %2146 = vmatmul.f32.gmra.mxu0 %v2023
      %v2147 = vpop.f32.mrf.mxu0
      %v2148 = vadd.f32 0.0, %v2147
      %2149 = vmatmul.f32.gmra.mxu0 %v2024
      %v2150 = vpop.f32.mrf.mxu0
      %v2151 = vadd.f32 0.0, %v2150
      %2152 = vmatmul.f32.gmra.mxu0 %v2025
      %v2153 = vpop.f32.mrf.mxu0
      %v2154 = vadd.f32 0.0, %v2153
      %2155 = vmatmul.f32.gmra.mxu0 %v2026
      %v2156 = vpop.f32.mrf.mxu0
      %v2157 = vadd.f32 0.0, %v2156
      %2158 = vmatmul.f32.gmra.mxu0 %v2027
      %v2159 = vpop.f32.mrf.mxu0
      %v2160 = vadd.f32 0.0, %v2159
      %2161 = vmatmul.f32.gmra.mxu0 %v2028
      %v2162 = vpop.f32.mrf.mxu0
      %v2163 = vadd.f32 0.0, %v2162
      %2164 = vmatmul.f32.gmra.mxu0 %v2029
      %v2165 = vpop.f32.mrf.mxu0
      %v2166 = vadd.f32 0.0, %v2165
      %2167 = vmatmul.f32.gmra.mxu0 %v2030
      %v2168 = vpop.f32.mrf.mxu0
      %v2169 = vadd.f32 0.0, %v2168
      %2170 = vmatmul.f32.gmra.mxu0 %v2031
      %v2171 = vpop.f32.mrf.mxu0
      %v2172 = vadd.f32 0.0, %v2171
      %2173 = vdwg.mxu0
      %v2174 = vadd.f32 %v1960, %v2067
      %v2175 = vadd.f32 %v1961, %v2070
      %v2176 = vadd.f32 %v1962, %v2073
      %v2177 = vadd.f32 %v1963, %v2076
      %v2178 = vadd.f32 %v1964, %v2079
      %v2179 = vadd.f32 %v1965, %v2082
      %v2180 = vadd.f32 %v1966, %v2085
      %v2181 = vadd.f32 %v1967, %v2088
      %v2182 = vadd.f32 %v1968, %v2091
      %v2183 = vadd.f32 %v1969, %v2094
      %v2184 = vadd.f32 %v1970, %v2097
      %v2185 = vadd.f32 %v1971, %v2100
      %v2186 = vadd.f32 %v1972, %v2103
      %v2187 = vadd.f32 %v1973, %v2106
      %v2188 = vadd.f32 %v1974, %v2109
      %v2189 = vadd.f32 %v1975, %v2112
      %v2190 = vadd.f32 %v1976, %v2115
      %v2191 = vadd.f32 %v1977, %v2118
      %v2192 = vadd.f32 %v1978, %v2121
      %v2193 = vadd.f32 %v1979, %v2124
      %v2194 = vadd.f32 %v1980, %v2127
      %v2195 = vadd.f32 %v1981, %v2130
      %v2196 = vadd.f32 %v1982, %v2133
      %v2197 = vadd.f32 %v1983, %v2136
      %v2198 = vadd.f32 %v1984, %v2139
      %v2199 = vadd.f32 %v1985, %v2142
      %v2200 = vadd.f32 %v1986, %v2145
      %v2201 = vadd.f32 %v1987, %v2148
      %v2202 = vadd.f32 %v1988, %v2151
      %v2203 = vadd.f32 %v1989, %v2154
      %v2204 = vadd.f32 %v1990, %v2157
      %v2205 = vadd.f32 %v1991, %v2160
      %v2206 = vadd.f32 %v1992, %v2163
      %v2207 = vadd.f32 %v1993, %v2166
      %v2208 = vadd.f32 %v1994, %v2169
      %v2209 = vadd.f32 %v1995, %v2172
      %v2210 = vld [vmem:[#allocation2 + $0x24] sm:$0xff]
      %v2211 = vld [vmem:[#allocation2 + $0x2c] sm:$0xff]
      %v2212 = vld [vmem:[#allocation2 + $0x34] sm:$0xff]
      %v2213 = vld [vmem:[#allocation2 + $0x3c] sm:$0xff]
      %v2214 = vld [vmem:[#allocation2 + $0x44] sm:$0xff]
      %v2215 = vld [vmem:[#allocation2 + $0x4c] sm:$0xff]
      %v2216 = vld [vmem:[#allocation2 + $0x54] sm:$0xff]
      %v2217 = vld [vmem:[#allocation2 + $0x5c] sm:$0xff]
      %v2218 = vld [vmem:[#allocation2 + $0x64] sm:$0xff]
      %v2219 = vld [vmem:[#allocation2 + $0x6c] sm:$0xff]
      %v2220 = vld [vmem:[#allocation2 + $0x74] sm:$0xff]
      %v2221 = vld [vmem:[#allocation2 + $0x7c] sm:$0xff]
      %v2222 = vld [vmem:[#allocation2 + $0x84] sm:$0xff]
      %v2223 = vld [vmem:[#allocation2 + $0x8c] sm:$0xff]
      %v2224 = vld [vmem:[#allocation2 + $0x94] sm:$0xff]
      %v2225 = vld [vmem:[#allocation2 + $0x9c] sm:$0xff]
      %v2226 = vld [vmem:[#allocation2 + $0xa4] sm:$0xff]
      %v2227 = vld [vmem:[#allocation2 + $0xac] sm:$0xff]
      %v2228 = vld [vmem:[#allocation2 + $0xb4] sm:$0xff]
      %v2229 = vld [vmem:[#allocation2 + $0xbc] sm:$0xff]
      %v2230 = vld [vmem:[#allocation2 + $0xc4] sm:$0xff]
      %v2231 = vld [vmem:[#allocation2 + $0xcc] sm:$0xff]
      %v2232 = vld [vmem:[#allocation2 + $0xd4] sm:$0xff]
      %v2233 = vld [vmem:[#allocation2 + $0xdc] sm:$0xff]
      %v2234 = vld [vmem:[#allocation2 + $0xe4] sm:$0xff]
      %v2235 = vld [vmem:[#allocation2 + $0xec] sm:$0xff]
      %v2236 = vld [vmem:[#allocation2 + $0xf4] sm:$0xff]
      %v2237 = vld [vmem:[#allocation2 + $0xfc] sm:$0xff]
      %v2238 = vld [vmem:[#allocation2 + $0x104] sm:$0xff]
      %v2239 = vld [vmem:[#allocation2 + $0x10c] sm:$0xff]
      %v2240 = vld [vmem:[#allocation2 + $0x114] sm:$0xff]
      %v2241 = vld [vmem:[#allocation2 + $0x11c] sm:$0xff]
      %v2242 = vld [vmem:[#allocation2 + $0x124] sm:$0xff]
      %v2243 = vld [vmem:[#allocation2 + $0x12c] sm:$0xff]
      %v2244 = vld [vmem:[#allocation2 + $0x134] sm:$0xff]
      %v2245 = vld [vmem:[#allocation2 + $0x13c] sm:$0xff]
      %s2246 = scalar_lea.vmem %s4, 768
      %v2247 = vld [vmem:[%s2246] sm:$0xff]
      %v2248 = vld [vmem:[%s2246 + $0x8] sm:$0xff]
      %v2249 = vld [vmem:[%s2246 + $0x10] sm:$0xff]
      %v2250 = vld [vmem:[%s2246 + $0x18] sm:$0xff]
      %v2251 = vld [vmem:[%s2246 + $0x20] sm:$0xff]
      %v2252 = vld [vmem:[%s2246 + $0x28] sm:$0xff]
      %v2253 = vld [vmem:[%s2246 + $0x30] sm:$0xff]
      %v2254 = vld [vmem:[%s2246 + $0x38] sm:$0xff]
      %v2255 = vld [vmem:[%s2246 + $0x40] sm:$0xff]
      %v2256 = vld [vmem:[%s2246 + $0x48] sm:$0xff]
      %v2257 = vld [vmem:[%s2246 + $0x50] sm:$0xff]
      %v2258 = vld [vmem:[%s2246 + $0x58] sm:$0xff]
      %v2259 = vld [vmem:[%s2246 + $0x60] sm:$0xff]
      %v2260 = vld [vmem:[%s2246 + $0x68] sm:$0xff]
      %v2261 = vld [vmem:[%s2246 + $0x70] sm:$0xff]
      %v2262 = vld [vmem:[%s2246 + $0x78] sm:$0xff]
      %2263 = vmatpush.msra.mxu0 %v2262
      %2264 = vmatpush.msra.mxu0 %v2261
      %2265 = vmatpush.msra.mxu0 %v2260
      %2266 = vmatpush.msra.mxu0 %v2259
      %2267 = vmatpush.msra.mxu0 %v2258
      %2268 = vmatpush.msra.mxu0 %v2257
      %2269 = vmatpush.msra.mxu0 %v2256
      %2270 = vmatpush.msra.mxu0 %v2255
      %2271 = vmatpush.msra.mxu0 %v2254
      %2272 = vmatpush.msra.mxu0 %v2253
      %2273 = vmatpush.msra.mxu0 %v2252
      %2274 = vmatpush.msra.mxu0 %v2251
      %2275 = vmatpush.msra.mxu0 %v2250
      %2276 = vmatpush.msra.mxu0 %v2249
      %2277 = vmatpush.msra.mxu0 %v2248
      %2278 = vmatpush.msra.mxu0 %v2247
      %2279 = vmatmul.f32.gmra.mxu0 %v2210
      %v2280 = vpop.f32.mrf.mxu0
      %v2281 = vadd.f32 0.0, %v2280
      %2282 = vmatmul.f32.gmra.mxu0 %v2211
      %v2283 = vpop.f32.mrf.mxu0
      %v2284 = vadd.f32 0.0, %v2283
      %2285 = vmatmul.f32.gmra.mxu0 %v2212
      %v2286 = vpop.f32.mrf.mxu0
      %v2287 = vadd.f32 0.0, %v2286
      %2288 = vmatmul.f32.gmra.mxu0 %v2213
      %v2289 = vpop.f32.mrf.mxu0
      %v2290 = vadd.f32 0.0, %v2289
      %2291 = vmatmul.f32.gmra.mxu0 %v2214
      %v2292 = vpop.f32.mrf.mxu0
      %v2293 = vadd.f32 0.0, %v2292
      %2294 = vmatmul.f32.gmra.mxu0 %v2215
      %v2295 = vpop.f32.mrf.mxu0
      %v2296 = vadd.f32 0.0, %v2295
      %2297 = vmatmul.f32.gmra.mxu0 %v2216
      %v2298 = vpop.f32.mrf.mxu0
      %v2299 = vadd.f32 0.0, %v2298
      %2300 = vmatmul.f32.gmra.mxu0 %v2217
      %v2301 = vpop.f32.mrf.mxu0
      %v2302 = vadd.f32 0.0, %v2301
      %2303 = vmatmul.f32.gmra.mxu0 %v2218
      %v2304 = vpop.f32.mrf.mxu0
      %v2305 = vadd.f32 0.0, %v2304
      %2306 = vmatmul.f32.gmra.mxu0 %v2219
      %v2307 = vpop.f32.mrf.mxu0
      %v2308 = vadd.f32 0.0, %v2307
      %2309 = vmatmul.f32.gmra.mxu0 %v2220
      %v2310 = vpop.f32.mrf.mxu0
      %v2311 = vadd.f32 0.0, %v2310
      %2312 = vmatmul.f32.gmra.mxu0 %v2221
      %v2313 = vpop.f32.mrf.mxu0
      %v2314 = vadd.f32 0.0, %v2313
      %2315 = vmatmul.f32.gmra.mxu0 %v2222
      %v2316 = vpop.f32.mrf.mxu0
      %v2317 = vadd.f32 0.0, %v2316
      %2318 = vmatmul.f32.gmra.mxu0 %v2223
      %v2319 = vpop.f32.mrf.mxu0
      %v2320 = vadd.f32 0.0, %v2319
      %2321 = vmatmul.f32.gmra.mxu0 %v2224
      %v2322 = vpop.f32.mrf.mxu0
      %v2323 = vadd.f32 0.0, %v2322
      %2324 = vmatmul.f32.gmra.mxu0 %v2225
      %v2325 = vpop.f32.mrf.mxu0
      %v2326 = vadd.f32 0.0, %v2325
      %2327 = vmatmul.f32.gmra.mxu0 %v2226
      %v2328 = vpop.f32.mrf.mxu0
      %v2329 = vadd.f32 0.0, %v2328
      %2330 = vmatmul.f32.gmra.mxu0 %v2227
      %v2331 = vpop.f32.mrf.mxu0
      %v2332 = vadd.f32 0.0, %v2331
      %2333 = vmatmul.f32.gmra.mxu0 %v2228
      %v2334 = vpop.f32.mrf.mxu0
      %v2335 = vadd.f32 0.0, %v2334
      %2336 = vmatmul.f32.gmra.mxu0 %v2229
      %v2337 = vpop.f32.mrf.mxu0
      %v2338 = vadd.f32 0.0, %v2337
      %2339 = vmatmul.f32.gmra.mxu0 %v2230
      %v2340 = vpop.f32.mrf.mxu0
      %v2341 = vadd.f32 0.0, %v2340
      %2342 = vmatmul.f32.gmra.mxu0 %v2231
      %v2343 = vpop.f32.mrf.mxu0
      %v2344 = vadd.f32 0.0, %v2343
      %2345 = vmatmul.f32.gmra.mxu0 %v2232
      %v2346 = vpop.f32.mrf.mxu0
      %v2347 = vadd.f32 0.0, %v2346
      %2348 = vmatmul.f32.gmra.mxu0 %v2233
      %v2349 = vpop.f32.mrf.mxu0
      %v2350 = vadd.f32 0.0, %v2349
      %2351 = vmatmul.f32.gmra.mxu0 %v2234
      %v2352 = vpop.f32.mrf.mxu0
      %v2353 = vadd.f32 0.0, %v2352
      %2354 = vmatmul.f32.gmra.mxu0 %v2235
      %v2355 = vpop.f32.mrf.mxu0
      %v2356 = vadd.f32 0.0, %v2355
      %2357 = vmatmul.f32.gmra.mxu0 %v2236
      %v2358 = vpop.f32.mrf.mxu0
      %v2359 = vadd.f32 0.0, %v2358
      %2360 = vmatmul.f32.gmra.mxu0 %v2237
      %v2361 = vpop.f32.mrf.mxu0
      %v2362 = vadd.f32 0.0, %v2361
      %2363 = vmatmul.f32.gmra.mxu0 %v2238
      %v2364 = vpop.f32.mrf.mxu0
      %v2365 = vadd.f32 0.0, %v2364
      %2366 = vmatmul.f32.gmra.mxu0 %v2239
      %v2367 = vpop.f32.mrf.mxu0
      %v2368 = vadd.f32 0.0, %v2367
      %2369 = vmatmul.f32.gmra.mxu0 %v2240
      %v2370 = vpop.f32.mrf.mxu0
      %v2371 = vadd.f32 0.0, %v2370
      %2372 = vmatmul.f32.gmra.mxu0 %v2241
      %v2373 = vpop.f32.mrf.mxu0
      %v2374 = vadd.f32 0.0, %v2373
      %2375 = vmatmul.f32.gmra.mxu0 %v2242
      %v2376 = vpop.f32.mrf.mxu0
      %v2377 = vadd.f32 0.0, %v2376
      %2378 = vmatmul.f32.gmra.mxu0 %v2243
      %v2379 = vpop.f32.mrf.mxu0
      %v2380 = vadd.f32 0.0, %v2379
      %2381 = vmatmul.f32.gmra.mxu0 %v2244
      %v2382 = vpop.f32.mrf.mxu0
      %v2383 = vadd.f32 0.0, %v2382
      %2384 = vmatmul.f32.gmra.mxu0 %v2245
      %v2385 = vpop.f32.mrf.mxu0
      %v2386 = vadd.f32 0.0, %v2385
      %2387 = vdwg.mxu0
      %v2388 = vadd.f32 %v2174, %v2281
      %v2389 = vadd.f32 %v2175, %v2284
      %v2390 = vadd.f32 %v2176, %v2287
      %v2391 = vadd.f32 %v2177, %v2290
      %v2392 = vadd.f32 %v2178, %v2293
      %v2393 = vadd.f32 %v2179, %v2296
      %v2394 = vadd.f32 %v2180, %v2299
      %v2395 = vadd.f32 %v2181, %v2302
      %v2396 = vadd.f32 %v2182, %v2305
      %v2397 = vadd.f32 %v2183, %v2308
      %v2398 = vadd.f32 %v2184, %v2311
      %v2399 = vadd.f32 %v2185, %v2314
      %v2400 = vadd.f32 %v2186, %v2317
      %v2401 = vadd.f32 %v2187, %v2320
      %v2402 = vadd.f32 %v2188, %v2323
      %v2403 = vadd.f32 %v2189, %v2326
      %v2404 = vadd.f32 %v2190, %v2329
      %v2405 = vadd.f32 %v2191, %v2332
      %v2406 = vadd.f32 %v2192, %v2335
      %v2407 = vadd.f32 %v2193, %v2338
      %v2408 = vadd.f32 %v2194, %v2341
      %v2409 = vadd.f32 %v2195, %v2344
      %v2410 = vadd.f32 %v2196, %v2347
      %v2411 = vadd.f32 %v2197, %v2350
      %v2412 = vadd.f32 %v2198, %v2353
      %v2413 = vadd.f32 %v2199, %v2356
      %v2414 = vadd.f32 %v2200, %v2359
      %v2415 = vadd.f32 %v2201, %v2362
      %v2416 = vadd.f32 %v2202, %v2365
      %v2417 = vadd.f32 %v2203, %v2368
      %v2418 = vadd.f32 %v2204, %v2371
      %v2419 = vadd.f32 %v2205, %v2374
      %v2420 = vadd.f32 %v2206, %v2377
      %v2421 = vadd.f32 %v2207, %v2380
      %v2422 = vadd.f32 %v2208, %v2383
      %v2423 = vadd.f32 %v2209, %v2386
      %v2424 = vld [vmem:[#allocation2 + $0x25] sm:$0xff]
      %v2425 = vld [vmem:[#allocation2 + $0x2d] sm:$0xff]
      %v2426 = vld [vmem:[#allocation2 + $0x35] sm:$0xff]
      %v2427 = vld [vmem:[#allocation2 + $0x3d] sm:$0xff]
      %v2428 = vld [vmem:[#allocation2 + $0x45] sm:$0xff]
      %v2429 = vld [vmem:[#allocation2 + $0x4d] sm:$0xff]
      %v2430 = vld [vmem:[#allocation2 + $0x55] sm:$0xff]
      %v2431 = vld [vmem:[#allocation2 + $0x5d] sm:$0xff]
      %v2432 = vld [vmem:[#allocation2 + $0x65] sm:$0xff]
      %v2433 = vld [vmem:[#allocation2 + $0x6d] sm:$0xff]
      %v2434 = vld [vmem:[#allocation2 + $0x75] sm:$0xff]
      %v2435 = vld [vmem:[#allocation2 + $0x7d] sm:$0xff]
      %v2436 = vld [vmem:[#allocation2 + $0x85] sm:$0xff]
      %v2437 = vld [vmem:[#allocation2 + $0x8d] sm:$0xff]
      %v2438 = vld [vmem:[#allocation2 + $0x95] sm:$0xff]
      %v2439 = vld [vmem:[#allocation2 + $0x9d] sm:$0xff]
      %v2440 = vld [vmem:[#allocation2 + $0xa5] sm:$0xff]
      %v2441 = vld [vmem:[#allocation2 + $0xad] sm:$0xff]
      %v2442 = vld [vmem:[#allocation2 + $0xb5] sm:$0xff]
      %v2443 = vld [vmem:[#allocation2 + $0xbd] sm:$0xff]
      %v2444 = vld [vmem:[#allocation2 + $0xc5] sm:$0xff]
      %v2445 = vld [vmem:[#allocation2 + $0xcd] sm:$0xff]
      %v2446 = vld [vmem:[#allocation2 + $0xd5] sm:$0xff]
      %v2447 = vld [vmem:[#allocation2 + $0xdd] sm:$0xff]
      %v2448 = vld [vmem:[#allocation2 + $0xe5] sm:$0xff]
      %v2449 = vld [vmem:[#allocation2 + $0xed] sm:$0xff]
      %v2450 = vld [vmem:[#allocation2 + $0xf5] sm:$0xff]
      %v2451 = vld [vmem:[#allocation2 + $0xfd] sm:$0xff]
      %v2452 = vld [vmem:[#allocation2 + $0x105] sm:$0xff]
      %v2453 = vld [vmem:[#allocation2 + $0x10d] sm:$0xff]
      %v2454 = vld [vmem:[#allocation2 + $0x115] sm:$0xff]
      %v2455 = vld [vmem:[#allocation2 + $0x11d] sm:$0xff]
      %v2456 = vld [vmem:[#allocation2 + $0x125] sm:$0xff]
      %v2457 = vld [vmem:[#allocation2 + $0x12d] sm:$0xff]
      %v2458 = vld [vmem:[#allocation2 + $0x135] sm:$0xff]
      %v2459 = vld [vmem:[#allocation2 + $0x13d] sm:$0xff]
      %s2460 = scalar_lea.vmem %s4, 896
      %v2461 = vld [vmem:[%s2460] sm:$0xff]
      %v2462 = vld [vmem:[%s2460 + $0x8] sm:$0xff]
      %v2463 = vld [vmem:[%s2460 + $0x10] sm:$0xff]
      %v2464 = vld [vmem:[%s2460 + $0x18] sm:$0xff]
      %v2465 = vld [vmem:[%s2460 + $0x20] sm:$0xff]
      %v2466 = vld [vmem:[%s2460 + $0x28] sm:$0xff]
      %v2467 = vld [vmem:[%s2460 + $0x30] sm:$0xff]
      %v2468 = vld [vmem:[%s2460 + $0x38] sm:$0xff]
      %v2469 = vld [vmem:[%s2460 + $0x40] sm:$0xff]
      %v2470 = vld [vmem:[%s2460 + $0x48] sm:$0xff]
      %v2471 = vld [vmem:[%s2460 + $0x50] sm:$0xff]
      %v2472 = vld [vmem:[%s2460 + $0x58] sm:$0xff]
      %v2473 = vld [vmem:[%s2460 + $0x60] sm:$0xff]
      %v2474 = vld [vmem:[%s2460 + $0x68] sm:$0xff]
      %v2475 = vld [vmem:[%s2460 + $0x70] sm:$0xff]
      %v2476 = vld [vmem:[%s2460 + $0x78] sm:$0xff]
      %2477 = vmatpush.msra.mxu0 %v2476
      %2478 = vmatpush.msra.mxu0 %v2475
      %2479 = vmatpush.msra.mxu0 %v2474
      %2480 = vmatpush.msra.mxu0 %v2473
      %2481 = vmatpush.msra.mxu0 %v2472
      %2482 = vmatpush.msra.mxu0 %v2471
      %2483 = vmatpush.msra.mxu0 %v2470
      %2484 = vmatpush.msra.mxu0 %v2469
      %2485 = vmatpush.msra.mxu0 %v2468
      %2486 = vmatpush.msra.mxu0 %v2467
      %2487 = vmatpush.msra.mxu0 %v2466
      %2488 = vmatpush.msra.mxu0 %v2465
      %2489 = vmatpush.msra.mxu0 %v2464
      %2490 = vmatpush.msra.mxu0 %v2463
      %2491 = vmatpush.msra.mxu0 %v2462
      %2492 = vmatpush.msra.mxu0 %v2461
      %2493 = vmatmul.f32.gmra.mxu0 %v2424
      %v2494 = vpop.f32.mrf.mxu0
      %v2495 = vadd.f32 0.0, %v2494
      %2496 = vmatmul.f32.gmra.mxu0 %v2425
      %v2497 = vpop.f32.mrf.mxu0
      %v2498 = vadd.f32 0.0, %v2497
      %2499 = vmatmul.f32.gmra.mxu0 %v2426
      %v2500 = vpop.f32.mrf.mxu0
      %v2501 = vadd.f32 0.0, %v2500
      %2502 = vmatmul.f32.gmra.mxu0 %v2427
      %v2503 = vpop.f32.mrf.mxu0
      %v2504 = vadd.f32 0.0, %v2503
      %2505 = vmatmul.f32.gmra.mxu0 %v2428
      %v2506 = vpop.f32.mrf.mxu0
      %v2507 = vadd.f32 0.0, %v2506
      %2508 = vmatmul.f32.gmra.mxu0 %v2429
      %v2509 = vpop.f32.mrf.mxu0
      %v2510 = vadd.f32 0.0, %v2509
      %2511 = vmatmul.f32.gmra.mxu0 %v2430
      %v2512 = vpop.f32.mrf.mxu0
      %v2513 = vadd.f32 0.0, %v2512
      %2514 = vmatmul.f32.gmra.mxu0 %v2431
      %v2515 = vpop.f32.mrf.mxu0
      %v2516 = vadd.f32 0.0, %v2515
      %2517 = vmatmul.f32.gmra.mxu0 %v2432
      %v2518 = vpop.f32.mrf.mxu0
      %v2519 = vadd.f32 0.0, %v2518
      %2520 = vmatmul.f32.gmra.mxu0 %v2433
      %v2521 = vpop.f32.mrf.mxu0
      %v2522 = vadd.f32 0.0, %v2521
      %2523 = vmatmul.f32.gmra.mxu0 %v2434
      %v2524 = vpop.f32.mrf.mxu0
      %v2525 = vadd.f32 0.0, %v2524
      %2526 = vmatmul.f32.gmra.mxu0 %v2435
      %v2527 = vpop.f32.mrf.mxu0
      %v2528 = vadd.f32 0.0, %v2527
      %2529 = vmatmul.f32.gmra.mxu0 %v2436
      %v2530 = vpop.f32.mrf.mxu0
      %v2531 = vadd.f32 0.0, %v2530
      %2532 = vmatmul.f32.gmra.mxu0 %v2437
      %v2533 = vpop.f32.mrf.mxu0
      %v2534 = vadd.f32 0.0, %v2533
      %2535 = vmatmul.f32.gmra.mxu0 %v2438
      %v2536 = vpop.f32.mrf.mxu0
      %v2537 = vadd.f32 0.0, %v2536
      %2538 = vmatmul.f32.gmra.mxu0 %v2439
      %v2539 = vpop.f32.mrf.mxu0
      %v2540 = vadd.f32 0.0, %v2539
      %2541 = vmatmul.f32.gmra.mxu0 %v2440
      %v2542 = vpop.f32.mrf.mxu0
      %v2543 = vadd.f32 0.0, %v2542
      %2544 = vmatmul.f32.gmra.mxu0 %v2441
      %v2545 = vpop.f32.mrf.mxu0
      %v2546 = vadd.f32 0.0, %v2545
      %2547 = vmatmul.f32.gmra.mxu0 %v2442
      %v2548 = vpop.f32.mrf.mxu0
      %v2549 = vadd.f32 0.0, %v2548
      %2550 = vmatmul.f32.gmra.mxu0 %v2443
      %v2551 = vpop.f32.mrf.mxu0
      %v2552 = vadd.f32 0.0, %v2551
      %2553 = vmatmul.f32.gmra.mxu0 %v2444
      %v2554 = vpop.f32.mrf.mxu0
      %v2555 = vadd.f32 0.0, %v2554
      %2556 = vmatmul.f32.gmra.mxu0 %v2445
      %v2557 = vpop.f32.mrf.mxu0
      %v2558 = vadd.f32 0.0, %v2557
      %2559 = vmatmul.f32.gmra.mxu0 %v2446
      %v2560 = vpop.f32.mrf.mxu0
      %v2561 = vadd.f32 0.0, %v2560
      %2562 = vmatmul.f32.gmra.mxu0 %v2447
      %v2563 = vpop.f32.mrf.mxu0
      %v2564 = vadd.f32 0.0, %v2563
      %2565 = vmatmul.f32.gmra.mxu0 %v2448
      %v2566 = vpop.f32.mrf.mxu0
      %v2567 = vadd.f32 0.0, %v2566
      %2568 = vmatmul.f32.gmra.mxu0 %v2449
      %v2569 = vpop.f32.mrf.mxu0
      %v2570 = vadd.f32 0.0, %v2569
      %2571 = vmatmul.f32.gmra.mxu0 %v2450
      %v2572 = vpop.f32.mrf.mxu0
      %v2573 = vadd.f32 0.0, %v2572
      %2574 = vmatmul.f32.gmra.mxu0 %v2451
      %v2575 = vpop.f32.mrf.mxu0
      %v2576 = vadd.f32 0.0, %v2575
      %2577 = vmatmul.f32.gmra.mxu0 %v2452
      %v2578 = vpop.f32.mrf.mxu0
      %v2579 = vadd.f32 0.0, %v2578
      %2580 = vmatmul.f32.gmra.mxu0 %v2453
      %v2581 = vpop.f32.mrf.mxu0
      %v2582 = vadd.f32 0.0, %v2581
      %2583 = vmatmul.f32.gmra.mxu0 %v2454
      %v2584 = vpop.f32.mrf.mxu0
      %v2585 = vadd.f32 0.0, %v2584
      %2586 = vmatmul.f32.gmra.mxu0 %v2455
      %v2587 = vpop.f32.mrf.mxu0
      %v2588 = vadd.f32 0.0, %v2587
      %2589 = vmatmul.f32.gmra.mxu0 %v2456
      %v2590 = vpop.f32.mrf.mxu0
      %v2591 = vadd.f32 0.0, %v2590
      %2592 = vmatmul.f32.gmra.mxu0 %v2457
      %v2593 = vpop.f32.mrf.mxu0
      %v2594 = vadd.f32 0.0, %v2593
      %2595 = vmatmul.f32.gmra.mxu0 %v2458
      %v2596 = vpop.f32.mrf.mxu0
      %v2597 = vadd.f32 0.0, %v2596
      %2598 = vmatmul.f32.gmra.mxu0 %v2459
      %v2599 = vpop.f32.mrf.mxu0
      %v2600 = vadd.f32 0.0, %v2599
      %2601 = vdwg.mxu0
      %v2602 = vadd.f32 %v2388, %v2495
      %v2603 = vadd.f32 %v2389, %v2498
      %v2604 = vadd.f32 %v2390, %v2501
      %v2605 = vadd.f32 %v2391, %v2504
      %v2606 = vadd.f32 %v2392, %v2507
      %v2607 = vadd.f32 %v2393, %v2510
      %v2608 = vadd.f32 %v2394, %v2513
      %v2609 = vadd.f32 %v2395, %v2516
      %v2610 = vadd.f32 %v2396, %v2519
      %v2611 = vadd.f32 %v2397, %v2522
      %v2612 = vadd.f32 %v2398, %v2525
      %v2613 = vadd.f32 %v2399, %v2528
      %v2614 = vadd.f32 %v2400, %v2531
      %v2615 = vadd.f32 %v2401, %v2534
      %v2616 = vadd.f32 %v2402, %v2537
      %v2617 = vadd.f32 %v2403, %v2540
      %v2618 = vadd.f32 %v2404, %v2543
      %v2619 = vadd.f32 %v2405, %v2546
      %v2620 = vadd.f32 %v2406, %v2549
      %v2621 = vadd.f32 %v2407, %v2552
      %v2622 = vadd.f32 %v2408, %v2555
      %v2623 = vadd.f32 %v2409, %v2558
      %v2624 = vadd.f32 %v2410, %v2561
      %v2625 = vadd.f32 %v2411, %v2564
      %v2626 = vadd.f32 %v2412, %v2567
      %v2627 = vadd.f32 %v2413, %v2570
      %v2628 = vadd.f32 %v2414, %v2573
      %v2629 = vadd.f32 %v2415, %v2576
      %v2630 = vadd.f32 %v2416, %v2579
      %v2631 = vadd.f32 %v2417, %v2582
      %v2632 = vadd.f32 %v2418, %v2585
      %v2633 = vadd.f32 %v2419, %v2588
      %v2634 = vadd.f32 %v2420, %v2591
      %v2635 = vadd.f32 %v2421, %v2594
      %v2636 = vadd.f32 %v2422, %v2597
      %v2637 = vadd.f32 %v2423, %v2600
      %v2638 = vld [vmem:[#allocation2 + $0x26] sm:$0xff]
      %v2639 = vld [vmem:[#allocation2 + $0x2e] sm:$0xff]
      %v2640 = vld [vmem:[#allocation2 + $0x36] sm:$0xff]
      %v2641 = vld [vmem:[#allocation2 + $0x3e] sm:$0xff]
      %v2642 = vld [vmem:[#allocation2 + $0x46] sm:$0xff]
      %v2643 = vld [vmem:[#allocation2 + $0x4e] sm:$0xff]
      %v2644 = vld [vmem:[#allocation2 + $0x56] sm:$0xff]
      %v2645 = vld [vmem:[#allocation2 + $0x5e] sm:$0xff]
      %v2646 = vld [vmem:[#allocation2 + $0x66] sm:$0xff]
      %v2647 = vld [vmem:[#allocation2 + $0x6e] sm:$0xff]
      %v2648 = vld [vmem:[#allocation2 + $0x76] sm:$0xff]
      %v2649 = vld [vmem:[#allocation2 + $0x7e] sm:$0xff]
      %v2650 = vld [vmem:[#allocation2 + $0x86] sm:$0xff]
      %v2651 = vld [vmem:[#allocation2 + $0x8e] sm:$0xff]
      %v2652 = vld [vmem:[#allocation2 + $0x96] sm:$0xff]
      %v2653 = vld [vmem:[#allocation2 + $0x9e] sm:$0xff]
      %v2654 = vld [vmem:[#allocation2 + $0xa6] sm:$0xff]
      %v2655 = vld [vmem:[#allocation2 + $0xae] sm:$0xff]
      %v2656 = vld [vmem:[#allocation2 + $0xb6] sm:$0xff]
      %v2657 = vld [vmem:[#allocation2 + $0xbe] sm:$0xff]
      %v2658 = vld [vmem:[#allocation2 + $0xc6] sm:$0xff]
      %v2659 = vld [vmem:[#allocation2 + $0xce] sm:$0xff]
      %v2660 = vld [vmem:[#allocation2 + $0xd6] sm:$0xff]
      %v2661 = vld [vmem:[#allocation2 + $0xde] sm:$0xff]
      %v2662 = vld [vmem:[#allocation2 + $0xe6] sm:$0xff]
      %v2663 = vld [vmem:[#allocation2 + $0xee] sm:$0xff]
      %v2664 = vld [vmem:[#allocation2 + $0xf6] sm:$0xff]
      %v2665 = vld [vmem:[#allocation2 + $0xfe] sm:$0xff]
      %v2666 = vld [vmem:[#allocation2 + $0x106] sm:$0xff]
      %v2667 = vld [vmem:[#allocation2 + $0x10e] sm:$0xff]
      %v2668 = vld [vmem:[#allocation2 + $0x116] sm:$0xff]
      %v2669 = vld [vmem:[#allocation2 + $0x11e] sm:$0xff]
      %v2670 = vld [vmem:[#allocation2 + $0x126] sm:$0xff]
      %v2671 = vld [vmem:[#allocation2 + $0x12e] sm:$0xff]
      %v2672 = vld [vmem:[#allocation2 + $0x136] sm:$0xff]
      %v2673 = vld [vmem:[#allocation2 + $0x13e] sm:$0xff]
      %s2674 = scalar_lea.vmem %s4, 1024
      %v2675 = vld [vmem:[%s2674] sm:$0xff]
      %v2676 = vld [vmem:[%s2674 + $0x8] sm:$0xff]
      %v2677 = vld [vmem:[%s2674 + $0x10] sm:$0xff]
      %v2678 = vld [vmem:[%s2674 + $0x18] sm:$0xff]
      %v2679 = vld [vmem:[%s2674 + $0x20] sm:$0xff]
      %v2680 = vld [vmem:[%s2674 + $0x28] sm:$0xff]
      %v2681 = vld [vmem:[%s2674 + $0x30] sm:$0xff]
      %v2682 = vld [vmem:[%s2674 + $0x38] sm:$0xff]
      %v2683 = vld [vmem:[%s2674 + $0x40] sm:$0xff]
      %v2684 = vld [vmem:[%s2674 + $0x48] sm:$0xff]
      %v2685 = vld [vmem:[%s2674 + $0x50] sm:$0xff]
      %v2686 = vld [vmem:[%s2674 + $0x58] sm:$0xff]
      %v2687 = vld [vmem:[%s2674 + $0x60] sm:$0xff]
      %v2688 = vld [vmem:[%s2674 + $0x68] sm:$0xff]
      %v2689 = vld [vmem:[%s2674 + $0x70] sm:$0xff]
      %v2690 = vld [vmem:[%s2674 + $0x78] sm:$0xff]
      %2691 = vmatpush.msra.mxu0 %v2690
      %2692 = vmatpush.msra.mxu0 %v2689
      %2693 = vmatpush.msra.mxu0 %v2688
      %2694 = vmatpush.msra.mxu0 %v2687
      %2695 = vmatpush.msra.mxu0 %v2686
      %2696 = vmatpush.msra.mxu0 %v2685
      %2697 = vmatpush.msra.mxu0 %v2684
      %2698 = vmatpush.msra.mxu0 %v2683
      %2699 = vmatpush.msra.mxu0 %v2682
      %2700 = vmatpush.msra.mxu0 %v2681
      %2701 = vmatpush.msra.mxu0 %v2680
      %2702 = vmatpush.msra.mxu0 %v2679
      %2703 = vmatpush.msra.mxu0 %v2678
      %2704 = vmatpush.msra.mxu0 %v2677
      %2705 = vmatpush.msra.mxu0 %v2676
      %2706 = vmatpush.msra.mxu0 %v2675
      %2707 = vmatmul.f32.gmra.mxu0 %v2638
      %v2708 = vpop.f32.mrf.mxu0
      %v2709 = vadd.f32 0.0, %v2708
      %2710 = vmatmul.f32.gmra.mxu0 %v2639
      %v2711 = vpop.f32.mrf.mxu0
      %v2712 = vadd.f32 0.0, %v2711
      %2713 = vmatmul.f32.gmra.mxu0 %v2640
      %v2714 = vpop.f32.mrf.mxu0
      %v2715 = vadd.f32 0.0, %v2714
      %2716 = vmatmul.f32.gmra.mxu0 %v2641
      %v2717 = vpop.f32.mrf.mxu0
      %v2718 = vadd.f32 0.0, %v2717
      %2719 = vmatmul.f32.gmra.mxu0 %v2642
      %v2720 = vpop.f32.mrf.mxu0
      %v2721 = vadd.f32 0.0, %v2720
      %2722 = vmatmul.f32.gmra.mxu0 %v2643
      %v2723 = vpop.f32.mrf.mxu0
      %v2724 = vadd.f32 0.0, %v2723
      %2725 = vmatmul.f32.gmra.mxu0 %v2644
      %v2726 = vpop.f32.mrf.mxu0
      %v2727 = vadd.f32 0.0, %v2726
      %2728 = vmatmul.f32.gmra.mxu0 %v2645
      %v2729 = vpop.f32.mrf.mxu0
      %v2730 = vadd.f32 0.0, %v2729
      %2731 = vmatmul.f32.gmra.mxu0 %v2646
      %v2732 = vpop.f32.mrf.mxu0
      %v2733 = vadd.f32 0.0, %v2732
      %2734 = vmatmul.f32.gmra.mxu0 %v2647
      %v2735 = vpop.f32.mrf.mxu0
      %v2736 = vadd.f32 0.0, %v2735
      %2737 = vmatmul.f32.gmra.mxu0 %v2648
      %v2738 = vpop.f32.mrf.mxu0
      %v2739 = vadd.f32 0.0, %v2738
      %2740 = vmatmul.f32.gmra.mxu0 %v2649
      %v2741 = vpop.f32.mrf.mxu0
      %v2742 = vadd.f32 0.0, %v2741
      %2743 = vmatmul.f32.gmra.mxu0 %v2650
      %v2744 = vpop.f32.mrf.mxu0
      %v2745 = vadd.f32 0.0, %v2744
      %2746 = vmatmul.f32.gmra.mxu0 %v2651
      %v2747 = vpop.f32.mrf.mxu0
      %v2748 = vadd.f32 0.0, %v2747
      %2749 = vmatmul.f32.gmra.mxu0 %v2652
      %v2750 = vpop.f32.mrf.mxu0
      %v2751 = vadd.f32 0.0, %v2750
      %2752 = vmatmul.f32.gmra.mxu0 %v2653
      %v2753 = vpop.f32.mrf.mxu0
      %v2754 = vadd.f32 0.0, %v2753
      %2755 = vmatmul.f32.gmra.mxu0 %v2654
      %v2756 = vpop.f32.mrf.mxu0
      %v2757 = vadd.f32 0.0, %v2756
      %2758 = vmatmul.f32.gmra.mxu0 %v2655
      %v2759 = vpop.f32.mrf.mxu0
      %v2760 = vadd.f32 0.0, %v2759
      %2761 = vmatmul.f32.gmra.mxu0 %v2656
      %v2762 = vpop.f32.mrf.mxu0
      %v2763 = vadd.f32 0.0, %v2762
      %2764 = vmatmul.f32.gmra.mxu0 %v2657
      %v2765 = vpop.f32.mrf.mxu0
      %v2766 = vadd.f32 0.0, %v2765
      %2767 = vmatmul.f32.gmra.mxu0 %v2658
      %v2768 = vpop.f32.mrf.mxu0
      %v2769 = vadd.f32 0.0, %v2768
      %2770 = vmatmul.f32.gmra.mxu0 %v2659
      %v2771 = vpop.f32.mrf.mxu0
      %v2772 = vadd.f32 0.0, %v2771
      %2773 = vmatmul.f32.gmra.mxu0 %v2660
      %v2774 = vpop.f32.mrf.mxu0
      %v2775 = vadd.f32 0.0, %v2774
      %2776 = vmatmul.f32.gmra.mxu0 %v2661
      %v2777 = vpop.f32.mrf.mxu0
      %v2778 = vadd.f32 0.0, %v2777
      %2779 = vmatmul.f32.gmra.mxu0 %v2662
      %v2780 = vpop.f32.mrf.mxu0
      %v2781 = vadd.f32 0.0, %v2780
      %2782 = vmatmul.f32.gmra.mxu0 %v2663
      %v2783 = vpop.f32.mrf.mxu0
      %v2784 = vadd.f32 0.0, %v2783
      %2785 = vmatmul.f32.gmra.mxu0 %v2664
      %v2786 = vpop.f32.mrf.mxu0
      %v2787 = vadd.f32 0.0, %v2786
      %2788 = vmatmul.f32.gmra.mxu0 %v2665
      %v2789 = vpop.f32.mrf.mxu0
      %v2790 = vadd.f32 0.0, %v2789
      %2791 = vmatmul.f32.gmra.mxu0 %v2666
      %v2792 = vpop.f32.mrf.mxu0
      %v2793 = vadd.f32 0.0, %v2792
      %2794 = vmatmul.f32.gmra.mxu0 %v2667
      %v2795 = vpop.f32.mrf.mxu0
      %v2796 = vadd.f32 0.0, %v2795
      %2797 = vmatmul.f32.gmra.mxu0 %v2668
      %v2798 = vpop.f32.mrf.mxu0
      %v2799 = vadd.f32 0.0, %v2798
      %2800 = vmatmul.f32.gmra.mxu0 %v2669
      %v2801 = vpop.f32.mrf.mxu0
      %v2802 = vadd.f32 0.0, %v2801
      %2803 = vmatmul.f32.gmra.mxu0 %v2670
      %v2804 = vpop.f32.mrf.mxu0
      %v2805 = vadd.f32 0.0, %v2804
      %2806 = vmatmul.f32.gmra.mxu0 %v2671
      %v2807 = vpop.f32.mrf.mxu0
      %v2808 = vadd.f32 0.0, %v2807
      %2809 = vmatmul.f32.gmra.mxu0 %v2672
      %v2810 = vpop.f32.mrf.mxu0
      %v2811 = vadd.f32 0.0, %v2810
      %2812 = vmatmul.f32.gmra.mxu0 %v2673
      %v2813 = vpop.f32.mrf.mxu0
      %v2814 = vadd.f32 0.0, %v2813
      %2815 = vdwg.mxu0
      %v2816 = vadd.f32 %v2602, %v2709
      %v2817 = vadd.f32 %v2603, %v2712
      %v2818 = vadd.f32 %v2604, %v2715
      %v2819 = vadd.f32 %v2605, %v2718
      %v2820 = vadd.f32 %v2606, %v2721
      %v2821 = vadd.f32 %v2607, %v2724
      %v2822 = vadd.f32 %v2608, %v2727
      %v2823 = vadd.f32 %v2609, %v2730
      %v2824 = vadd.f32 %v2610, %v2733
      %v2825 = vadd.f32 %v2611, %v2736
      %v2826 = vadd.f32 %v2612, %v2739
      %v2827 = vadd.f32 %v2613, %v2742
      %v2828 = vadd.f32 %v2614, %v2745
      %v2829 = vadd.f32 %v2615, %v2748
      %v2830 = vadd.f32 %v2616, %v2751
      %v2831 = vadd.f32 %v2617, %v2754
      %v2832 = vadd.f32 %v2618, %v2757
      %v2833 = vadd.f32 %v2619, %v2760
      %v2834 = vadd.f32 %v2620, %v2763
      %v2835 = vadd.f32 %v2621, %v2766
      %v2836 = vadd.f32 %v2622, %v2769
      %v2837 = vadd.f32 %v2623, %v2772
      %v2838 = vadd.f32 %v2624, %v2775
      %v2839 = vadd.f32 %v2625, %v2778
      %v2840 = vadd.f32 %v2626, %v2781
      %v2841 = vadd.f32 %v2627, %v2784
      %v2842 = vadd.f32 %v2628, %v2787
      %v2843 = vadd.f32 %v2629, %v2790
      %v2844 = vadd.f32 %v2630, %v2793
      %v2845 = vadd.f32 %v2631, %v2796
      %v2846 = vadd.f32 %v2632, %v2799
      %v2847 = vadd.f32 %v2633, %v2802
      %v2848 = vadd.f32 %v2634, %v2805
      %v2849 = vadd.f32 %v2635, %v2808
      %v2850 = vadd.f32 %v2636, %v2811
      %v2851 = vadd.f32 %v2637, %v2814
      %v2852 = vld [vmem:[%s5] sm:$0x1]
      %v2854 = vperm.slane %v2852, 0
      %v2856 = vadd.f32 %v2816, %v2854
      %v2857 = vadd.f32 %v2817, %v2854
      %v2858 = vadd.f32 %v2818, %v2854
      %v2859 = vadd.f32 %v2819, %v2854
      %v2860 = vadd.f32 %v2820, %v2854
      %v2861 = vadd.f32 %v2821, %v2854
      %v2862 = vadd.f32 %v2822, %v2854
      %v2863 = vadd.f32 %v2823, %v2854
      %v2864 = vadd.f32 %v2824, %v2854
      %v2865 = vadd.f32 %v2825, %v2854
      %v2866 = vadd.f32 %v2826, %v2854
      %v2867 = vadd.f32 %v2827, %v2854
      %v2868 = vadd.f32 %v2828, %v2854
      %v2869 = vadd.f32 %v2829, %v2854
      %v2870 = vadd.f32 %v2830, %v2854
      %v2871 = vadd.f32 %v2831, %v2854
      %v2872 = vadd.f32 %v2832, %v2854
      %v2873 = vadd.f32 %v2833, %v2854
      %v2874 = vadd.f32 %v2834, %v2854
      %v2875 = vadd.f32 %v2835, %v2854
      %v2876 = vadd.f32 %v2836, %v2854
      %v2877 = vadd.f32 %v2837, %v2854
      %v2878 = vadd.f32 %v2838, %v2854
      %v2879 = vadd.f32 %v2839, %v2854
      %v2880 = vadd.f32 %v2840, %v2854
      %v2881 = vadd.f32 %v2841, %v2854
      %v2882 = vadd.f32 %v2842, %v2854
      %v2883 = vadd.f32 %v2843, %v2854
      %v2884 = vadd.f32 %v2844, %v2854
      %v2885 = vadd.f32 %v2845, %v2854
      %v2886 = vadd.f32 %v2846, %v2854
      %v2887 = vadd.f32 %v2847, %v2854
      %v2888 = vadd.f32 %v2848, %v2854
      %v2889 = vadd.f32 %v2849, %v2854
      %v2890 = vadd.f32 %v2850, %v2854
      %v2891 = vadd.f32 %v2851, %v2854
      %v2892 = vmax.f32 %v2856, 0.0
      %v2893 = vmax.f32 %v2857, 0.0
      %v2894 = vmax.f32 %v2858, 0.0
      %v2895 = vmax.f32 %v2859, 0.0
      %v2896 = vmax.f32 %v2860, 0.0
      %v2897 = vmax.f32 %v2861, 0.0
      %v2898 = vmax.f32 %v2862, 0.0
      %v2899 = vmax.f32 %v2863, 0.0
      %v2900 = vmax.f32 %v2864, 0.0
      %v2901 = vmax.f32 %v2865, 0.0
      %v2902 = vmax.f32 %v2866, 0.0
      %v2903 = vmax.f32 %v2867, 0.0
      %v2904 = vmax.f32 %v2868, 0.0
      %v2905 = vmax.f32 %v2869, 0.0
      %v2906 = vmax.f32 %v2870, 0.0
      %v2907 = vmax.f32 %v2871, 0.0
      %v2908 = vmax.f32 %v2872, 0.0
      %v2909 = vmax.f32 %v2873, 0.0
      %v2910 = vmax.f32 %v2874, 0.0
      %v2911 = vmax.f32 %v2875, 0.0
      %v2912 = vmax.f32 %v2876, 0.0
      %v2913 = vmax.f32 %v2877, 0.0
      %v2914 = vmax.f32 %v2878, 0.0
      %v2915 = vmax.f32 %v2879, 0.0
      %v2916 = vmax.f32 %v2880, 0.0
      %v2917 = vmax.f32 %v2881, 0.0
      %v2918 = vmax.f32 %v2882, 0.0
      %v2919 = vmax.f32 %v2883, 0.0
      %v2920 = vmax.f32 %v2884, 0.0
      %v2921 = vmax.f32 %v2885, 0.0
      %v2922 = vmax.f32 %v2886, 0.0
      %v2923 = vmax.f32 %v2887, 0.0
      %v2924 = vmax.f32 %v2888, 0.0
      %v2925 = vmax.f32 %v2889, 0.0
      %v2926 = vmax.f32 %v2890, 0.0
      %v2927 = vmax.f32 %v2891, 0.0
      %2928 = vst [vmem:[%s251] sm:$0xff] %v2892
      %2929 = vst [vmem:[%s251 + $0x8] sm:$0xff] %v2893
      %2930 = vst [vmem:[%s251 + $0x10] sm:$0xff] %v2894
      %2931 = vst [vmem:[%s251 + $0x18] sm:$0xff] %v2895
      %2932 = vst [vmem:[%s251 + $0x20] sm:$0xff] %v2896
      %2933 = vst [vmem:[%s251 + $0x28] sm:$0xff] %v2897
      %2934 = vst [vmem:[%s251 + $0x30] sm:$0xff] %v2898
      %2935 = vst [vmem:[%s251 + $0x38] sm:$0xff] %v2899
      %2936 = vst [vmem:[%s251 + $0x40] sm:$0xff] %v2900
      %2937 = vst [vmem:[%s251 + $0x48] sm:$0xff] %v2901
      %2938 = vst [vmem:[%s251 + $0x50] sm:$0xff] %v2902
      %2939 = vst [vmem:[%s251 + $0x58] sm:$0xff] %v2903
      %2940 = vst [vmem:[%s251 + $0x60] sm:$0xff] %v2904
      %2941 = vst [vmem:[%s251 + $0x68] sm:$0xff] %v2905
      %2942 = vst [vmem:[%s251 + $0x70] sm:$0xff] %v2906
      %2943 = vst [vmem:[%s251 + $0x78] sm:$0xff] %v2907
      %2944 = vst [vmem:[%s251 + $0x80] sm:$0xff] %v2908
      %2945 = vst [vmem:[%s251 + $0x88] sm:$0xff] %v2909
      %2946 = vst [vmem:[%s251 + $0x90] sm:$0xff] %v2910
      %2947 = vst [vmem:[%s251 + $0x98] sm:$0xff] %v2911
      %2948 = vst [vmem:[%s251 + $0xa0] sm:$0xff] %v2912
      %2949 = vst [vmem:[%s251 + $0xa8] sm:$0xff] %v2913
      %2950 = vst [vmem:[%s251 + $0xb0] sm:$0xff] %v2914
      %2951 = vst [vmem:[%s251 + $0xb8] sm:$0xff] %v2915
      %2952 = vst [vmem:[%s251 + $0xc0] sm:$0xff] %v2916
      %2953 = vst [vmem:[%s251 + $0xc8] sm:$0xff] %v2917
      %2954 = vst [vmem:[%s251 + $0xd0] sm:$0xff] %v2918
      %2955 = vst [vmem:[%s251 + $0xd8] sm:$0xff] %v2919
      %2956 = vst [vmem:[%s251 + $0xe0] sm:$0xff] %v2920
      %2957 = vst [vmem:[%s251 + $0xe8] sm:$0xff] %v2921
      %2958 = vst [vmem:[%s251 + $0xf0] sm:$0xff] %v2922
      %2959 = vst [vmem:[%s251 + $0xf8] sm:$0xff] %v2923
      %2960 = vst [vmem:[%s251 + $0x100] sm:$0xff] %v2924
      %2961 = vst [vmem:[%s251 + $0x108] sm:$0xff] %v2925
      %2962 = vst [vmem:[%s251 + $0x110] sm:$0xff] %v2926
      %2963 = vst [vmem:[%s251 + $0x118] sm:$0xff] %v2927
      %p2964 = scmp.lt.s32.totalorder %s17, 1
      %s2965 = scalar_select %p2964, %s17, 1
      %s2966 = smul.addr %s2965, 36
      %s2967 = smul.addr %s2966, 8
      %s2968 = scalar_lea.vmem %s6, %s2967
      // Predicated region
      $region45: #{layer_n_scale_forward.1} parent=43 // pred_check
        %p2969 = pneg %p166
      $region46: #{layer_n_scale_forward.1} parent=43 // pred_check_branch
        %2971 = sbr.rel (%p2969) target = $region48
      $region47: #{layer_n_scale_forward.1} parent=43 // pred_region
        _
      $region48: #{layer_n_scale_forward.1} parent=43 // pred_fallthru
        _
    $region44: #{layer_n_scale_forward.1} parent=5 // pred_fallthru
      _
    %p2972 = scmp.le.s32.totalorder 2, %s12
    // Predicated region
    $region49: #{layer_n_scale_forward.1} parent=5 // pred_check
      %p2973 = pneg %p2972
    $region50: #{layer_n_scale_forward.1} parent=5 // pred_check_branch
      %2975 = sbr.rel (%p2973) target = $region52
    $region51: #{layer_n_scale_forward.1} parent=5 // pred_region
      %s2976 = ssub.s32 %s12, 2
      // Predicated region
      $region53: #{layer_n_scale_forward.1} parent=51 // pred_check
        %p2977 = pneg %p172
      $region54: #{layer_n_scale_forward.1} parent=51 // pred_check_branch
        %2979 = sbr.rel (%p2977) target = $region56
      $region55: #{layer_n_scale_forward.1} parent=51 // pred_region
        %p2980 = scmp.lt.s32.totalorder %s18, 1
        %s2981 = scalar_select %p2980, %s18, 1
        %s2982 = smul.addr %s2981, 36
        %s2983 = smul.addr %s2982, 8
        %s2984 = scalar_lea.vmem %s6, %s2983
      $region56: #{layer_n_scale_forward.1} parent=51 // pred_fallthru
        _
    $region52: #{layer_n_scale_forward.1} parent=5 // pred_fallthru
      _
  $region6: #{layer_n_scale_forward.1} parent=0 // loop_footer
    %s16 = sadd.s32 1, %s12
  $region7: #{layer_n_scale_forward.1} parent=0 // loop_footer_branch
    %11 = sbr.rel target = $region3
  $region8: #{layer_n_scale_forward.1} parent=0 // loop_exit
    _

</llo_original>
